<compile_context>
chip_gen: v7x
topology: tpu7x:2x2x1
jax: 0.10.0
libtpu: 0.0.40
codegen_flags: <defaults>
</compile_context>

<pallas_src>
import math
from functools import partial

import jax
import jax.numpy as jnp
from jax.experimental import pallas as pl
from jax.experimental.pallas import tpu as pltpu

# ----------------------------- configuration --------------------------------
OUT_SIZE = 16
N_STYLES = int(math.log(OUT_SIZE, 2)) * 2 - 2          # = 6 (mirrors pSp.__init__)
STYLE_DIM = 32
INPUT_NC = 3
CENC = 16                                              # encoder feature channels
CDEC = 16                                              # decoder feature channels
LRELU_GAIN = math.sqrt(2.0)

# (upsample_before, is_to_rgb) for each decoder layer; one style per layer (6 total).
DECODER_PLAN = [
    (False, False),   # 4x4   conv,  style 0   (fused into the encoder kernel)
    (True,  False),   # ->8x8 conv,  style 1
    (False, False),   # 8x8   conv,  style 2
    (True,  False),   # ->16  conv,  style 3
    (False, False),   # 16x16 conv,  style 4   (fused with toRGB + face_pool)
    (False, True),    # toRGB 1x1,   style 5
]

_ARB = pltpu.CompilerParams(dimension_semantics=("arbitrary",))


def _full_spec(shape):
    # single-step grid, whole-array block resident in VMEM
    return pl.BlockSpec(shape, lambda i: (0,) * len(shape))


# ----------------------------- in-kernel helpers ------------------------------

def _modulated_matmul(w, s_row, p_t, bias, *, demod, activate):
    """One sample of a StyleGAN2 modulated conv in transposed (Cout, HW) form.
    w:(Cout,K)  s_row:(1,K)  p_t:(HW,K) im2col patches  bias:(Cout,1)  ->  (Cout,HW)."""
    wm = w * s_row                                         # modulate input channels/taps
    if demod:
        # lane-axis (XLU) reduce over K, f32 rsqrt (v5e-safe), StyleGAN2 eps
        d = jax.lax.rsqrt(jnp.sum(wm * wm, axis=1, keepdims=True) + 1e-8)
        wm = wm * d
    y = jax.lax.dot_general(wm, p_t,
                            dimension_numbers=(((1,), (1,)), ((), ())),
                            preferred_element_type=jnp.float32)      # (Cout, HW) lane-dense
    y = y + bias
    if activate:
        # fused leaky-relu (slope 0.2, sqrt(2) gain) like StyleGAN2
        y = jnp.where(y >= 0.0, y, 0.2 * y) * LRELU_GAIN
    return y


# ----------------------------- Pallas kernels --------------------------------

def _encoder_layer0_kernel(p_ref, ew_ref, eb_ref, pool_ref, sw_ref, sb_ref, lat_ref,
                           cp_ref, aw0_ref, ab0_ref, w0_ref, b0_ref,
                           codes_ref, y0_ref, *, batch):
    # --- encoder: 3x3 conv (im2col matmul) + ReLU + global avg pool + style head ---
    feat = jnp.dot(p_ref[...], ew_ref[...], preferred_element_type=jnp.float32) + eb_ref[...]
    feat = jnp.maximum(feat, 0.0)                                    # (B*HW, CENC)
    pooled = jnp.dot(pool_ref[...], feat, preferred_element_type=jnp.float32)  # (B, CENC)
    codes = jnp.dot(pooled, sw_ref[...], preferred_element_type=jnp.float32)
    codes = codes + sb_ref[...] + lat_ref[...]                       # + latent_avg (W+ offset)
    codes_ref[...] = codes.astype(codes_ref.dtype)

    # --- decoder layer 0: 3x3 modulated conv on the constant 4x4 input ---
    s0 = jnp.dot(codes[:, 0:STYLE_DIM], aw0_ref[...],
                 preferred_element_type=jnp.float32) + ab0_ref[...]  # (B, 9*CDEC)
    w0 = w0_ref[...]
    b0 = b0_ref[...]
    cp = cp_ref[...]                                                 # (HW0, 9*CDEC)
    for b in range(batch):                                           # static unroll over batch
        y = _modulated_matmul(w0, s0[b:b + 1, :], cp, b0, demod=True, activate=True)
        y0_ref[b] = y.astype(y0_ref.dtype)


def encoder_and_layer0(patches, enc_w, enc_b, pool_mat, style_w, style_b, latent_flat,
                       const_patches, aw0, ab0, w0, b0):
    B = pool_mat.shape[0]
    n_codes = style_w.shape[1]
    hw0 = const_patches.shape[0]
    args = (patches, enc_w, enc_b, pool_mat, style_w, style_b, latent_flat,
            const_patches, aw0, ab0, w0, b0)
    return pl.pallas_call(
        partial(_encoder_layer0_kernel, batch=B),
        out_shape=(jax.ShapeDtypeStruct((B, n_codes), jnp.float32),
                   jax.ShapeDtypeStruct((B, CDEC, hw0), jnp.float32)),
        grid=(1,),
        in_specs=[_full_spec(a.shape) for a in args],
        out_specs=(_full_spec((B, n_codes)), _full_spec((B, CDEC, hw0))),
        compiler_params=_ARB,
    )(*args)


def _modconv_kernel(wlat_ref, p_ref, aw_ref, ab_ref, cw_ref, cb_ref, o_ref,
                    *, batch, demod, activate):
    # style affine fused in-kernel: s = w_lat @ A + b   (A pre-tiled over the 9 taps)
    s = jnp.dot(wlat_ref[...], aw_ref[...], preferred_element_type=jnp.float32) + ab_ref[...]
    w = cw_ref[...]
    bias = cb_ref[...]
    for b in range(batch):                                           # static unroll over batch
        y = _modulated_matmul(w, s[b:b + 1, :], p_ref[b], bias,
                              demod=demod, activate=activate)
        o_ref[b] = y.astype(o_ref.dtype)


def modconv_layer(w_lat, patches, aw, ab, cw, cb, *, demod=True, activate=True):
    B, HW, _ = patches.shape
    Cout = cw.shape[0]
    args = (w_lat, patches, aw, ab, cw, cb)
    return pl.pallas_call(
        partial(_modconv_kernel, batch=B, demod=demod, activate=activate),
        out_shape=jax.ShapeDtypeStruct((B, Cout, HW), jnp.float32),
        grid=(1,),
        in_specs=[_full_spec(a.shape) for a in args],
        out_specs=_full_spec((B, Cout, HW)),
        compiler_params=_ARB,
    )(*args)


def _final_kernel(wlc_ref, wlr_ref, p_ref, aw4_ref, ab4_ref, cw4_ref, cb4_ref,
                  aw5_ref, ab5_ref, cw5_ref, cb5_ref, pool_ref, o_ref,
                  *, batch, do_pool):
    # styles for both fused layers computed in-kernel
    s4 = jnp.dot(wlc_ref[...], aw4_ref[...], preferred_element_type=jnp.float32) + ab4_ref[...]
    s5 = jnp.dot(wlr_ref[...], aw5_ref[...], preferred_element_type=jnp.float32) + ab5_ref[...]
    w4, b4 = cw4_ref[...], cb4_ref[...]
    w5, b5 = cw5_ref[...], cb5_ref[...]
    for b in range(batch):
        # 16x16 3x3 modulated conv (demod + fused leaky-relu) -> (CDEC, HW), HW lane-dense
        y = _modulated_matmul(w4, s4[b:b + 1, :], p_ref[b], b4, demod=True, activate=True)
        # toRGB 1x1 modulated conv (no demod, no activation); y is already (Cin, HW)
        wm5 = w5 * s5[b:b + 1, :]
        rgb = jnp.dot(wm5, y, preferred_element_type=jnp.float32) + b5    # (3, HW)
        if do_pool:
            # face_pool (AdaptiveAvgPool 2x analogue) fused as a constant pooling matmul
            rgb = jnp.dot(rgb, pool_ref[...], preferred_element_type=jnp.float32)
        o_ref[b] = rgb.astype(o_ref.dtype)


def final_layers(w_lat_conv, w_lat_rgb, patches, aw4, ab4, cw4, cb4,
                 aw5, ab5, cw5, cb5, pool_mat, *, do_pool):
    B, HW, _ = patches.shape
    HWo = pool_mat.shape[1] if do_pool else HW
    args = (w_lat_conv, w_lat_rgb, patches, aw4, ab4, cw4, cb4, aw5, ab5, cw5, cb5, pool_mat)
    return pl.pallas_call(
        partial(_final_kernel, batch=B, do_pool=do_pool),
        out_shape=jax.ShapeDtypeStruct((B, 3, HWo), jnp.float32),
        grid=(1,),
        in_specs=[_full_spec(a.shape) for a in args],
        out_specs=_full_spec((B, 3, HWo)),
        compiler_params=_ARB,
    )(*args)


# ----------------------------- JAX glue --------------------------------------

def im2col3x3(x):
    # x: (B, H, W, C) -> (B, H*W, 9*C), "same" zero padding, taps ordered (dh, dw)
    # TODO(synk): at real pSp scale do the 3x3 taps in-kernel (halo rows / shifted matmuls)
    #             to avoid 9x HBM inflation of materialized patches; noise at this toy size.
    B, H, W, C = x.shape
    xp = jnp.pad(x, ((0, 0), (1, 1), (1, 1), (0, 0)))
    cols = [xp[:, dh:dh + H, dw:dw + W, :] for dh in range(3) for dw in range(3)]
    p = jnp.stack(cols, axis=3)                         # (B, H, W, 9, C)
    return p.reshape(B, H * W, 9 * C)


def chw_to_nhwc(y, H, W):
    # (B, C, H*W) kernel output -> (B, H, W, C)   (layout plumbing only)
    B, C, _ = y.shape
    return y.transpose(0, 2, 1).reshape(B, H, W, C)


def upsample2x(y):
    # nearest 2x upsample, NHWC
    return jnp.repeat(jnp.repeat(y, 2, axis=1), 2, axis=2)


def init_params(key):
    ks = jax.random.split(key, 4 + len(DECODER_PLAN))

    def nrm(k, shape, fan_in):
        return jax.random.normal(k, shape, jnp.float32) / math.sqrt(fan_in)

    p = {}
    # encoder (simplified GradualStyleEncoder; BN/PReLU and FPN map2style omitted)
    # TODO(synk): full ir_se-50 backbone + multi-scale map2style heads not reproduced.
    p["enc_conv_w"] = nrm(ks[0], (9 * INPUT_NC, CENC), 9 * INPUT_NC)
    p["enc_conv_b"] = jnp.zeros((1, CENC), jnp.float32)
    p["enc_style_w"] = nrm(ks[1], (CENC, N_STYLES * STYLE_DIM), CENC)
    p["enc_style_b"] = jnp.zeros((1, N_STYLES * STYLE_DIM), jnp.float32)
    # latent_avg (pSp.__load_latent_avg with repeat=n_styles)
    p["latent_avg"] = 0.1 * jax.random.normal(ks[2], (N_STYLES, STYLE_DIM), jnp.float32)
    # decoder constant input (StyleGAN2 ConstantInput), NHWC
    p["const"] = jax.random.normal(ks[3], (4, 4, CDEC), jnp.float32)
    for li, (up, is_rgb) in enumerate(DECODER_PLAN):
        kk = jax.random.split(ks[4 + li], 2)
        cin = CDEC
        cout = 3 if is_rgb else CDEC
        kfan = cin if is_rgb else 9 * cin
        aw = nrm(kk[0], (STYLE_DIM, cin), STYLE_DIM)
        ab = jnp.ones((1, cin), jnp.float32)            # StyleGAN modulation bias init = 1
        if is_rgb:
            p[f"affine_w_{li}"], p[f"affine_b_{li}"] = aw, ab
        else:
            # pre-tile the affine over the 9 conv taps (tap-major, channel-minor) so the
            # fused in-kernel modulation is a single (Cout, 9*Cin) elementwise scale that
            # matches the im2col column ordering.
            p[f"affine_w_{li}"] = jnp.tile(aw, (1, 9))
            p[f"affine_b_{li}"] = jnp.tile(ab, (1, 9))
        p[f"conv_w_{li}"] = nrm(kk[1], (cout, kfan), kfan)
        p[f"conv_b_{li}"] = jnp.zeros((cout, 1), jnp.float32)   # (Cout,1) for (Cout,HW) layout
    return p


def psp_forward(params, x_nchw, resize=True):
    """pSp.forward with input_code=False, latent_mask=None, start_from_latent_avg=True,
    return_latents=False.  x_nchw: (B, INPUT_NC, H, W) float32 (NCHW, like PyTorch)."""
    # TODO(synk): bf16 MXU inputs (v6e/v7x) and v7x 2-TC sharding left for real-scale shapes;
    #             kept f32 here to preserve exact StyleGAN2 numerics and v5e VPU paths.
    B = x_nchw.shape[0]
    x = jnp.transpose(x_nchw, (0, 2, 3, 1))             # NCHW -> NHWC
    H, W = x.shape[1], x.shape[2]
    HW = H * W

    # ------------------- encoder + decoder layer 0 (one fused kernel) --------
    patches = im2col3x3(x).reshape(B * HW, 9 * INPUT_NC)
    # global-average-pool expressed as a (B, B*HW) matmul so the whole encoder stays in one kernel
    row_owner = jnp.arange(B * HW, dtype=jnp.int32) // HW
    pool_mat = (jnp.arange(B, dtype=jnp.int32)[:, None] == row_owner[None, :]
                ).astype(jnp.float32) / float(HW)
    # constant decoder input as im2col patches (sample-independent)
    const_patches = im2col3x3(params["const"][None])[0]              # (16, 9*CDEC)

    codes, y0 = encoder_and_layer0(
        patches, params["enc_conv_w"], params["enc_conv_b"], pool_mat,
        params["enc_style_w"], params["enc_style_b"],
        params["latent_avg"].reshape(1, N_STYLES * STYLE_DIM),
        const_patches, params["affine_w_0"], params["affine_b_0"],
        params["conv_w_0"], params["conv_b_0"])
    # codes: (B, N_STYLES*STYLE_DIM)  ;  y0: (B, CDEC, 16) decoder layer-0 output

    # ------------------- decoder: StyleGAN2-style synthesis ------------------
    # input_is_latent=True -> mapping MLP is skipped (codes are already W+).
    # TODO(synk): per-layer noise injection (randomize_noise) and blur up-sampling filters
    #             omitted; nearest upsample + deterministic path used.
    y = chw_to_nhwc(y0, 4, 4)
    n_layers = len(DECODER_PLAN)
    for li in range(1, n_layers - 2):                    # layers 1..3 (3x3 modconv)
        up, _ = DECODER_PLAN[li]
        if up:
            y = upsample2x(y)
        _, Hc, Wc, _ = y.shape
        w_lat = codes[:, li * STYLE_DIM:(li + 1) * STYLE_DIM]
        out = modconv_layer(w_lat, im2col3x3(y),
                            params[f"affine_w_{li}"], params[f"affine_b_{li}"],
                            params[f"conv_w_{li}"], params[f"conv_b_{li}"])
        y = chw_to_nhwc(out, Hc, Wc)

    # ----------- last 3x3 conv + toRGB + face_pool fused in one kernel --------
    li_c, li_r = n_layers - 2, n_layers - 1
    if DECODER_PLAN[li_c][0]:
        y = upsample2x(y)
    _, Hc, Wc, _ = y.shape
    if resize:
        Ho, Wo = Hc // 2, Wc // 2
        idx = jnp.arange(Hc * Wc, dtype=jnp.int32)
        tgt = (idx // Wc // 2) * Wo + (idx % Wc) // 2
        face_pool = (tgt[:, None] == jnp.arange(Ho * Wo, dtype=jnp.int32)[None, :]
                     ).astype(jnp.float32) * 0.25        # 2x2 average as a matmul
    else:
        Ho, Wo = Hc, Wc
        face_pool = jnp.eye(Hc * Wc, dtype=jnp.float32)  # unused when do_pool=False
    w_lat_c = codes[:, li_c * STYLE_DIM:(li_c + 1) * STYLE_DIM]
    w_lat_r = codes[:, li_r * STYLE_DIM:(li_r + 1) * STYLE_DIM]
    images = final_layers(w_lat_c, w_lat_r, im2col3x3(y),
                          params[f"affine_w_{li_c}"], params[f"affine_b_{li_c}"],
                          params[f"conv_w_{li_c}"], params[f"conv_b_{li_c}"],
                          params[f"affine_w_{li_r}"], params[f"affine_b_{li_r}"],
                          params[f"conv_w_{li_r}"], params[f"conv_b_{li_r}"],
                          face_pool, do_pool=resize)     # (B, 3, Ho*Wo)

    return images.reshape(B, 3, Ho, Wo)                  # channel-major -> NCHW directly


# --------------------------------- main ---------------------------------------
if __name__ == "__main__":
    key = jax.random.PRNGKey(0)
    pkey, xkey = jax.random.split(key)
    params = init_params(pkey)
    # synthetic deterministic input, NCHW like the PyTorch module
    x = jax.random.normal(xkey, (2, INPUT_NC, OUT_SIZE, OUT_SIZE), dtype=jnp.float32)

    images = jax.jit(psp_forward)(params, x)
    jax.block_until_ready(images)

    assert images.shape == (2, 3, OUT_SIZE // 2, OUT_SIZE // 2), images.shape
    assert images.dtype == jnp.float32
    assert bool(jnp.all(jnp.isfinite(images)))
    print("KERNEL_OK")
</pallas_src>

<mosaic_0001>
module attributes {stable_mosaic.version = 11 : i64} {
  func.func @_encoder_layer0_kernel(%arg0: i32, %arg1: memref<512x27xf32, #tpu.memory_space<vmem>>, %arg2: memref<27x16xf32, #tpu.memory_space<vmem>>, %arg3: memref<1x16xf32, #tpu.memory_space<vmem>>, %arg4: memref<2x512xf32, #tpu.memory_space<vmem>>, %arg5: memref<16x192xf32, #tpu.memory_space<vmem>>, %arg6: memref<1x192xf32, #tpu.memory_space<vmem>>, %arg7: memref<1x192xf32, #tpu.memory_space<vmem>>, %arg8: memref<16x144xf32, #tpu.memory_space<vmem>>, %arg9: memref<32x144xf32, #tpu.memory_space<vmem>>, %arg10: memref<1x144xf32, #tpu.memory_space<vmem>>, %arg11: memref<16x144xf32, #tpu.memory_space<vmem>>, %arg12: memref<16x1xf32, #tpu.memory_space<vmem>>, %arg13: memref<2x192xf32, #tpu.memory_space<vmem>>, %arg14: memref<2x16x16xf32, #tpu.memory_space<vmem>>) attributes {dimension_semantics = [#tpu.dimension_semantics<arbitrary>], iteration_bounds = array<i64: 1>, scalar_prefetch = 0 : i64, scratch_operands = 0 : i64, tpu.core_type = #tpu.core_type<tc>, window_params = [{pipeline_mode = #tpu.pipeline_mode<synchronous>, transform_indices = @transform_0, window_bounds = array<i64: 512, 27>}, {pipeline_mode = #tpu.pipeline_mode<synchronous>, transform_indices = @transform_1, window_bounds = array<i64: 27, 16>}, {pipeline_mode = #tpu.pipeline_mode<synchronous>, transform_indices = @transform_2, window_bounds = array<i64: 1, 16>}, {pipeline_mode = #tpu.pipeline_mode<synchronous>, transform_indices = @transform_3, window_bounds = array<i64: 2, 512>}, {pipeline_mode = #tpu.pipeline_mode<synchronous>, transform_indices = @transform_4, window_bounds = array<i64: 16, 192>}, {pipeline_mode = #tpu.pipeline_mode<synchronous>, transform_indices = @transform_5, window_bounds = array<i64: 1, 192>}, {pipeline_mode = #tpu.pipeline_mode<synchronous>, transform_indices = @transform_6, window_bounds = array<i64: 1, 192>}, {pipeline_mode = #tpu.pipeline_mode<synchronous>, transform_indices = @transform_7, window_bounds = array<i64: 16, 144>}, {pipeline_mode = #tpu.pipeline_mode<synchronous>, transform_indices = @transform_8, window_bounds = array<i64: 32, 144>}, {pipeline_mode = #tpu.pipeline_mode<synchronous>, transform_indices = @transform_9, window_bounds = array<i64: 1, 144>}, {pipeline_mode = #tpu.pipeline_mode<synchronous>, transform_indices = @transform_10, window_bounds = array<i64: 16, 144>}, {pipeline_mode = #tpu.pipeline_mode<synchronous>, transform_indices = @transform_11, window_bounds = array<i64: 16, 1>}, {pipeline_mode = #tpu.pipeline_mode<synchronous>, transform_indices = @transform_12, window_bounds = array<i64: 2, 192>}, {pipeline_mode = #tpu.pipeline_mode<synchronous>, transform_indices = @transform_13, window_bounds = array<i64: 2, 16, 16>}]} {
    %c0 = arith.constant 0 : index
    %c0_0 = arith.constant 0 : index
    %0 = vector.load %arg1[%c0, %c0_0] : memref<512x27xf32, #tpu.memory_space<vmem>>, vector<512x27xf32>
    %c0_1 = arith.constant 0 : index
    %c0_2 = arith.constant 0 : index
    %1 = vector.load %arg2[%c0_1, %c0_2] : memref<27x16xf32, #tpu.memory_space<vmem>>, vector<27x16xf32>
    %cst = arith.constant dense<0.000000e+00> : vector<512x16xf32>
    %2 = tpu.matmul %0, %1, %cst {dimension_numbers = #tpu.dot_dimension_numbers<[1], [0], [0], [1], [0, 0, 1, 1], [], []>} : vector<512x27xf32>, vector<27x16xf32>, vector<512x16xf32> -> vector<512x16xf32>
    %c0_3 = arith.constant 0 : index
    %c0_4 = arith.constant 0 : index
    %3 = vector.load %arg3[%c0_3, %c0_4] : memref<1x16xf32, #tpu.memory_space<vmem>>, vector<1x16xf32>
    %4 = vector.broadcast %3 : vector<1x16xf32> to vector<512x16xf32>
    %5 = arith.addf %2, %4 : vector<512x16xf32>
    %cst_5 = arith.constant 0.000000e+00 : f32
    %6 = vector.broadcast %cst_5 : f32 to vector<512x16xf32>
    %7 = arith.maximumf %5, %6 : vector<512x16xf32>
    %c0_6 = arith.constant 0 : index
    %c0_7 = arith.constant 0 : index
    %8 = vector.load %arg4[%c0_6, %c0_7] : memref<2x512xf32, #tpu.memory_space<vmem>>, vector<2x512xf32>
    %cst_8 = arith.constant dense<0.000000e+00> : vector<2x16xf32>
    %9 = tpu.matmul %8, %7, %cst_8 {dimension_numbers = #tpu.dot_dimension_numbers<[1], [0], [0], [1], [0, 0, 1, 1], [], []>} : vector<2x512xf32>, vector<512x16xf32>, vector<2x16xf32> -> vector<2x16xf32>
    %c0_9 = arith.constant 0 : index
    %c0_10 = arith.constant 0 : index
    %10 = vector.load %arg5[%c0_9, %c0_10] : memref<16x192xf32, #tpu.memory_space<vmem>>, vector<16x192xf32>
    %cst_11 = arith.constant dense<0.000000e+00> : vector<2x192xf32>
    %11 = tpu.matmul %9, %10, %cst_11 {dimension_numbers = #tpu.dot_dimension_numbers<[1], [0], [0], [1], [0, 0, 1, 1], [], []>} : vector<2x16xf32>, vector<16x192xf32>, vector<2x192xf32> -> vector<2x192xf32>
    %c0_12 = arith.constant 0 : index
    %c0_13 = arith.constant 0 : index
    %12 = vector.load %arg6[%c0_12, %c0_13] : memref<1x192xf32, #tpu.memory_space<vmem>>, vector<1x192xf32>
    %13 = vector.broadcast %12 : vector<1x192xf32> to vector<2x192xf32>
    %14 = arith.addf %11, %13 : vector<2x192xf32>
    %c0_14 = arith.constant 0 : index
    %c0_15 = arith.constant 0 : index
    %15 = vector.load %arg7[%c0_14, %c0_15] : memref<1x192xf32, #tpu.memory_space<vmem>>, vector<1x192xf32>
    %16 = vector.broadcast %15 : vector<1x192xf32> to vector<2x192xf32>
    %17 = arith.addf %14, %16 : vector<2x192xf32>
    %c0_16 = arith.constant 0 : index
    %c0_17 = arith.constant 0 : index
    %18 = vector.load %arg13[%c0_16, %c0_17] : memref<2x192xf32, #tpu.memory_space<vmem>>, vector<2x192xf32>
    tpu.vector_store %arg13[%c0_16, %c0_17], %17 {strides = array<i32>} : memref<2x192xf32, #tpu.memory_space<vmem>>, vector<2x192xf32>,
    %19 = vector.extract_strided_slice %17 {offsets = [0, 0], sizes = [2, 32], strides = [1, 1]} : vector<2x192xf32> to vector<2x32xf32>
    %c0_18 = arith.constant 0 : index
    %c0_19 = arith.constant 0 : index
    %20 = vector.load %arg9[%c0_18, %c0_19] : memref<32x144xf32, #tpu.memory_space<vmem>>, vector<32x144xf32>
    %cst_20 = arith.constant dense<0.000000e+00> : vector<2x144xf32>
    %21 = tpu.matmul %19, %20, %cst_20 {dimension_numbers = #tpu.dot_dimension_numbers<[1], [0], [0], [1], [0, 0, 1, 1], [], []>} : vector<2x32xf32>, vector<32x144xf32>, vector<2x144xf32> -> vector<2x144xf32>
    %c0_21 = arith.constant 0 : index
    %c0_22 = arith.constant 0 : index
    %22 = vector.load %arg10[%c0_21, %c0_22] : memref<1x144xf32, #tpu.memory_space<vmem>>, vector<1x144xf32>
    %23 = vector.broadcast %22 : vector<1x144xf32> to vector<2x144xf32>
    %24 = arith.addf %21, %23 : vector<2x144xf32>
    %c0_23 = arith.constant 0 : index
    %c0_24 = arith.constant 0 : index
    %25 = vector.load %arg11[%c0_23, %c0_24] : memref<16x144xf32, #tpu.memory_space<vmem>>, vector<16x144xf32>
    %c0_25 = arith.constant 0 : index
    %c0_26 = arith.constant 0 : index
    %26 = vector.load %arg12[%c0_25, %c0_26] : memref<16x1xf32, #tpu.memory_space<vmem>>, vector<16x1xf32>
    %c0_27 = arith.constant 0 : index
    %c0_28 = arith.constant 0 : index
    %27 = vector.load %arg8[%c0_27, %c0_28] : memref<16x144xf32, #tpu.memory_space<vmem>>, vector<16x144xf32>
    %28 = vector.extract_strided_slice %24 {offsets = [0, 0], sizes = [1, 144], strides = [1, 1]} : vector<2x144xf32> to vector<1x144xf32>
    %29 = vector.broadcast %28 : vector<1x144xf32> to vector<16x144xf32>
    %30 = arith.mulf %25, %29 : vector<16x144xf32>
    %31 = arith.mulf %30, %30 : vector<16x144xf32>
    %cst_29 = arith.constant dense<0.000000e+00> : vector<16xf32>
    %32 = vector.multi_reduction <add>, %31, %cst_29 [1] : vector<16x144xf32> to vector<16xf32>
    %33 = vector.shape_cast %32 : vector<16xf32> to vector<16x1xf32>
    %cst_30 = arith.constant 9.99999993E-9 : f32
    %34 = vector.broadcast %cst_30 : f32 to vector<16x1xf32>
    %35 = arith.addf %33, %34 : vector<16x1xf32>
    %36 = math.rsqrt %35 : vector<16x1xf32>
    %37 = vector.broadcast %36 : vector<16x1xf32> to vector<16x144xf32>
    %38 = arith.mulf %30, %37 : vector<16x144xf32>
    %cst_31 = arith.constant dense<0.000000e+00> : vector<16x16xf32>
    %39 = tpu.matmul %38, %27, %cst_31 {dimension_numbers = #tpu.dot_dimension_numbers<[1], [1], [0], [0], [0, 0, 1, 0], [], []>} : vector<16x144xf32>, vector<16x144xf32>, vector<16x16xf32> -> vector<16x16xf32>
    %40 = vector.broadcast %26 : vector<16x1xf32> to vector<16x16xf32>
    %41 = arith.addf %39, %40 : vector<16x16xf32>
    %cst_32 = arith.constant 0.000000e+00 : f32
    %42 = vector.broadcast %cst_32 : f32 to vector<16x16xf32>
    %43 = arith.cmpf oge, %41, %42 : vector<16x16xf32>
    %cst_33 = arith.constant 2.000000e-01 : f32
    %44 = vector.broadcast %cst_33 : f32 to vector<16x16xf32>
    %45 = arith.mulf %44, %41 : vector<16x16xf32>
    %46 = arith.select %43, %41, %45 : vector<16x16xi1>, vector<16x16xf32>
    %cst_34 = arith.constant 1.41421354 : f32
    %47 = vector.broadcast %cst_34 : f32 to vector<16x16xf32>
    %48 = arith.mulf %46, %47 : vector<16x16xf32>
    %c0_35 = arith.constant 0 : index
    %c0_36 = arith.constant 0 : index
    %c0_37 = arith.constant 0 : index
    %49 = vector.load %arg14[%c0_35, %c0_36, %c0_37] : memref<2x16x16xf32, #tpu.memory_space<vmem>>, vector<1x16x16xf32>
    %50 = vector.shape_cast %49 : vector<1x16x16xf32> to vector<16x16xf32>
    %51 = vector.shape_cast %48 : vector<16x16xf32> to vector<1x16x16xf32>
    tpu.vector_store %arg14[%c0_35, %c0_36, %c0_37], %51 {strides = array<i32>} : memref<2x16x16xf32, #tpu.memory_space<vmem>>, vector<1x16x16xf32>,
    %52 = vector.extract_strided_slice %24 {offsets = [1, 0], sizes = [1, 144], strides = [1, 1]} : vector<2x144xf32> to vector<1x144xf32>
    %53 = vector.broadcast %52 : vector<1x144xf32> to vector<16x144xf32>
    %54 = arith.mulf %25, %53 : vector<16x144xf32>
    %55 = arith.mulf %54, %54 : vector<16x144xf32>
    %cst_38 = arith.constant dense<0.000000e+00> : vector<16xf32>
    %56 = vector.multi_reduction <add>, %55, %cst_38 [1] : vector<16x144xf32> to vector<16xf32>
    %57 = vector.shape_cast %56 : vector<16xf32> to vector<16x1xf32>
    %cst_39 = arith.constant 9.99999993E-9 : f32
    %58 = vector.broadcast %cst_39 : f32 to vector<16x1xf32>
    %59 = arith.addf %57, %58 : vector<16x1xf32>
    %60 = math.rsqrt %59 : vector<16x1xf32>
    %61 = vector.broadcast %60 : vector<16x1xf32> to vector<16x144xf32>
    %62 = arith.mulf %54, %61 : vector<16x144xf32>
    %cst_40 = arith.constant dense<0.000000e+00> : vector<16x16xf32>
    %63 = tpu.matmul %62, %27, %cst_40 {dimension_numbers = #tpu.dot_dimension_numbers<[1], [1], [0], [0], [0, 0, 1, 0], [], []>} : vector<16x144xf32>, vector<16x144xf32>, vector<16x16xf32> -> vector<16x16xf32>
    %64 = vector.broadcast %26 : vector<16x1xf32> to vector<16x16xf32>
    %65 = arith.addf %63, %64 : vector<16x16xf32>
    %cst_41 = arith.constant 0.000000e+00 : f32
    %66 = vector.broadcast %cst_41 : f32 to vector<16x16xf32>
    %67 = arith.cmpf oge, %65, %66 : vector<16x16xf32>
    %cst_42 = arith.constant 2.000000e-01 : f32
    %68 = vector.broadcast %cst_42 : f32 to vector<16x16xf32>
    %69 = arith.mulf %68, %65 : vector<16x16xf32>
    %70 = arith.select %67, %65, %69 : vector<16x16xi1>, vector<16x16xf32>
    %cst_43 = arith.constant 1.41421354 : f32
    %71 = vector.broadcast %cst_43 : f32 to vector<16x16xf32>
    %72 = arith.mulf %70, %71 : vector<16x16xf32>
    %c1 = arith.constant 1 : index
    %c0_44 = arith.constant 0 : index
    %c0_45 = arith.constant 0 : index
    %73 = vector.load %arg14[%c1, %c0_44, %c0_45] : memref<2x16x16xf32, #tpu.memory_space<vmem>>, vector<1x16x16xf32>
    %74 = vector.shape_cast %73 : vector<1x16x16xf32> to vector<16x16xf32>
    %75 = vector.shape_cast %72 : vector<16x16xf32> to vector<1x16x16xf32>
    tpu.vector_store %arg14[%c1, %c0_44, %c0_45], %75 {strides = array<i32>} : memref<2x16x16xf32, #tpu.memory_space<vmem>>, vector<1x16x16xf32>,
    return
  }
  func.func @transform_0(%arg0: i32) -> (i32, i32) {
    %c0_i32 = arith.constant 0 : i32
    %c0_i32_0 = arith.constant 0 : i32
    %c0_i32_1 = arith.constant 0 : i32
    return %c0_i32, %c0_i32_0 : i32, i32
  }
  func.func @transform_1(%arg0: i32) -> (i32, i32) {
    %c0_i32 = arith.constant 0 : i32
    %c0_i32_0 = arith.constant 0 : i32
    %c0_i32_1 = arith.constant 0 : i32
    return %c0_i32, %c0_i32_0 : i32, i32
  }
  func.func @transform_2(%arg0: i32) -> (i32, i32) {
    %c0_i32 = arith.constant 0 : i32
    %c0_i32_0 = arith.constant 0 : i32
    %c0_i32_1 = arith.constant 0 : i32
    return %c0_i32, %c0_i32_0 : i32, i32
  }
  func.func @transform_3(%arg0: i32) -> (i32, i32) {
    %c0_i32 = arith.constant 0 : i32
    %c0_i32_0 = arith.constant 0 : i32
    %c0_i32_1 = arith.constant 0 : i32
    return %c0_i32, %c0_i32_0 : i32, i32
  }
  func.func @transform_4(%arg0: i32) -> (i32, i32) {
    %c0_i32 = arith.constant 0 : i32
    %c0_i32_0 = arith.constant 0 : i32
    %c0_i32_1 = arith.constant 0 : i32
    return %c0_i32, %c0_i32_0 : i32, i32
  }
  func.func @transform_5(%arg0: i32) -> (i32, i32) {
    %c0_i32 = arith.constant 0 : i32
    %c0_i32_0 = arith.constant 0 : i32
    %c0_i32_1 = arith.constant 0 : i32
    return %c0_i32, %c0_i32_0 : i32, i32
  }
  func.func @transform_6(%arg0: i32) -> (i32, i32) {
    %c0_i32 = arith.constant 0 : i32
    %c0_i32_0 = arith.constant 0 : i32
    %c0_i32_1 = arith.constant 0 : i32
    return %c0_i32, %c0_i32_0 : i32, i32
  }
  func.func @transform_7(%arg0: i32) -> (i32, i32) {
    %c0_i32 = arith.constant 0 : i32
    %c0_i32_0 = arith.constant 0 : i32
    %c0_i32_1 = arith.constant 0 : i32
    return %c0_i32, %c0_i32_0 : i32, i32
  }
  func.func @transform_8(%arg0: i32) -> (i32, i32) {
    %c0_i32 = arith.constant 0 : i32
    %c0_i32_0 = arith.constant 0 : i32
    %c0_i32_1 = arith.constant 0 : i32
    return %c0_i32, %c0_i32_0 : i32, i32
  }
  func.func @transform_9(%arg0: i32) -> (i32, i32) {
    %c0_i32 = arith.constant 0 : i32
    %c0_i32_0 = arith.constant 0 : i32
    %c0_i32_1 = arith.constant 0 : i32
    return %c0_i32, %c0_i32_0 : i32, i32
  }
  func.func @transform_10(%arg0: i32) -> (i32, i32) {
    %c0_i32 = arith.constant 0 : i32
    %c0_i32_0 = arith.constant 0 : i32
    %c0_i32_1 = arith.constant 0 : i32
    return %c0_i32, %c0_i32_0 : i32, i32
  }
  func.func @transform_11(%arg0: i32) -> (i32, i32) {
    %c0_i32 = arith.constant 0 : i32
    %c0_i32_0 = arith.constant 0 : i32
    %c0_i32_1 = arith.constant 0 : i32
    return %c0_i32, %c0_i32_0 : i32, i32
  }
  func.func @transform_12(%arg0: i32) -> (i32, i32) {
    %c0_i32 = arith.constant 0 : i32
    %c0_i32_0 = arith.constant 0 : i32
    %c0_i32_1 = arith.constant 0 : i32
    return %c0_i32, %c0_i32_0 : i32, i32
  }
  func.func @transform_13(%arg0: i32) -> (i32, i32, i32) {
    %c0_i32 = arith.constant 0 : i32
    %c0_i32_0 = arith.constant 0 : i32
    %c0_i32_1 = arith.constant 0 : i32
    %c0_i32_2 = arith.constant 0 : i32
    return %c0_i32, %c0_i32_0, %c0_i32_1 : i32, i32, i32
  }
}

module attributes {stable_mosaic.version = 11 : i64} {
  func.func @_modconv_kernel(%arg0: i32, %arg1: memref<2x32xf32, #tpu.memory_space<vmem>>, %arg2: memref<2x64x144xf32, #tpu.memory_space<vmem>>, %arg3: memref<32x144xf32, #tpu.memory_space<vmem>>, %arg4: memref<1x144xf32, #tpu.memory_space<vmem>>, %arg5: memref<16x144xf32, #tpu.memory_space<vmem>>, %arg6: memref<16x1xf32, #tpu.memory_space<vmem>>, %arg7: memref<2x16x64xf32, #tpu.memory_space<vmem>>) attributes {dimension_semantics = [#tpu.dimension_semantics<arbitrary>], iteration_bounds = array<i64: 1>, scalar_prefetch = 0 : i64, scratch_operands = 0 : i64, tpu.core_type = #tpu.core_type<tc>, window_params = [{pipeline_mode = #tpu.pipeline_mode<synchronous>, transform_indices = @transform_0, window_bounds = array<i64: 2, 32>}, {pipeline_mode = #tpu.pipeline_mode<synchronous>, transform_indices = @transform_1, window_bounds = array<i64: 2, 64, 144>}, {pipeline_mode = #tpu.pipeline_mode<synchronous>, transform_indices = @transform_2, window_bounds = array<i64: 32, 144>}, {pipeline_mode = #tpu.pipeline_mode<synchronous>, transform_indices = @transform_3, window_bounds = array<i64: 1, 144>}, {pipeline_mode = #tpu.pipeline_mode<synchronous>, transform_indices = @transform_4, window_bounds = array<i64: 16, 144>}, {pipeline_mode = #tpu.pipeline_mode<synchronous>, transform_indices = @transform_5, window_bounds = array<i64: 16, 1>}, {pipeline_mode = #tpu.pipeline_mode<synchronous>, transform_indices = @transform_6, window_bounds = array<i64: 2, 16, 64>}]} {
    %c0 = arith.constant 0 : index
    %c0_0 = arith.constant 0 : index
    %0 = vector.load %arg1[%c0, %c0_0] : memref<2x32xf32, #tpu.memory_space<vmem>>, vector<2x32xf32>
    %c0_1 = arith.constant 0 : index
    %c0_2 = arith.constant 0 : index
    %1 = vector.load %arg3[%c0_1, %c0_2] : memref<32x144xf32, #tpu.memory_space<vmem>>, vector<32x144xf32>
    %cst = arith.constant dense<0.000000e+00> : vector<2x144xf32>
    %2 = tpu.matmul %0, %1, %cst {dimension_numbers = #tpu.dot_dimension_numbers<[1], [0], [0], [1], [0, 0, 1, 1], [], []>} : vector<2x32xf32>, vector<32x144xf32>, vector<2x144xf32> -> vector<2x144xf32>
    %c0_3 = arith.constant 0 : index
    %c0_4 = arith.constant 0 : index
    %3 = vector.load %arg4[%c0_3, %c0_4] : memref<1x144xf32, #tpu.memory_space<vmem>>, vector<1x144xf32>
    %4 = vector.broadcast %3 : vector<1x144xf32> to vector<2x144xf32>
    %5 = arith.addf %2, %4 : vector<2x144xf32>
    %c0_5 = arith.constant 0 : index
    %c0_6 = arith.constant 0 : index
    %6 = vector.load %arg5[%c0_5, %c0_6] : memref<16x144xf32, #tpu.memory_space<vmem>>, vector<16x144xf32>
    %c0_7 = arith.constant 0 : index
    %c0_8 = arith.constant 0 : index
    %7 = vector.load %arg6[%c0_7, %c0_8] : memref<16x1xf32, #tpu.memory_space<vmem>>, vector<16x1xf32>
    %8 = vector.extract_strided_slice %5 {offsets = [0, 0], sizes = [1, 144], strides = [1, 1]} : vector<2x144xf32> to vector<1x144xf32>
    %c0_9 = arith.constant 0 : index
    %c0_10 = arith.constant 0 : index
    %c0_11 = arith.constant 0 : index
    %9 = vector.load %arg2[%c0_9, %c0_10, %c0_11] : memref<2x64x144xf32, #tpu.memory_space<vmem>>, vector<1x64x144xf32>
    %10 = vector.shape_cast %9 : vector<1x64x144xf32> to vector<64x144xf32>
    %11 = vector.broadcast %8 : vector<1x144xf32> to vector<16x144xf32>
    %12 = arith.mulf %6, %11 : vector<16x144xf32>
    %13 = arith.mulf %12, %12 : vector<16x144xf32>
    %cst_12 = arith.constant dense<0.000000e+00> : vector<16xf32>
    %14 = vector.multi_reduction <add>, %13, %cst_12 [1] : vector<16x144xf32> to vector<16xf32>
    %15 = vector.shape_cast %14 : vector<16xf32> to vector<16x1xf32>
    %cst_13 = arith.constant 9.99999993E-9 : f32
    %16 = vector.broadcast %cst_13 : f32 to vector<16x1xf32>
    %17 = arith.addf %15, %16 : vector<16x1xf32>
    %18 = math.rsqrt %17 : vector<16x1xf32>
    %19 = vector.broadcast %18 : vector<16x1xf32> to vector<16x144xf32>
    %20 = arith.mulf %12, %19 : vector<16x144xf32>
    %cst_14 = arith.constant dense<0.000000e+00> : vector<16x64xf32>
    %21 = tpu.matmul %20, %10, %cst_14 {dimension_numbers = #tpu.dot_dimension_numbers<[1], [1], [0], [0], [0, 0, 1, 0], [], []>} : vector<16x144xf32>, vector<64x144xf32>, vector<16x64xf32> -> vector<16x64xf32>
    %22 = vector.broadcast %7 : vector<16x1xf32> to vector<16x64xf32>
    %23 = arith.addf %21, %22 : vector<16x64xf32>
    %cst_15 = arith.constant 0.000000e+00 : f32
    %24 = vector.broadcast %cst_15 : f32 to vector<16x64xf32>
    %25 = arith.cmpf oge, %23, %24 : vector<16x64xf32>
    %cst_16 = arith.constant 2.000000e-01 : f32
    %26 = vector.broadcast %cst_16 : f32 to vector<16x64xf32>
    %27 = arith.mulf %26, %23 : vector<16x64xf32>
    %28 = arith.select %25, %23, %27 : vector<16x64xi1>, vector<16x64xf32>
    %cst_17 = arith.constant 1.41421354 : f32
    %29 = vector.broadcast %cst_17 : f32 to vector<16x64xf32>
    %30 = arith.mulf %28, %29 : vector<16x64xf32>
    %c0_18 = arith.constant 0 : index
    %c0_19 = arith.constant 0 : index
    %c0_20 = arith.constant 0 : index
    %31 = vector.load %arg7[%c0_18, %c0_19, %c0_20] : memref<2x16x64xf32, #tpu.memory_space<vmem>>, vector<1x16x64xf32>
    %32 = vector.shape_cast %31 : vector<1x16x64xf32> to vector<16x64xf32>
    %33 = vector.shape_cast %30 : vector<16x64xf32> to vector<1x16x64xf32>
    tpu.vector_store %arg7[%c0_18, %c0_19, %c0_20], %33 {strides = array<i32>} : memref<2x16x64xf32, #tpu.memory_space<vmem>>, vector<1x16x64xf32>,
    %34 = vector.extract_strided_slice %5 {offsets = [1, 0], sizes = [1, 144], strides = [1, 1]} : vector<2x144xf32> to vector<1x144xf32>
    %c1 = arith.constant 1 : index
    %c0_21 = arith.constant 0 : index
    %c0_22 = arith.constant 0 : index
    %35 = vector.load %arg2[%c1, %c0_21, %c0_22] : memref<2x64x144xf32, #tpu.memory_space<vmem>>, vector<1x64x144xf32>
    %36 = vector.shape_cast %35 : vector<1x64x144xf32> to vector<64x144xf32>
    %37 = vector.broadcast %34 : vector<1x144xf32> to vector<16x144xf32>
    %38 = arith.mulf %6, %37 : vector<16x144xf32>
    %39 = arith.mulf %38, %38 : vector<16x144xf32>
    %cst_23 = arith.constant dense<0.000000e+00> : vector<16xf32>
    %40 = vector.multi_reduction <add>, %39, %cst_23 [1] : vector<16x144xf32> to vector<16xf32>
    %41 = vector.shape_cast %40 : vector<16xf32> to vector<16x1xf32>
    %cst_24 = arith.constant 9.99999993E-9 : f32
    %42 = vector.broadcast %cst_24 : f32 to vector<16x1xf32>
    %43 = arith.addf %41, %42 : vector<16x1xf32>
    %44 = math.rsqrt %43 : vector<16x1xf32>
    %45 = vector.broadcast %44 : vector<16x1xf32> to vector<16x144xf32>
    %46 = arith.mulf %38, %45 : vector<16x144xf32>
    %cst_25 = arith.constant dense<0.000000e+00> : vector<16x64xf32>
    %47 = tpu.matmul %46, %36, %cst_25 {dimension_numbers = #tpu.dot_dimension_numbers<[1], [1], [0], [0], [0, 0, 1, 0], [], []>} : vector<16x144xf32>, vector<64x144xf32>, vector<16x64xf32> -> vector<16x64xf32>
    %48 = vector.broadcast %7 : vector<16x1xf32> to vector<16x64xf32>
    %49 = arith.addf %47, %48 : vector<16x64xf32>
    %cst_26 = arith.constant 0.000000e+00 : f32
    %50 = vector.broadcast %cst_26 : f32 to vector<16x64xf32>
    %51 = arith.cmpf oge, %49, %50 : vector<16x64xf32>
    %cst_27 = arith.constant 2.000000e-01 : f32
    %52 = vector.broadcast %cst_27 : f32 to vector<16x64xf32>
    %53 = arith.mulf %52, %49 : vector<16x64xf32>
    %54 = arith.select %51, %49, %53 : vector<16x64xi1>, vector<16x64xf32>
    %cst_28 = arith.constant 1.41421354 : f32
    %55 = vector.broadcast %cst_28 : f32 to vector<16x64xf32>
    %56 = arith.mulf %54, %55 : vector<16x64xf32>
    %c1_29 = arith.constant 1 : index
    %c0_30 = arith.constant 0 : index
    %c0_31 = arith.constant 0 : index
    %57 = vector.load %arg7[%c1_29, %c0_30, %c0_31] : memref<2x16x64xf32, #tpu.memory_space<vmem>>, vector<1x16x64xf32>
    %58 = vector.shape_cast %57 : vector<1x16x64xf32> to vector<16x64xf32>
    %59 = vector.shape_cast %56 : vector<16x64xf32> to vector<1x16x64xf32>
    tpu.vector_store %arg7[%c1_29, %c0_30, %c0_31], %59 {strides = array<i32>} : memref<2x16x64xf32, #tpu.memory_space<vmem>>, vector<1x16x64xf32>,
    return
  }
  func.func @transform_0(%arg0: i32) -> (i32, i32) {
    %c0_i32 = arith.constant 0 : i32
    %c0_i32_0 = arith.constant 0 : i32
    %c0_i32_1 = arith.constant 0 : i32
    return %c0_i32, %c0_i32_0 : i32, i32
  }
  func.func @transform_1(%arg0: i32) -> (i32, i32, i32) {
    %c0_i32 = arith.constant 0 : i32
    %c0_i32_0 = arith.constant 0 : i32
    %c0_i32_1 = arith.constant 0 : i32
    %c0_i32_2 = arith.constant 0 : i32
    return %c0_i32, %c0_i32_0, %c0_i32_1 : i32, i32, i32
  }
  func.func @transform_2(%arg0: i32) -> (i32, i32) {
    %c0_i32 = arith.constant 0 : i32
    %c0_i32_0 = arith.constant 0 : i32
    %c0_i32_1 = arith.constant 0 : i32
    return %c0_i32, %c0_i32_0 : i32, i32
  }
  func.func @transform_3(%arg0: i32) -> (i32, i32) {
    %c0_i32 = arith.constant 0 : i32
    %c0_i32_0 = arith.constant 0 : i32
    %c0_i32_1 = arith.constant 0 : i32
    return %c0_i32, %c0_i32_0 : i32, i32
  }
  func.func @transform_4(%arg0: i32) -> (i32, i32) {
    %c0_i32 = arith.constant 0 : i32
    %c0_i32_0 = arith.constant 0 : i32
    %c0_i32_1 = arith.constant 0 : i32
    return %c0_i32, %c0_i32_0 : i32, i32
  }
  func.func @transform_5(%arg0: i32) -> (i32, i32) {
    %c0_i32 = arith.constant 0 : i32
    %c0_i32_0 = arith.constant 0 : i32
    %c0_i32_1 = arith.constant 0 : i32
    return %c0_i32, %c0_i32_0 : i32, i32
  }
  func.func @transform_6(%arg0: i32) -> (i32, i32, i32) {
    %c0_i32 = arith.constant 0 : i32
    %c0_i32_0 = arith.constant 0 : i32
    %c0_i32_1 = arith.constant 0 : i32
    %c0_i32_2 = arith.constant 0 : i32
    return %c0_i32, %c0_i32_0, %c0_i32_1 : i32, i32, i32
  }
}

module attributes {stable_mosaic.version = 11 : i64} {
  func.func @_modconv_kernel(%arg0: i32, %arg1: memref<2x32xf32, #tpu.memory_space<vmem>>, %arg2: memref<2x256x144xf32, #tpu.memory_space<vmem>>, %arg3: memref<32x144xf32, #tpu.memory_space<vmem>>, %arg4: memref<1x144xf32, #tpu.memory_space<vmem>>, %arg5: memref<16x144xf32, #tpu.memory_space<vmem>>, %arg6: memref<16x1xf32, #tpu.memory_space<vmem>>, %arg7: memref<2x16x256xf32, #tpu.memory_space<vmem>>) attributes {dimension_semantics = [#tpu.dimension_semantics<arbitrary>], iteration_bounds = array<i64: 1>, scalar_prefetch = 0 : i64, scratch_operands = 0 : i64, tpu.core_type = #tpu.core_type<tc>, window_params = [{pipeline_mode = #tpu.pipeline_mode<synchronous>, transform_indices = @transform_0, window_bounds = array<i64: 2, 32>}, {pipeline_mode = #tpu.pipeline_mode<synchronous>, transform_indices = @transform_1, window_bounds = array<i64: 2, 256, 144>}, {pipeline_mode = #tpu.pipeline_mode<synchronous>, transform_indices = @transform_2, window_bounds = array<i64: 32, 144>}, {pipeline_mode = #tpu.pipeline_mode<synchronous>, transform_indices = @transform_3, window_bounds = array<i64: 1, 144>}, {pipeline_mode = #tpu.pipeline_mode<synchronous>, transform_indices = @transform_4, window_bounds = array<i64: 16, 144>}, {pipeline_mode = #tpu.pipeline_mode<synchronous>, transform_indices = @transform_5, window_bounds = array<i64: 16, 1>}, {pipeline_mode = #tpu.pipeline_mode<synchronous>, transform_indices = @transform_6, window_bounds = array<i64: 2, 16, 256>}]} {
    %c0 = arith.constant 0 : index
    %c0_0 = arith.constant 0 : index
    %0 = vector.load %arg1[%c0, %c0_0] : memref<2x32xf32, #tpu.memory_space<vmem>>, vector<2x32xf32>
    %c0_1 = arith.constant 0 : index
    %c0_2 = arith.constant 0 : index
    %1 = vector.load %arg3[%c0_1, %c0_2] : memref<32x144xf32, #tpu.memory_space<vmem>>, vector<32x144xf32>
    %cst = arith.constant dense<0.000000e+00> : vector<2x144xf32>
    %2 = tpu.matmul %0, %1, %cst {dimension_numbers = #tpu.dot_dimension_numbers<[1], [0], [0], [1], [0, 0, 1, 1], [], []>} : vector<2x32xf32>, vector<32x144xf32>, vector<2x144xf32> -> vector<2x144xf32>
    %c0_3 = arith.constant 0 : index
    %c0_4 = arith.constant 0 : index
    %3 = vector.load %arg4[%c0_3, %c0_4] : memref<1x144xf32, #tpu.memory_space<vmem>>, vector<1x144xf32>
    %4 = vector.broadcast %3 : vector<1x144xf32> to vector<2x144xf32>
    %5 = arith.addf %2, %4 : vector<2x144xf32>
    %c0_5 = arith.constant 0 : index
    %c0_6 = arith.constant 0 : index
    %6 = vector.load %arg5[%c0_5, %c0_6] : memref<16x144xf32, #tpu.memory_space<vmem>>, vector<16x144xf32>
    %c0_7 = arith.constant 0 : index
    %c0_8 = arith.constant 0 : index
    %7 = vector.load %arg6[%c0_7, %c0_8] : memref<16x1xf32, #tpu.memory_space<vmem>>, vector<16x1xf32>
    %8 = vector.extract_strided_slice %5 {offsets = [0, 0], sizes = [1, 144], strides = [1, 1]} : vector<2x144xf32> to vector<1x144xf32>
    %c0_9 = arith.constant 0 : index
    %c0_10 = arith.constant 0 : index
    %c0_11 = arith.constant 0 : index
    %9 = vector.load %arg2[%c0_9, %c0_10, %c0_11] : memref<2x256x144xf32, #tpu.memory_space<vmem>>, vector<1x256x144xf32>
    %10 = vector.shape_cast %9 : vector<1x256x144xf32> to vector<256x144xf32>
    %11 = vector.broadcast %8 : vector<1x144xf32> to vector<16x144xf32>
    %12 = arith.mulf %6, %11 : vector<16x144xf32>
    %13 = arith.mulf %12, %12 : vector<16x144xf32>
    %cst_12 = arith.constant dense<0.000000e+00> : vector<16xf32>
    %14 = vector.multi_reduction <add>, %13, %cst_12 [1] : vector<16x144xf32> to vector<16xf32>
    %15 = vector.shape_cast %14 : vector<16xf32> to vector<16x1xf32>
    %cst_13 = arith.constant 9.99999993E-9 : f32
    %16 = vector.broadcast %cst_13 : f32 to vector<16x1xf32>
    %17 = arith.addf %15, %16 : vector<16x1xf32>
    %18 = math.rsqrt %17 : vector<16x1xf32>
    %19 = vector.broadcast %18 : vector<16x1xf32> to vector<16x144xf32>
    %20 = arith.mulf %12, %19 : vector<16x144xf32>
    %cst_14 = arith.constant dense<0.000000e+00> : vector<16x256xf32>
    %21 = tpu.matmul %20, %10, %cst_14 {dimension_numbers = #tpu.dot_dimension_numbers<[1], [1], [0], [0], [0, 0, 1, 0], [], []>} : vector<16x144xf32>, vector<256x144xf32>, vector<16x256xf32> -> vector<16x256xf32>
    %22 = vector.broadcast %7 : vector<16x1xf32> to vector<16x256xf32>
    %23 = arith.addf %21, %22 : vector<16x256xf32>
    %cst_15 = arith.constant 0.000000e+00 : f32
    %24 = vector.broadcast %cst_15 : f32 to vector<16x256xf32>
    %25 = arith.cmpf oge, %23, %24 : vector<16x256xf32>
    %cst_16 = arith.constant 2.000000e-01 : f32
    %26 = vector.broadcast %cst_16 : f32 to vector<16x256xf32>
    %27 = arith.mulf %26, %23 : vector<16x256xf32>
    %28 = arith.select %25, %23, %27 : vector<16x256xi1>, vector<16x256xf32>
    %cst_17 = arith.constant 1.41421354 : f32
    %29 = vector.broadcast %cst_17 : f32 to vector<16x256xf32>
    %30 = arith.mulf %28, %29 : vector<16x256xf32>
    %c0_18 = arith.constant 0 : index
    %c0_19 = arith.constant 0 : index
    %c0_20 = arith.constant 0 : index
    %31 = vector.load %arg7[%c0_18, %c0_19, %c0_20] : memref<2x16x256xf32, #tpu.memory_space<vmem>>, vector<1x16x256xf32>
    %32 = vector.shape_cast %31 : vector<1x16x256xf32> to vector<16x256xf32>
    %33 = vector.shape_cast %30 : vector<16x256xf32> to vector<1x16x256xf32>
    tpu.vector_store %arg7[%c0_18, %c0_19, %c0_20], %33 {strides = array<i32>} : memref<2x16x256xf32, #tpu.memory_space<vmem>>, vector<1x16x256xf32>,
    %34 = vector.extract_strided_slice %5 {offsets = [1, 0], sizes = [1, 144], strides = [1, 1]} : vector<2x144xf32> to vector<1x144xf32>
    %c1 = arith.constant 1 : index
    %c0_21 = arith.constant 0 : index
    %c0_22 = arith.constant 0 : index
    %35 = vector.load %arg2[%c1, %c0_21, %c0_22] : memref<2x256x144xf32, #tpu.memory_space<vmem>>, vector<1x256x144xf32>
    %36 = vector.shape_cast %35 : vector<1x256x144xf32> to vector<256x144xf32>
    %37 = vector.broadcast %34 : vector<1x144xf32> to vector<16x144xf32>
    %38 = arith.mulf %6, %37 : vector<16x144xf32>
    %39 = arith.mulf %38, %38 : vector<16x144xf32>
    %cst_23 = arith.constant dense<0.000000e+00> : vector<16xf32>
    %40 = vector.multi_reduction <add>, %39, %cst_23 [1] : vector<16x144xf32> to vector<16xf32>
    %41 = vector.shape_cast %40 : vector<16xf32> to vector<16x1xf32>
    %cst_24 = arith.constant 9.99999993E-9 : f32
    %42 = vector.broadcast %cst_24 : f32 to vector<16x1xf32>
    %43 = arith.addf %41, %42 : vector<16x1xf32>
    %44 = math.rsqrt %43 : vector<16x1xf32>
    %45 = vector.broadcast %44 : vector<16x1xf32> to vector<16x144xf32>
    %46 = arith.mulf %38, %45 : vector<16x144xf32>
    %cst_25 = arith.constant dense<0.000000e+00> : vector<16x256xf32>
    %47 = tpu.matmul %46, %36, %cst_25 {dimension_numbers = #tpu.dot_dimension_numbers<[1], [1], [0], [0], [0, 0, 1, 0], [], []>} : vector<16x144xf32>, vector<256x144xf32>, vector<16x256xf32> -> vector<16x256xf32>
    %48 = vector.broadcast %7 : vector<16x1xf32> to vector<16x256xf32>
    %49 = arith.addf %47, %48 : vector<16x256xf32>
    %cst_26 = arith.constant 0.000000e+00 : f32
    %50 = vector.broadcast %cst_26 : f32 to vector<16x256xf32>
    %51 = arith.cmpf oge, %49, %50 : vector<16x256xf32>
    %cst_27 = arith.constant 2.000000e-01 : f32
    %52 = vector.broadcast %cst_27 : f32 to vector<16x256xf32>
    %53 = arith.mulf %52, %49 : vector<16x256xf32>
    %54 = arith.select %51, %49, %53 : vector<16x256xi1>, vector<16x256xf32>
    %cst_28 = arith.constant 1.41421354 : f32
    %55 = vector.broadcast %cst_28 : f32 to vector<16x256xf32>
    %56 = arith.mulf %54, %55 : vector<16x256xf32>
    %c1_29 = arith.constant 1 : index
    %c0_30 = arith.constant 0 : index
    %c0_31 = arith.constant 0 : index
    %57 = vector.load %arg7[%c1_29, %c0_30, %c0_31] : memref<2x16x256xf32, #tpu.memory_space<vmem>>, vector<1x16x256xf32>
    %58 = vector.shape_cast %57 : vector<1x16x256xf32> to vector<16x256xf32>
    %59 = vector.shape_cast %56 : vector<16x256xf32> to vector<1x16x256xf32>
    tpu.vector_store %arg7[%c1_29, %c0_30, %c0_31], %59 {strides = array<i32>} : memref<2x16x256xf32, #tpu.memory_space<vmem>>, vector<1x16x256xf32>,
    return
  }
  func.func @transform_0(%arg0: i32) -> (i32, i32) {
    %c0_i32 = arith.constant 0 : i32
    %c0_i32_0 = arith.constant 0 : i32
    %c0_i32_1 = arith.constant 0 : i32
    return %c0_i32, %c0_i32_0 : i32, i32
  }
  func.func @transform_1(%arg0: i32) -> (i32, i32, i32) {
    %c0_i32 = arith.constant 0 : i32
    %c0_i32_0 = arith.constant 0 : i32
    %c0_i32_1 = arith.constant 0 : i32
    %c0_i32_2 = arith.constant 0 : i32
    return %c0_i32, %c0_i32_0, %c0_i32_1 : i32, i32, i32
  }
  func.func @transform_2(%arg0: i32) -> (i32, i32) {
    %c0_i32 = arith.constant 0 : i32
    %c0_i32_0 = arith.constant 0 : i32
    %c0_i32_1 = arith.constant 0 : i32
    return %c0_i32, %c0_i32_0 : i32, i32
  }
  func.func @transform_3(%arg0: i32) -> (i32, i32) {
    %c0_i32 = arith.constant 0 : i32
    %c0_i32_0 = arith.constant 0 : i32
    %c0_i32_1 = arith.constant 0 : i32
    return %c0_i32, %c0_i32_0 : i32, i32
  }
  func.func @transform_4(%arg0: i32) -> (i32, i32) {
    %c0_i32 = arith.constant 0 : i32
    %c0_i32_0 = arith.constant 0 : i32
    %c0_i32_1 = arith.constant 0 : i32
    return %c0_i32, %c0_i32_0 : i32, i32
  }
  func.func @transform_5(%arg0: i32) -> (i32, i32) {
    %c0_i32 = arith.constant 0 : i32
    %c0_i32_0 = arith.constant 0 : i32
    %c0_i32_1 = arith.constant 0 : i32
    return %c0_i32, %c0_i32_0 : i32, i32
  }
  func.func @transform_6(%arg0: i32) -> (i32, i32, i32) {
    %c0_i32 = arith.constant 0 : i32
    %c0_i32_0 = arith.constant 0 : i32
    %c0_i32_1 = arith.constant 0 : i32
    %c0_i32_2 = arith.constant 0 : i32
    return %c0_i32, %c0_i32_0, %c0_i32_1 : i32, i32, i32
  }
}

module attributes {stable_mosaic.version = 11 : i64} {
  func.func @_final_kernel(%arg0: i32, %arg1: memref<2x32xf32, #tpu.memory_space<vmem>>, %arg2: memref<2x32xf32, #tpu.memory_space<vmem>>, %arg3: memref<2x256x144xf32, #tpu.memory_space<vmem>>, %arg4: memref<32x144xf32, #tpu.memory_space<vmem>>, %arg5: memref<1x144xf32, #tpu.memory_space<vmem>>, %arg6: memref<16x144xf32, #tpu.memory_space<vmem>>, %arg7: memref<16x1xf32, #tpu.memory_space<vmem>>, %arg8: memref<32x16xf32, #tpu.memory_space<vmem>>, %arg9: memref<1x16xf32, #tpu.memory_space<vmem>>, %arg10: memref<3x16xf32, #tpu.memory_space<vmem>>, %arg11: memref<3x1xf32, #tpu.memory_space<vmem>>, %arg12: memref<256x64xf32, #tpu.memory_space<vmem>>, %arg13: memref<2x3x64xf32, #tpu.memory_space<vmem>>) attributes {dimension_semantics = [#tpu.dimension_semantics<arbitrary>], iteration_bounds = array<i64: 1>, scalar_prefetch = 0 : i64, scratch_operands = 0 : i64, tpu.core_type = #tpu.core_type<tc>, window_params = [{pipeline_mode = #tpu.pipeline_mode<synchronous>, transform_indices = @transform_0, window_bounds = array<i64: 2, 32>}, {pipeline_mode = #tpu.pipeline_mode<synchronous>, transform_indices = @transform_1, window_bounds = array<i64: 2, 32>}, {pipeline_mode = #tpu.pipeline_mode<synchronous>, transform_indices = @transform_2, window_bounds = array<i64: 2, 256, 144>}, {pipeline_mode = #tpu.pipeline_mode<synchronous>, transform_indices = @transform_3, window_bounds = array<i64: 32, 144>}, {pipeline_mode = #tpu.pipeline_mode<synchronous>, transform_indices = @transform_4, window_bounds = array<i64: 1, 144>}, {pipeline_mode = #tpu.pipeline_mode<synchronous>, transform_indices = @transform_5, window_bounds = array<i64: 16, 144>}, {pipeline_mode = #tpu.pipeline_mode<synchronous>, transform_indices = @transform_6, window_bounds = array<i64: 16, 1>}, {pipeline_mode = #tpu.pipeline_mode<synchronous>, transform_indices = @transform_7, window_bounds = array<i64: 32, 16>}, {pipeline_mode = #tpu.pipeline_mode<synchronous>, transform_indices = @transform_8, window_bounds = array<i64: 1, 16>}, {pipeline_mode = #tpu.pipeline_mode<synchronous>, transform_indices = @transform_9, window_bounds = array<i64: 3, 16>}, {pipeline_mode = #tpu.pipeline_mode<synchronous>, transform_indices = @transform_10, window_bounds = array<i64: 3, 1>}, {pipeline_mode = #tpu.pipeline_mode<synchronous>, transform_indices = @transform_11, window_bounds = array<i64: 256, 64>}, {pipeline_mode = #tpu.pipeline_mode<synchronous>, transform_indices = @transform_12, window_bounds = array<i64: 2, 3, 64>}]} {
    %c0 = arith.constant 0 : index
    %c0_0 = arith.constant 0 : index
    %0 = vector.load %arg1[%c0, %c0_0] : memref<2x32xf32, #tpu.memory_space<vmem>>, vector<2x32xf32>
    %c0_1 = arith.constant 0 : index
    %c0_2 = arith.constant 0 : index
    %1 = vector.load %arg4[%c0_1, %c0_2] : memref<32x144xf32, #tpu.memory_space<vmem>>, vector<32x144xf32>
    %cst = arith.constant dense<0.000000e+00> : vector<2x144xf32>
    %2 = tpu.matmul %0, %1, %cst {dimension_numbers = #tpu.dot_dimension_numbers<[1], [0], [0], [1], [0, 0, 1, 1], [], []>} : vector<2x32xf32>, vector<32x144xf32>, vector<2x144xf32> -> vector<2x144xf32>
    %c0_3 = arith.constant 0 : index
    %c0_4 = arith.constant 0 : index
    %3 = vector.load %arg5[%c0_3, %c0_4] : memref<1x144xf32, #tpu.memory_space<vmem>>, vector<1x144xf32>
    %4 = vector.broadcast %3 : vector<1x144xf32> to vector<2x144xf32>
    %5 = arith.addf %2, %4 : vector<2x144xf32>
    %c0_5 = arith.constant 0 : index
    %c0_6 = arith.constant 0 : index
    %6 = vector.load %arg2[%c0_5, %c0_6] : memref<2x32xf32, #tpu.memory_space<vmem>>, vector<2x32xf32>
    %c0_7 = arith.constant 0 : index
    %c0_8 = arith.constant 0 : index
    %7 = vector.load %arg8[%c0_7, %c0_8] : memref<32x16xf32, #tpu.memory_space<vmem>>, vector<32x16xf32>
    %cst_9 = arith.constant dense<0.000000e+00> : vector<2x16xf32>
    %8 = tpu.matmul %6, %7, %cst_9 {dimension_numbers = #tpu.dot_dimension_numbers<[1], [0], [0], [1], [0, 0, 1, 1], [], []>} : vector<2x32xf32>, vector<32x16xf32>, vector<2x16xf32> -> vector<2x16xf32>
    %c0_10 = arith.constant 0 : index
    %c0_11 = arith.constant 0 : index
    %9 = vector.load %arg9[%c0_10, %c0_11] : memref<1x16xf32, #tpu.memory_space<vmem>>, vector<1x16xf32>
    %10 = vector.broadcast %9 : vector<1x16xf32> to vector<2x16xf32>
    %11 = arith.addf %8, %10 : vector<2x16xf32>
    %c0_12 = arith.constant 0 : index
    %c0_13 = arith.constant 0 : index
    %12 = vector.load %arg6[%c0_12, %c0_13] : memref<16x144xf32, #tpu.memory_space<vmem>>, vector<16x144xf32>
    %c0_14 = arith.constant 0 : index
    %c0_15 = arith.constant 0 : index
    %13 = vector.load %arg7[%c0_14, %c0_15] : memref<16x1xf32, #tpu.memory_space<vmem>>, vector<16x1xf32>
    %c0_16 = arith.constant 0 : index
    %c0_17 = arith.constant 0 : index
    %14 = vector.load %arg10[%c0_16, %c0_17] : memref<3x16xf32, #tpu.memory_space<vmem>>, vector<3x16xf32>
    %c0_18 = arith.constant 0 : index
    %c0_19 = arith.constant 0 : index
    %15 = vector.load %arg11[%c0_18, %c0_19] : memref<3x1xf32, #tpu.memory_space<vmem>>, vector<3x1xf32>
    %16 = vector.extract_strided_slice %5 {offsets = [0, 0], sizes = [1, 144], strides = [1, 1]} : vector<2x144xf32> to vector<1x144xf32>
    %c0_20 = arith.constant 0 : index
    %c0_21 = arith.constant 0 : index
    %c0_22 = arith.constant 0 : index
    %17 = vector.load %arg3[%c0_20, %c0_21, %c0_22] : memref<2x256x144xf32, #tpu.memory_space<vmem>>, vector<1x256x144xf32>
    %18 = vector.shape_cast %17 : vector<1x256x144xf32> to vector<256x144xf32>
    %19 = vector.broadcast %16 : vector<1x144xf32> to vector<16x144xf32>
    %20 = arith.mulf %12, %19 : vector<16x144xf32>
    %21 = arith.mulf %20, %20 : vector<16x144xf32>
    %cst_23 = arith.constant dense<0.000000e+00> : vector<16xf32>
    %22 = vector.multi_reduction <add>, %21, %cst_23 [1] : vector<16x144xf32> to vector<16xf32>
    %23 = vector.shape_cast %22 : vector<16xf32> to vector<16x1xf32>
    %cst_24 = arith.constant 9.99999993E-9 : f32
    %24 = vector.broadcast %cst_24 : f32 to vector<16x1xf32>
    %25 = arith.addf %23, %24 : vector<16x1xf32>
    %26 = math.rsqrt %25 : vector<16x1xf32>
    %27 = vector.broadcast %26 : vector<16x1xf32> to vector<16x144xf32>
    %28 = arith.mulf %20, %27 : vector<16x144xf32>
    %cst_25 = arith.constant dense<0.000000e+00> : vector<16x256xf32>
    %29 = tpu.matmul %28, %18, %cst_25 {dimension_numbers = #tpu.dot_dimension_numbers<[1], [1], [0], [0], [0, 0, 1, 0], [], []>} : vector<16x144xf32>, vector<256x144xf32>, vector<16x256xf32> -> vector<16x256xf32>
    %30 = vector.broadcast %13 : vector<16x1xf32> to vector<16x256xf32>
    %31 = arith.addf %29, %30 : vector<16x256xf32>
    %cst_26 = arith.constant 0.000000e+00 : f32
    %32 = vector.broadcast %cst_26 : f32 to vector<16x256xf32>
    %33 = arith.cmpf oge, %31, %32 : vector<16x256xf32>
    %cst_27 = arith.constant 2.000000e-01 : f32
    %34 = vector.broadcast %cst_27 : f32 to vector<16x256xf32>
    %35 = arith.mulf %34, %31 : vector<16x256xf32>
    %36 = arith.select %33, %31, %35 : vector<16x256xi1>, vector<16x256xf32>
    %cst_28 = arith.constant 1.41421354 : f32
    %37 = vector.broadcast %cst_28 : f32 to vector<16x256xf32>
    %38 = arith.mulf %36, %37 : vector<16x256xf32>
    %39 = vector.extract_strided_slice %11 {offsets = [0, 0], sizes = [1, 16], strides = [1, 1]} : vector<2x16xf32> to vector<1x16xf32>
    %40 = vector.broadcast %39 : vector<1x16xf32> to vector<3x16xf32>
    %41 = arith.mulf %14, %40 : vector<3x16xf32>
    %cst_29 = arith.constant dense<0.000000e+00> : vector<3x256xf32>
    %42 = tpu.matmul %41, %38, %cst_29 {dimension_numbers = #tpu.dot_dimension_numbers<[1], [0], [0], [1], [0, 0, 1, 1], [], []>} : vector<3x16xf32>, vector<16x256xf32>, vector<3x256xf32> -> vector<3x256xf32>
    %43 = vector.broadcast %15 : vector<3x1xf32> to vector<3x256xf32>
    %44 = arith.addf %42, %43 : vector<3x256xf32>
    %c0_30 = arith.constant 0 : index
    %c0_31 = arith.constant 0 : index
    %45 = vector.load %arg12[%c0_30, %c0_31] : memref<256x64xf32, #tpu.memory_space<vmem>>, vector<256x64xf32>
    %cst_32 = arith.constant dense<0.000000e+00> : vector<3x64xf32>
    %46 = tpu.matmul %44, %45, %cst_32 {dimension_numbers = #tpu.dot_dimension_numbers<[1], [0], [0], [1], [0, 0, 1, 1], [], []>} : vector<3x256xf32>, vector<256x64xf32>, vector<3x64xf32> -> vector<3x64xf32>
    %c0_33 = arith.constant 0 : index
    %c0_34 = arith.constant 0 : index
    %c0_35 = arith.constant 0 : index
    %47 = vector.load %arg13[%c0_33, %c0_34, %c0_35] : memref<2x3x64xf32, #tpu.memory_space<vmem>>, vector<1x3x64xf32>
    %48 = vector.shape_cast %47 : vector<1x3x64xf32> to vector<3x64xf32>
    %49 = vector.shape_cast %46 : vector<3x64xf32> to vector<1x3x64xf32>
    tpu.vector_store %arg13[%c0_33, %c0_34, %c0_35], %49 {strides = array<i32>} : memref<2x3x64xf32, #tpu.memory_space<vmem>>, vector<1x3x64xf32>,
    %50 = vector.extract_strided_slice %5 {offsets = [1, 0], sizes = [1, 144], strides = [1, 1]} : vector<2x144xf32> to vector<1x144xf32>
    %c1 = arith.constant 1 : index
    %c0_36 = arith.constant 0 : index
    %c0_37 = arith.constant 0 : index
    %51 = vector.load %arg3[%c1, %c0_36, %c0_37] : memref<2x256x144xf32, #tpu.memory_space<vmem>>, vector<1x256x144xf32>
    %52 = vector.shape_cast %51 : vector<1x256x144xf32> to vector<256x144xf32>
    %53 = vector.broadcast %50 : vector<1x144xf32> to vector<16x144xf32>
    %54 = arith.mulf %12, %53 : vector<16x144xf32>
    %55 = arith.mulf %54, %54 : vector<16x144xf32>
    %cst_38 = arith.constant dense<0.000000e+00> : vector<16xf32>
    %56 = vector.multi_reduction <add>, %55, %cst_38 [1] : vector<16x144xf32> to vector<16xf32>
    %57 = vector.shape_cast %56 : vector<16xf32> to vector<16x1xf32>
    %cst_39 = arith.constant 9.99999993E-9 : f32
    %58 = vector.broadcast %cst_39 : f32 to vector<16x1xf32>
    %59 = arith.addf %57, %58 : vector<16x1xf32>
    %60 = math.rsqrt %59 : vector<16x1xf32>
    %61 = vector.broadcast %60 : vector<16x1xf32> to vector<16x144xf32>
    %62 = arith.mulf %54, %61 : vector<16x144xf32>
    %cst_40 = arith.constant dense<0.000000e+00> : vector<16x256xf32>
    %63 = tpu.matmul %62, %52, %cst_40 {dimension_numbers = #tpu.dot_dimension_numbers<[1], [1], [0], [0], [0, 0, 1, 0], [], []>} : vector<16x144xf32>, vector<256x144xf32>, vector<16x256xf32> -> vector<16x256xf32>
    %64 = vector.broadcast %13 : vector<16x1xf32> to vector<16x256xf32>
    %65 = arith.addf %63, %64 : vector<16x256xf32>
    %cst_41 = arith.constant 0.000000e+00 : f32
    %66 = vector.broadcast %cst_41 : f32 to vector<16x256xf32>
    %67 = arith.cmpf oge, %65, %66 : vector<16x256xf32>
    %cst_42 = arith.constant 2.000000e-01 : f32
    %68 = vector.broadcast %cst_42 : f32 to vector<16x256xf32>
    %69 = arith.mulf %68, %65 : vector<16x256xf32>
    %70 = arith.select %67, %65, %69 : vector<16x256xi1>, vector<16x256xf32>
    %cst_43 = arith.constant 1.41421354 : f32
    %71 = vector.broadcast %cst_43 : f32 to vector<16x256xf32>
    %72 = arith.mulf %70, %71 : vector<16x256xf32>
    %73 = vector.extract_strided_slice %11 {offsets = [1, 0], sizes = [1, 16], strides = [1, 1]} : vector<2x16xf32> to vector<1x16xf32>
    %74 = vector.broadcast %73 : vector<1x16xf32> to vector<3x16xf32>
    %75 = arith.mulf %14, %74 : vector<3x16xf32>
    %cst_44 = arith.constant dense<0.000000e+00> : vector<3x256xf32>
    %76 = tpu.matmul %75, %72, %cst_44 {dimension_numbers = #tpu.dot_dimension_numbers<[1], [0], [0], [1], [0, 0, 1, 1], [], []>} : vector<3x16xf32>, vector<16x256xf32>, vector<3x256xf32> -> vector<3x256xf32>
    %77 = vector.broadcast %15 : vector<3x1xf32> to vector<3x256xf32>
    %78 = arith.addf %76, %77 : vector<3x256xf32>
    %c0_45 = arith.constant 0 : index
    %c0_46 = arith.constant 0 : index
    %79 = vector.load %arg12[%c0_45, %c0_46] : memref<256x64xf32, #tpu.memory_space<vmem>>, vector<256x64xf32>
    %cst_47 = arith.constant dense<0.000000e+00> : vector<3x64xf32>
    %80 = tpu.matmul %78, %79, %cst_47 {dimension_numbers = #tpu.dot_dimension_numbers<[1], [0], [0], [1], [0, 0, 1, 1], [], []>} : vector<3x256xf32>, vector<256x64xf32>, vector<3x64xf32> -> vector<3x64xf32>
    %c1_48 = arith.constant 1 : index
    %c0_49 = arith.constant 0 : index
    %c0_50 = arith.constant 0 : index
    %81 = vector.load %arg13[%c1_48, %c0_49, %c0_50] : memref<2x3x64xf32, #tpu.memory_space<vmem>>, vector<1x3x64xf32>
    %82 = vector.shape_cast %81 : vector<1x3x64xf32> to vector<3x64xf32>
    %83 = vector.shape_cast %80 : vector<3x64xf32> to vector<1x3x64xf32>
    tpu.vector_store %arg13[%c1_48, %c0_49, %c0_50], %83 {strides = array<i32>} : memref<2x3x64xf32, #tpu.memory_space<vmem>>, vector<1x3x64xf32>,
    return
  }
  func.func @transform_0(%arg0: i32) -> (i32, i32) {
    %c0_i32 = arith.constant 0 : i32
    %c0_i32_0 = arith.constant 0 : i32
    %c0_i32_1 = arith.constant 0 : i32
    return %c0_i32, %c0_i32_0 : i32, i32
  }
  func.func @transform_1(%arg0: i32) -> (i32, i32) {
    %c0_i32 = arith.constant 0 : i32
    %c0_i32_0 = arith.constant 0 : i32
    %c0_i32_1 = arith.constant 0 : i32
    return %c0_i32, %c0_i32_0 : i32, i32
  }
  func.func @transform_2(%arg0: i32) -> (i32, i32, i32) {
    %c0_i32 = arith.constant 0 : i32
    %c0_i32_0 = arith.constant 0 : i32
    %c0_i32_1 = arith.constant 0 : i32
    %c0_i32_2 = arith.constant 0 : i32
    return %c0_i32, %c0_i32_0, %c0_i32_1 : i32, i32, i32
  }
  func.func @transform_3(%arg0: i32) -> (i32, i32) {
    %c0_i32 = arith.constant 0 : i32
    %c0_i32_0 = arith.constant 0 : i32
    %c0_i32_1 = arith.constant 0 : i32
    return %c0_i32, %c0_i32_0 : i32, i32
  }
  func.func @transform_4(%arg0: i32) -> (i32, i32) {
    %c0_i32 = arith.constant 0 : i32
    %c0_i32_0 = arith.constant 0 : i32
    %c0_i32_1 = arith.constant 0 : i32
    return %c0_i32, %c0_i32_0 : i32, i32
  }
  func.func @transform_5(%arg0: i32) -> (i32, i32) {
    %c0_i32 = arith.constant 0 : i32
    %c0_i32_0 = arith.constant 0 : i32
    %c0_i32_1 = arith.constant 0 : i32
    return %c0_i32, %c0_i32_0 : i32, i32
  }
  func.func @transform_6(%arg0: i32) -> (i32, i32) {
    %c0_i32 = arith.constant 0 : i32
    %c0_i32_0 = arith.constant 0 : i32
    %c0_i32_1 = arith.constant 0 : i32
    return %c0_i32, %c0_i32_0 : i32, i32
  }
  func.func @transform_7(%arg0: i32) -> (i32, i32) {
    %c0_i32 = arith.constant 0 : i32
    %c0_i32_0 = arith.constant 0 : i32
    %c0_i32_1 = arith.constant 0 : i32
    return %c0_i32, %c0_i32_0 : i32, i32
  }
  func.func @transform_8(%arg0: i32) -> (i32, i32) {
    %c0_i32 = arith.constant 0 : i32
    %c0_i32_0 = arith.constant 0 : i32
    %c0_i32_1 = arith.constant 0 : i32
    return %c0_i32, %c0_i32_0 : i32, i32
  }
  func.func @transform_9(%arg0: i32) -> (i32, i32) {
    %c0_i32 = arith.constant 0 : i32
    %c0_i32_0 = arith.constant 0 : i32
    %c0_i32_1 = arith.constant 0 : i32
    return %c0_i32, %c0_i32_0 : i32, i32
  }
  func.func @transform_10(%arg0: i32) -> (i32, i32) {
    %c0_i32 = arith.constant 0 : i32
    %c0_i32_0 = arith.constant 0 : i32
    %c0_i32_1 = arith.constant 0 : i32
    return %c0_i32, %c0_i32_0 : i32, i32
  }
  func.func @transform_11(%arg0: i32) -> (i32, i32) {
    %c0_i32 = arith.constant 0 : i32
    %c0_i32_0 = arith.constant 0 : i32
    %c0_i32_1 = arith.constant 0 : i32
    return %c0_i32, %c0_i32_0 : i32, i32
  }
  func.func @transform_12(%arg0: i32) -> (i32, i32, i32) {
    %c0_i32 = arith.constant 0 : i32
    %c0_i32_0 = arith.constant 0 : i32
    %c0_i32_1 = arith.constant 0 : i32
    %c0_i32_2 = arith.constant 0 : i32
    return %c0_i32, %c0_i32_0, %c0_i32_1 : i32, i32, i32
  }
}

</mosaic_0001>

<llo_original>
// kernel: psp_forward.5
$region0: #{psp_forward.5}
  #allocation0 [shape = 'u32[]', space=smem, size = 0x4, offset = 0x4, fixed_abs, tag = 'smem constant byte address 0x4 - core index']
  #allocation1 [shape = 'u32[144,128]{1,0:T(1,128)}', space=vmem, size = 0x12000, scoped, tag = 'internal scratch']
  %s0 = inlined_call_operand.vmem [shape: f32[512,27], index: 0, kind: input, shape index: {}]
  %s1 = inlined_call_operand.vmem [shape: f32[27,16], index: 1, kind: input, shape index: {}]
  %s2 = inlined_call_operand.vmem [shape: f32[1,16], index: 2, kind: input, shape index: {}]
  %s3 = inlined_call_operand.vmem [shape: f32[2,512], index: 3, kind: input, shape index: {}]
  %s4 = inlined_call_operand.vmem [shape: f32[16,192], index: 4, kind: input, shape index: {}]
  %s5 = inlined_call_operand.vmem [shape: f32[1,192], index: 5, kind: input, shape index: {}]
  %s6 = inlined_call_operand.vmem [shape: f32[1,192], index: 6, kind: input, shape index: {}]
  %s7 = inlined_call_operand.vmem [shape: f32[16,144], index: 7, kind: input, shape index: {}]
  %s8 = inlined_call_operand.vmem [shape: f32[32,144], index: 8, kind: input, shape index: {}]
  %s9 = inlined_call_operand.vmem [shape: f32[1,144], index: 9, kind: input, shape index: {}]
  %s10 = inlined_call_operand.vmem [shape: f32[16,144], index: 10, kind: input, shape index: {}]
  %s11 = inlined_call_operand.vmem [shape: f32[16,1], index: 11, kind: input, shape index: {}]
  %s12 = inlined_call_operand.vmem [shape: f32[2,192], index: 12, kind: output, shape index: {0}]
  %s13 = inlined_call_operand.vmem [shape: f32[2,16,16], index: 13, kind: output, shape index: {1}]
  %14 = xla_tuple %s12, %s13
  %s15 = sld [smem:[#allocation0]]
  $region66: #{psp_forward.5} parent=0
    _
  %s17 = ssub.s32 1, %s15
  %s18 = scalar_select 0, %s17, %s15
  // Predicated region
  $region2: #{psp_forward.5} parent=0 // pred_check
    _
  $region3: #{psp_forward.5} parent=0 // pred_check_branch
    %20 = sbr.rel (0) target = $region5
  $region4: #{psp_forward.5} parent=0 // pred_region
    _
  $region5: #{psp_forward.5} parent=0 // pred_fallthru
    _
  // Predicated region
  $region6: #{psp_forward.5} parent=0 // pred_check
    _
  $region7: #{psp_forward.5} parent=0 // pred_check_branch
    %22 = sbr.rel (0) target = $region9
  $region8: #{psp_forward.5} parent=0 // pred_region
    _
  $region9: #{psp_forward.5} parent=0 // pred_fallthru
    _
  // Predicated region
  $region10: #{psp_forward.5} parent=0 // pred_check
    _
  $region11: #{psp_forward.5} parent=0 // pred_check_branch
    %24 = sbr.rel (0) target = $region13
  $region12: #{psp_forward.5} parent=0 // pred_region
    _
  $region13: #{psp_forward.5} parent=0 // pred_fallthru
    _
  // Predicated region
  $region14: #{psp_forward.5} parent=0 // pred_check
    _
  $region15: #{psp_forward.5} parent=0 // pred_check_branch
    %26 = sbr.rel (0) target = $region17
  $region16: #{psp_forward.5} parent=0 // pred_region
    _
  $region17: #{psp_forward.5} parent=0 // pred_fallthru
    _
  // Predicated region
  $region18: #{psp_forward.5} parent=0 // pred_check
    _
  $region19: #{psp_forward.5} parent=0 // pred_check_branch
    %28 = sbr.rel (0) target = $region21
  $region20: #{psp_forward.5} parent=0 // pred_region
    _
  $region21: #{psp_forward.5} parent=0 // pred_fallthru
    _
  // Predicated region
  $region22: #{psp_forward.5} parent=0 // pred_check
    _
  $region23: #{psp_forward.5} parent=0 // pred_check_branch
    %30 = sbr.rel (0) target = $region25
  $region24: #{psp_forward.5} parent=0 // pred_region
    _
  $region25: #{psp_forward.5} parent=0 // pred_fallthru
    _
  // Predicated region
  $region26: #{psp_forward.5} parent=0 // pred_check
    _
  $region27: #{psp_forward.5} parent=0 // pred_check_branch
    %32 = sbr.rel (0) target = $region29
  $region28: #{psp_forward.5} parent=0 // pred_region
    _
  $region29: #{psp_forward.5} parent=0 // pred_fallthru
    _
  // Predicated region
  $region30: #{psp_forward.5} parent=0 // pred_check
    _
  $region31: #{psp_forward.5} parent=0 // pred_check_branch
    %34 = sbr.rel (0) target = $region33
  $region32: #{psp_forward.5} parent=0 // pred_region
    _
  $region33: #{psp_forward.5} parent=0 // pred_fallthru
    _
  // Predicated region
  $region34: #{psp_forward.5} parent=0 // pred_check
    _
  $region35: #{psp_forward.5} parent=0 // pred_check_branch
    %36 = sbr.rel (0) target = $region37
  $region36: #{psp_forward.5} parent=0 // pred_region
    _
  $region37: #{psp_forward.5} parent=0 // pred_fallthru
    _
  // Predicated region
  $region38: #{psp_forward.5} parent=0 // pred_check
    _
  $region39: #{psp_forward.5} parent=0 // pred_check_branch
    %38 = sbr.rel (0) target = $region41
  $region40: #{psp_forward.5} parent=0 // pred_region
    _
  $region41: #{psp_forward.5} parent=0 // pred_fallthru
    _
  // Predicated region
  $region42: #{psp_forward.5} parent=0 // pred_check
    _
  $region43: #{psp_forward.5} parent=0 // pred_check_branch
    %40 = sbr.rel (0) target = $region45
  $region44: #{psp_forward.5} parent=0 // pred_region
    _
  $region45: #{psp_forward.5} parent=0 // pred_fallthru
    _
  // Predicated region
  $region46: #{psp_forward.5} parent=0 // pred_check
    _
  $region47: #{psp_forward.5} parent=0 // pred_check_branch
    %42 = sbr.rel (0) target = $region49
  $region48: #{psp_forward.5} parent=0 // pred_region
    _
  $region49: #{psp_forward.5} parent=0 // pred_fallthru
    _
  %v43 = vld [vmem:[%s0] sm:$0xff]
  %v44 = vld [vmem:[%s0 + $0x8] sm:$0xff]
  %v45 = vld [vmem:[%s0 + $0x10] sm:$0xff]
  %v46 = vld [vmem:[%s0 + $0x18] sm:$0xff]
  %v47 = vld [vmem:[%s0 + $0x20] sm:$0xff]
  %v48 = vld [vmem:[%s0 + $0x28] sm:$0xff]
  %v49 = vld [vmem:[%s0 + $0x30] sm:$0xff]
  %v50 = vld [vmem:[%s0 + $0x38] sm:$0xff]
  %v51 = vld [vmem:[%s0 + $0x40] sm:$0xff]
  %v52 = vld [vmem:[%s0 + $0x48] sm:$0xff]
  %v53 = vld [vmem:[%s0 + $0x50] sm:$0xff]
  %v54 = vld [vmem:[%s0 + $0x58] sm:$0xff]
  %v55 = vld [vmem:[%s0 + $0x60] sm:$0xff]
  %v56 = vld [vmem:[%s0 + $0x68] sm:$0xff]
  %v57 = vld [vmem:[%s0 + $0x70] sm:$0xff]
  %v58 = vld [vmem:[%s0 + $0x78] sm:$0xff]
  %v59 = vld [vmem:[%s0 + $0x80] sm:$0xff]
  %v60 = vld [vmem:[%s0 + $0x88] sm:$0xff]
  %v61 = vld [vmem:[%s0 + $0x90] sm:$0xff]
  %v62 = vld [vmem:[%s0 + $0x98] sm:$0xff]
  %v63 = vld [vmem:[%s0 + $0xa0] sm:$0xff]
  %v64 = vld [vmem:[%s0 + $0xa8] sm:$0xff]
  %v65 = vld [vmem:[%s0 + $0xb0] sm:$0xff]
  %v66 = vld [vmem:[%s0 + $0xb8] sm:$0xff]
  %v67 = vld [vmem:[%s0 + $0xc0] sm:$0xff]
  %v68 = vld [vmem:[%s0 + $0xc8] sm:$0xff]
  %v69 = vld [vmem:[%s0 + $0xd0] sm:$0xff]
  %v70 = vld [vmem:[%s0 + $0xd8] sm:$0xff]
  %v71 = vld [vmem:[%s0 + $0xe0] sm:$0xff]
  %v72 = vld [vmem:[%s0 + $0xe8] sm:$0xff]
  %v73 = vld [vmem:[%s0 + $0xf0] sm:$0xff]
  %v74 = vld [vmem:[%s0 + $0xf8] sm:$0xff]
  %v75 = vld [vmem:[%s0 + $0x100] sm:$0xff]
  %v76 = vld [vmem:[%s0 + $0x108] sm:$0xff]
  %v77 = vld [vmem:[%s0 + $0x110] sm:$0xff]
  %v78 = vld [vmem:[%s0 + $0x118] sm:$0xff]
  %v79 = vld [vmem:[%s0 + $0x120] sm:$0xff]
  %v80 = vld [vmem:[%s0 + $0x128] sm:$0xff]
  %v81 = vld [vmem:[%s0 + $0x130] sm:$0xff]
  %v82 = vld [vmem:[%s0 + $0x138] sm:$0xff]
  %v83 = vld [vmem:[%s0 + $0x140] sm:$0xff]
  %v84 = vld [vmem:[%s0 + $0x148] sm:$0xff]
  %v85 = vld [vmem:[%s0 + $0x150] sm:$0xff]
  %v86 = vld [vmem:[%s0 + $0x158] sm:$0xff]
  %v87 = vld [vmem:[%s0 + $0x160] sm:$0xff]
  %v88 = vld [vmem:[%s0 + $0x168] sm:$0xff]
  %v89 = vld [vmem:[%s0 + $0x170] sm:$0xff]
  %v90 = vld [vmem:[%s0 + $0x178] sm:$0xff]
  %v91 = vld [vmem:[%s0 + $0x180] sm:$0xff]
  %v92 = vld [vmem:[%s0 + $0x188] sm:$0xff]
  %v93 = vld [vmem:[%s0 + $0x190] sm:$0xff]
  %v94 = vld [vmem:[%s0 + $0x198] sm:$0xff]
  %v95 = vld [vmem:[%s0 + $0x1a0] sm:$0xff]
  %v96 = vld [vmem:[%s0 + $0x1a8] sm:$0xff]
  %v97 = vld [vmem:[%s0 + $0x1b0] sm:$0xff]
  %v98 = vld [vmem:[%s0 + $0x1b8] sm:$0xff]
  %v99 = vld [vmem:[%s0 + $0x1c0] sm:$0xff]
  %v100 = vld [vmem:[%s0 + $0x1c8] sm:$0xff]
  %v101 = vld [vmem:[%s0 + $0x1d0] sm:$0xff]
  %v102 = vld [vmem:[%s0 + $0x1d8] sm:$0xff]
  %v103 = vld [vmem:[%s0 + $0x1e0] sm:$0xff]
  %v104 = vld [vmem:[%s0 + $0x1e8] sm:$0xff]
  %v105 = vld [vmem:[%s0 + $0x1f0] sm:$0xff]
  %v106 = vld [vmem:[%s0 + $0x1f8] sm:$0xff]
  %v107 = vld [vmem:[%s1] sm:$0xff]
  %v108 = vld [vmem:[%s1 + $0x8] sm:$0xff]
  %v109 = vld [vmem:[%s1 + $0x10] sm:$0xff]
  %v110 = vld [vmem:[%s1 + $0x18] sm:$0x7]
  %v111 = vld [vmem:[%s2] sm:$0x1]
  %v113 = vlaneseq
  %v114 = vshrl.u32 %v113, 7
  %v115 = vsub.s32 0, %v114
  %v116 = vrot.slane %v111, %v115
  %vm118 = vcmask 220160
  %v120 = vsel %vm118, %v43, 0
  %v123 = vsel %vm118, %v44, 0
  %v126 = vsel %vm118, %v45, 0
  %v129 = vsel %vm118, %v46, 0
  %v132 = vsel %vm118, %v47, 0
  %v135 = vsel %vm118, %v48, 0
  %v138 = vsel %vm118, %v49, 0
  %v141 = vsel %vm118, %v50, 0
  %v144 = vsel %vm118, %v51, 0
  %v147 = vsel %vm118, %v52, 0
  %v150 = vsel %vm118, %v53, 0
  %v153 = vsel %vm118, %v54, 0
  %v156 = vsel %vm118, %v55, 0
  %v159 = vsel %vm118, %v56, 0
  %v162 = vsel %vm118, %v57, 0
  %v165 = vsel %vm118, %v58, 0
  %v168 = vsel %vm118, %v59, 0
  %v171 = vsel %vm118, %v60, 0
  %v174 = vsel %vm118, %v61, 0
  %v177 = vsel %vm118, %v62, 0
  %v180 = vsel %vm118, %v63, 0
  %v183 = vsel %vm118, %v64, 0
  %v186 = vsel %vm118, %v65, 0
  %v189 = vsel %vm118, %v66, 0
  %v192 = vsel %vm118, %v67, 0
  %v195 = vsel %vm118, %v68, 0
  %v198 = vsel %vm118, %v69, 0
  %v201 = vsel %vm118, %v70, 0
  %v204 = vsel %vm118, %v71, 0
  %v207 = vsel %vm118, %v72, 0
  %v210 = vsel %vm118, %v73, 0
  %v213 = vsel %vm118, %v74, 0
  %v216 = vsel %vm118, %v75, 0
  %v219 = vsel %vm118, %v76, 0
  %v222 = vsel %vm118, %v77, 0
  %v225 = vsel %vm118, %v78, 0
  %v228 = vsel %vm118, %v79, 0
  %v231 = vsel %vm118, %v80, 0
  %v234 = vsel %vm118, %v81, 0
  %v237 = vsel %vm118, %v82, 0
  %v240 = vsel %vm118, %v83, 0
  %v243 = vsel %vm118, %v84, 0
  %v246 = vsel %vm118, %v85, 0
  %v249 = vsel %vm118, %v86, 0
  %v252 = vsel %vm118, %v87, 0
  %v255 = vsel %vm118, %v88, 0
  %v258 = vsel %vm118, %v89, 0
  %v261 = vsel %vm118, %v90, 0
  %v264 = vsel %vm118, %v91, 0
  %v267 = vsel %vm118, %v92, 0
  %v270 = vsel %vm118, %v93, 0
  %v273 = vsel %vm118, %v94, 0
  %v276 = vsel %vm118, %v95, 0
  %v279 = vsel %vm118, %v96, 0
  %v282 = vsel %vm118, %v97, 0
  %v285 = vsel %vm118, %v98, 0
  %v288 = vsel %vm118, %v99, 0
  %v291 = vsel %vm118, %v100, 0
  %v294 = vsel %vm118, %v101, 0
  %v297 = vsel %vm118, %v102, 0
  %v300 = vsel %vm118, %v103, 0
  %v303 = vsel %vm118, %v104, 0
  %v306 = vsel %vm118, %v105, 0
  %v309 = vsel %vm118, %v106, 0
  %vm311 = vcmask 1042432
  %v313 = vsel %vm311, %v110, 0
  %315 = vmatprep.subr.mxu0 0.0
  %316 = vmatpush1.msra.mxu0 %v107
  %317 = vmatprep.subr.mxu0 0.0
  %318 = vmatpush1.msra.mxu0 %v108
  %319 = vmatprep.subr.mxu0 0.0
  %320 = vmatpush1.msra.mxu0 %v109
  %321 = vmatprep.subr.mxu0 0.0
  %322 = vmatpush1.msra.mxu0 %v313
  %323 = vmatprep.subr.mxu0 0.0
  %324 = vmatpush1.msra.mxu0 0.0
  %325 = vmatprep.subr.mxu0 0.0
  %326 = vmatpush1.msra.mxu0 0.0
  %327 = vmatprep.subr.mxu0 0.0
  %328 = vmatpush1.msra.mxu0 0.0
  %329 = vmatprep.subr.mxu0 0.0
  %330 = vmatpush1.msra.mxu0 0.0
  %331 = vmatprep.subr.mxu0 0.0
  %332 = vmatpush1.msra.mxu0 0.0
  %333 = vmatprep.subr.mxu0 0.0
  %334 = vmatpush1.msra.mxu0 0.0
  %335 = vmatprep.subr.mxu0 0.0
  %336 = vmatpush1.msra.mxu0 0.0
  %337 = vmatprep.subr.mxu0 0.0
  %338 = vmatpush1.msra.mxu0 0.0
  %339 = vmatprep.subr.mxu0 0.0
  %340 = vmatpush1.msra.mxu0 0.0
  %341 = vmatprep.subr.mxu0 0.0
  %342 = vmatpush1.msra.mxu0 0.0
  %343 = vmatprep.subr.mxu0 0.0
  %344 = vmatpush1.msra.mxu0 0.0
  %345 = vmatprep.subr.mxu0 0.0
  %346 = vmatpush1.msra.mxu0 0.0
  %347 = vmatprep.subr.mxu0 0.0
  %348 = vmatpush1.msra.mxu0 0.0
  %349 = vmatprep.subr.mxu0 0.0
  %350 = vmatpush1.msra.mxu0 0.0
  %351 = vmatprep.subr.mxu0 0.0
  %352 = vmatpush1.msra.mxu0 0.0
  %353 = vmatprep.subr.mxu0 0.0
  %354 = vmatpush1.msra.mxu0 0.0
  %355 = vmatprep.subr.mxu0 0.0
  %356 = vmatpush1.msra.mxu0 0.0
  %357 = vmatprep.subr.mxu0 0.0
  %358 = vmatpush1.msra.mxu0 0.0
  %359 = vmatprep.subr.mxu0 0.0
  %360 = vmatpush1.msra.mxu0 0.0
  %361 = vmatprep.subr.mxu0 0.0
  %362 = vmatpush1.msra.mxu0 0.0
  %363 = vmatprep.subr.mxu0 0.0
  %364 = vmatpush1.msra.mxu0 0.0
  %365 = vmatprep.subr.mxu0 0.0
  %366 = vmatpush1.msra.mxu0 0.0
  %367 = vmatprep.subr.mxu0 0.0
  %368 = vmatpush1.msra.mxu0 0.0
  %369 = vmatprep.subr.mxu0 0.0
  %370 = vmatpush1.msra.mxu0 0.0
  %371 = vmatprep.subr.mxu0 0.0
  %372 = vmatpush1.msra.mxu0 0.0
  %373 = vmatprep.subr.mxu0 0.0
  %374 = vmatpush1.msra.mxu0 0.0
  %375 = vmatprep.subr.mxu0 0.0
  %376 = vmatpush1.msra.mxu0 0.0
  %377 = vmatprep.subr.mxu0 0.0
  %378 = vmatpush1.msra.mxu0 0.0
  %379 = vmatprep.mubr.f32.mxu0 0.0
  %380 = vmatmul.mubr.f32.gmra.mrb[0].mxu0 %v120
  %v381 = vpop.f32.mrb[0].mxu0
  %v382 = vadd.f32 %v116, %v381
  %v383 = vpop.f32.mrb[0].mxu0
  %384 = vmatprep.mubr.f32.mxu0 0.0
  %385 = vmatmul.mubr.f32.gmra.mrb[0].mxu0 %v123
  %v386 = vpop.f32.mrb[0].mxu0
  %v387 = vadd.f32 %v116, %v386
  %v388 = vpop.f32.mrb[0].mxu0
  %389 = vmatprep.mubr.f32.mxu0 0.0
  %390 = vmatmul.mubr.f32.gmra.mrb[0].mxu0 %v126
  %v391 = vpop.f32.mrb[0].mxu0
  %v392 = vadd.f32 %v116, %v391
  %v393 = vpop.f32.mrb[0].mxu0
  %394 = vmatprep.mubr.f32.mxu0 0.0
  %395 = vmatmul.mubr.f32.gmra.mrb[0].mxu0 %v129
  %v396 = vpop.f32.mrb[0].mxu0
  %v397 = vadd.f32 %v116, %v396
  %v398 = vpop.f32.mrb[0].mxu0
  %399 = vmatprep.mubr.f32.mxu0 0.0
  %400 = vmatmul.mubr.f32.gmra.mrb[0].mxu0 %v132
  %v401 = vpop.f32.mrb[0].mxu0
  %v402 = vadd.f32 %v116, %v401
  %v403 = vpop.f32.mrb[0].mxu0
  %404 = vmatprep.mubr.f32.mxu0 0.0
  %405 = vmatmul.mubr.f32.gmra.mrb[0].mxu0 %v135
  %v406 = vpop.f32.mrb[0].mxu0
  %v407 = vadd.f32 %v116, %v406
  %v408 = vpop.f32.mrb[0].mxu0
  %409 = vmatprep.mubr.f32.mxu0 0.0
  %410 = vmatmul.mubr.f32.gmra.mrb[0].mxu0 %v138
  %v411 = vpop.f32.mrb[0].mxu0
  %v412 = vadd.f32 %v116, %v411
  %v413 = vpop.f32.mrb[0].mxu0
  %414 = vmatprep.mubr.f32.mxu0 0.0
  %415 = vmatmul.mubr.f32.gmra.mrb[0].mxu0 %v141
  %v416 = vpop.f32.mrb[0].mxu0
  %v417 = vadd.f32 %v116, %v416
  %v418 = vpop.f32.mrb[0].mxu0
  %419 = vmatprep.mubr.f32.mxu0 0.0
  %420 = vmatmul.mubr.f32.gmra.mrb[0].mxu0 %v144
  %v421 = vpop.f32.mrb[0].mxu0
  %v422 = vadd.f32 %v116, %v421
  %v423 = vpop.f32.mrb[0].mxu0
  %424 = vmatprep.mubr.f32.mxu0 0.0
  %425 = vmatmul.mubr.f32.gmra.mrb[0].mxu0 %v147
  %v426 = vpop.f32.mrb[0].mxu0
  %v427 = vadd.f32 %v116, %v426
  %v428 = vpop.f32.mrb[0].mxu0
  %429 = vmatprep.mubr.f32.mxu0 0.0
  %430 = vmatmul.mubr.f32.gmra.mrb[0].mxu0 %v150
  %v431 = vpop.f32.mrb[0].mxu0
  %v432 = vadd.f32 %v116, %v431
  %v433 = vpop.f32.mrb[0].mxu0
  %434 = vmatprep.mubr.f32.mxu0 0.0
  %435 = vmatmul.mubr.f32.gmra.mrb[0].mxu0 %v153
  %v436 = vpop.f32.mrb[0].mxu0
  %v437 = vadd.f32 %v116, %v436
  %v438 = vpop.f32.mrb[0].mxu0
  %439 = vmatprep.mubr.f32.mxu0 0.0
  %440 = vmatmul.mubr.f32.gmra.mrb[0].mxu0 %v156
  %v441 = vpop.f32.mrb[0].mxu0
  %v442 = vadd.f32 %v116, %v441
  %v443 = vpop.f32.mrb[0].mxu0
  %444 = vmatprep.mubr.f32.mxu0 0.0
  %445 = vmatmul.mubr.f32.gmra.mrb[0].mxu0 %v159
  %v446 = vpop.f32.mrb[0].mxu0
  %v447 = vadd.f32 %v116, %v446
  %v448 = vpop.f32.mrb[0].mxu0
  %449 = vmatprep.mubr.f32.mxu0 0.0
  %450 = vmatmul.mubr.f32.gmra.mrb[0].mxu0 %v162
  %v451 = vpop.f32.mrb[0].mxu0
  %v452 = vadd.f32 %v116, %v451
  %v453 = vpop.f32.mrb[0].mxu0
  %454 = vmatprep.mubr.f32.mxu0 0.0
  %455 = vmatmul.mubr.f32.gmra.mrb[0].mxu0 %v165
  %v456 = vpop.f32.mrb[0].mxu0
  %v457 = vadd.f32 %v116, %v456
  %v458 = vpop.f32.mrb[0].mxu0
  %459 = vmatprep.mubr.f32.mxu0 0.0
  %460 = vmatmul.mubr.f32.gmra.mrb[0].mxu0 %v168
  %v461 = vpop.f32.mrb[0].mxu0
  %v462 = vadd.f32 %v116, %v461
  %v463 = vpop.f32.mrb[0].mxu0
  %464 = vmatprep.mubr.f32.mxu0 0.0
  %465 = vmatmul.mubr.f32.gmra.mrb[0].mxu0 %v171
  %v466 = vpop.f32.mrb[0].mxu0
  %v467 = vadd.f32 %v116, %v466
  %v468 = vpop.f32.mrb[0].mxu0
  %469 = vmatprep.mubr.f32.mxu0 0.0
  %470 = vmatmul.mubr.f32.gmra.mrb[0].mxu0 %v174
  %v471 = vpop.f32.mrb[0].mxu0
  %v472 = vadd.f32 %v116, %v471
  %v473 = vpop.f32.mrb[0].mxu0
  %474 = vmatprep.mubr.f32.mxu0 0.0
  %475 = vmatmul.mubr.f32.gmra.mrb[0].mxu0 %v177
  %v476 = vpop.f32.mrb[0].mxu0
  %v477 = vadd.f32 %v116, %v476
  %v478 = vpop.f32.mrb[0].mxu0
  %479 = vmatprep.mubr.f32.mxu0 0.0
  %480 = vmatmul.mubr.f32.gmra.mrb[0].mxu0 %v180
  %v481 = vpop.f32.mrb[0].mxu0
  %v482 = vadd.f32 %v116, %v481
  %v483 = vpop.f32.mrb[0].mxu0
  %484 = vmatprep.mubr.f32.mxu0 0.0
  %485 = vmatmul.mubr.f32.gmra.mrb[0].mxu0 %v183
  %v486 = vpop.f32.mrb[0].mxu0
  %v487 = vadd.f32 %v116, %v486
  %v488 = vpop.f32.mrb[0].mxu0
  %489 = vmatprep.mubr.f32.mxu0 0.0
  %490 = vmatmul.mubr.f32.gmra.mrb[0].mxu0 %v186
  %v491 = vpop.f32.mrb[0].mxu0
  %v492 = vadd.f32 %v116, %v491
  %v493 = vpop.f32.mrb[0].mxu0
  %494 = vmatprep.mubr.f32.mxu0 0.0
  %495 = vmatmul.mubr.f32.gmra.mrb[0].mxu0 %v189
  %v496 = vpop.f32.mrb[0].mxu0
  %v497 = vadd.f32 %v116, %v496
  %v498 = vpop.f32.mrb[0].mxu0
  %499 = vmatprep.mubr.f32.mxu0 0.0
  %500 = vmatmul.mubr.f32.gmra.mrb[0].mxu0 %v192
  %v501 = vpop.f32.mrb[0].mxu0
  %v502 = vadd.f32 %v116, %v501
  %v503 = vpop.f32.mrb[0].mxu0
  %504 = vmatprep.mubr.f32.mxu0 0.0
  %505 = vmatmul.mubr.f32.gmra.mrb[0].mxu0 %v195
  %v506 = vpop.f32.mrb[0].mxu0
  %v507 = vadd.f32 %v116, %v506
  %v508 = vpop.f32.mrb[0].mxu0
  %509 = vmatprep.mubr.f32.mxu0 0.0
  %510 = vmatmul.mubr.f32.gmra.mrb[0].mxu0 %v198
  %v511 = vpop.f32.mrb[0].mxu0
  %v512 = vadd.f32 %v116, %v511
  %v513 = vpop.f32.mrb[0].mxu0
  %514 = vmatprep.mubr.f32.mxu0 0.0
  %515 = vmatmul.mubr.f32.gmra.mrb[0].mxu0 %v201
  %v516 = vpop.f32.mrb[0].mxu0
  %v517 = vadd.f32 %v116, %v516
  %v518 = vpop.f32.mrb[0].mxu0
  %519 = vmatprep.mubr.f32.mxu0 0.0
  %520 = vmatmul.mubr.f32.gmra.mrb[0].mxu0 %v204
  %v521 = vpop.f32.mrb[0].mxu0
  %v522 = vadd.f32 %v116, %v521
  %v523 = vpop.f32.mrb[0].mxu0
  %524 = vmatprep.mubr.f32.mxu0 0.0
  %525 = vmatmul.mubr.f32.gmra.mrb[0].mxu0 %v207
  %v526 = vpop.f32.mrb[0].mxu0
  %v527 = vadd.f32 %v116, %v526
  %v528 = vpop.f32.mrb[0].mxu0
  %529 = vmatprep.mubr.f32.mxu0 0.0
  %530 = vmatmul.mubr.f32.gmra.mrb[0].mxu0 %v210
  %v531 = vpop.f32.mrb[0].mxu0
  %v532 = vadd.f32 %v116, %v531
  %v533 = vpop.f32.mrb[0].mxu0
  %534 = vmatprep.mubr.f32.mxu0 0.0
  %535 = vmatmul.mubr.f32.gmra.mrb[0].mxu0 %v213
  %v536 = vpop.f32.mrb[0].mxu0
  %v537 = vadd.f32 %v116, %v536
  %v538 = vpop.f32.mrb[0].mxu0
  %539 = vmatprep.mubr.f32.mxu0 0.0
  %540 = vmatmul.mubr.f32.gmra.mrb[0].mxu0 %v216
  %v541 = vpop.f32.mrb[0].mxu0
  %v542 = vadd.f32 %v116, %v541
  %v543 = vpop.f32.mrb[0].mxu0
  %544 = vmatprep.mubr.f32.mxu0 0.0
  %545 = vmatmul.mubr.f32.gmra.mrb[0].mxu0 %v219
  %v546 = vpop.f32.mrb[0].mxu0
  %v547 = vadd.f32 %v116, %v546
  %v548 = vpop.f32.mrb[0].mxu0
  %549 = vmatprep.mubr.f32.mxu0 0.0
  %550 = vmatmul.mubr.f32.gmra.mrb[0].mxu0 %v222
  %v551 = vpop.f32.mrb[0].mxu0
  %v552 = vadd.f32 %v116, %v551
  %v553 = vpop.f32.mrb[0].mxu0
  %554 = vmatprep.mubr.f32.mxu0 0.0
  %555 = vmatmul.mubr.f32.gmra.mrb[0].mxu0 %v225
  %v556 = vpop.f32.mrb[0].mxu0
  %v557 = vadd.f32 %v116, %v556
  %v558 = vpop.f32.mrb[0].mxu0
  %559 = vmatprep.mubr.f32.mxu0 0.0
  %560 = vmatmul.mubr.f32.gmra.mrb[0].mxu0 %v228
  %v561 = vpop.f32.mrb[0].mxu0
  %v562 = vadd.f32 %v116, %v561
  %v563 = vpop.f32.mrb[0].mxu0
  %564 = vmatprep.mubr.f32.mxu0 0.0
  %565 = vmatmul.mubr.f32.gmra.mrb[0].mxu0 %v231
  %v566 = vpop.f32.mrb[0].mxu0
  %v567 = vadd.f32 %v116, %v566
  %v568 = vpop.f32.mrb[0].mxu0
  %569 = vmatprep.mubr.f32.mxu0 0.0
  %570 = vmatmul.mubr.f32.gmra.mrb[0].mxu0 %v234
  %v571 = vpop.f32.mrb[0].mxu0
  %v572 = vadd.f32 %v116, %v571
  %v573 = vpop.f32.mrb[0].mxu0
  %574 = vmatprep.mubr.f32.mxu0 0.0
  %575 = vmatmul.mubr.f32.gmra.mrb[0].mxu0 %v237
  %v576 = vpop.f32.mrb[0].mxu0
  %v577 = vadd.f32 %v116, %v576
  %v578 = vpop.f32.mrb[0].mxu0
  %579 = vmatprep.mubr.f32.mxu0 0.0
  %580 = vmatmul.mubr.f32.gmra.mrb[0].mxu0 %v240
  %v581 = vpop.f32.mrb[0].mxu0
  %v582 = vadd.f32 %v116, %v581
  %v583 = vpop.f32.mrb[0].mxu0
  %584 = vmatprep.mubr.f32.mxu0 0.0
  %585 = vmatmul.mubr.f32.gmra.mrb[0].mxu0 %v243
  %v586 = vpop.f32.mrb[0].mxu0
  %v587 = vadd.f32 %v116, %v586
  %v588 = vpop.f32.mrb[0].mxu0
  %589 = vmatprep.mubr.f32.mxu0 0.0
  %590 = vmatmul.mubr.f32.gmra.mrb[0].mxu0 %v246
  %v591 = vpop.f32.mrb[0].mxu0
  %v592 = vadd.f32 %v116, %v591
  %v593 = vpop.f32.mrb[0].mxu0
  %594 = vmatprep.mubr.f32.mxu0 0.0
  %595 = vmatmul.mubr.f32.gmra.mrb[0].mxu0 %v249
  %v596 = vpop.f32.mrb[0].mxu0
  %v597 = vadd.f32 %v116, %v596
  %v598 = vpop.f32.mrb[0].mxu0
  %599 = vmatprep.mubr.f32.mxu0 0.0
  %600 = vmatmul.mubr.f32.gmra.mrb[0].mxu0 %v252
  %v601 = vpop.f32.mrb[0].mxu0
  %v602 = vadd.f32 %v116, %v601
  %v603 = vpop.f32.mrb[0].mxu0
  %604 = vmatprep.mubr.f32.mxu0 0.0
  %605 = vmatmul.mubr.f32.gmra.mrb[0].mxu0 %v255
  %v606 = vpop.f32.mrb[0].mxu0
  %v607 = vadd.f32 %v116, %v606
  %v608 = vpop.f32.mrb[0].mxu0
  %609 = vmatprep.mubr.f32.mxu0 0.0
  %610 = vmatmul.mubr.f32.gmra.mrb[0].mxu0 %v258
  %v611 = vpop.f32.mrb[0].mxu0
  %v612 = vadd.f32 %v116, %v611
  %v613 = vpop.f32.mrb[0].mxu0
  %614 = vmatprep.mubr.f32.mxu0 0.0
  %615 = vmatmul.mubr.f32.gmra.mrb[0].mxu0 %v261
  %v616 = vpop.f32.mrb[0].mxu0
  %v617 = vadd.f32 %v116, %v616
  %v618 = vpop.f32.mrb[0].mxu0
  %619 = vmatprep.mubr.f32.mxu0 0.0
  %620 = vmatmul.mubr.f32.gmra.mrb[0].mxu0 %v264
  %v621 = vpop.f32.mrb[0].mxu0
  %v622 = vadd.f32 %v116, %v621
  %v623 = vpop.f32.mrb[0].mxu0
  %624 = vmatprep.mubr.f32.mxu0 0.0
  %625 = vmatmul.mubr.f32.gmra.mrb[0].mxu0 %v267
  %v626 = vpop.f32.mrb[0].mxu0
  %v627 = vadd.f32 %v116, %v626
  %v628 = vpop.f32.mrb[0].mxu0
  %629 = vmatprep.mubr.f32.mxu0 0.0
  %630 = vmatmul.mubr.f32.gmra.mrb[0].mxu0 %v270
  %v631 = vpop.f32.mrb[0].mxu0
  %v632 = vadd.f32 %v116, %v631
  %v633 = vpop.f32.mrb[0].mxu0
  %634 = vmatprep.mubr.f32.mxu0 0.0
  %635 = vmatmul.mubr.f32.gmra.mrb[0].mxu0 %v273
  %v636 = vpop.f32.mrb[0].mxu0
  %v637 = vadd.f32 %v116, %v636
  %v638 = vpop.f32.mrb[0].mxu0
  %639 = vmatprep.mubr.f32.mxu0 0.0
  %640 = vmatmul.mubr.f32.gmra.mrb[0].mxu0 %v276
  %v641 = vpop.f32.mrb[0].mxu0
  %v642 = vadd.f32 %v116, %v641
  %v643 = vpop.f32.mrb[0].mxu0
  %644 = vmatprep.mubr.f32.mxu0 0.0
  %645 = vmatmul.mubr.f32.gmra.mrb[0].mxu0 %v279
  %v646 = vpop.f32.mrb[0].mxu0
  %v647 = vadd.f32 %v116, %v646
  %v648 = vpop.f32.mrb[0].mxu0
  %649 = vmatprep.mubr.f32.mxu0 0.0
  %650 = vmatmul.mubr.f32.gmra.mrb[0].mxu0 %v282
  %v651 = vpop.f32.mrb[0].mxu0
  %v652 = vadd.f32 %v116, %v651
  %v653 = vpop.f32.mrb[0].mxu0
  %654 = vmatprep.mubr.f32.mxu0 0.0
  %655 = vmatmul.mubr.f32.gmra.mrb[0].mxu0 %v285
  %v656 = vpop.f32.mrb[0].mxu0
  %v657 = vadd.f32 %v116, %v656
  %v658 = vpop.f32.mrb[0].mxu0
  %659 = vmatprep.mubr.f32.mxu0 0.0
  %660 = vmatmul.mubr.f32.gmra.mrb[0].mxu0 %v288
  %v661 = vpop.f32.mrb[0].mxu0
  %v662 = vadd.f32 %v116, %v661
  %v663 = vpop.f32.mrb[0].mxu0
  %664 = vmatprep.mubr.f32.mxu0 0.0
  %665 = vmatmul.mubr.f32.gmra.mrb[0].mxu0 %v291
  %v666 = vpop.f32.mrb[0].mxu0
  %v667 = vadd.f32 %v116, %v666
  %v668 = vpop.f32.mrb[0].mxu0
  %669 = vmatprep.mubr.f32.mxu0 0.0
  %670 = vmatmul.mubr.f32.gmra.mrb[0].mxu0 %v294
  %v671 = vpop.f32.mrb[0].mxu0
  %v672 = vadd.f32 %v116, %v671
  %v673 = vpop.f32.mrb[0].mxu0
  %674 = vmatprep.mubr.f32.mxu0 0.0
  %675 = vmatmul.mubr.f32.gmra.mrb[0].mxu0 %v297
  %v676 = vpop.f32.mrb[0].mxu0
  %v677 = vadd.f32 %v116, %v676
  %v678 = vpop.f32.mrb[0].mxu0
  %679 = vmatprep.mubr.f32.mxu0 0.0
  %680 = vmatmul.mubr.f32.gmra.mrb[0].mxu0 %v300
  %v681 = vpop.f32.mrb[0].mxu0
  %v682 = vadd.f32 %v116, %v681
  %v683 = vpop.f32.mrb[0].mxu0
  %684 = vmatprep.mubr.f32.mxu0 0.0
  %685 = vmatmul.mubr.f32.gmra.mrb[0].mxu0 %v303
  %v686 = vpop.f32.mrb[0].mxu0
  %v687 = vadd.f32 %v116, %v686
  %v688 = vpop.f32.mrb[0].mxu0
  %689 = vmatprep.mubr.f32.mxu0 0.0
  %690 = vmatmul.mubr.f32.gmra.mrb[0].mxu0 %v306
  %v691 = vpop.f32.mrb[0].mxu0
  %v692 = vadd.f32 %v116, %v691
  %v693 = vpop.f32.mrb[0].mxu0
  %694 = vmatprep.mubr.f32.mxu0 0.0
  %695 = vmatmul.mubr.f32.gmra.mrb[0].mxu0 %v309
  %v696 = vpop.f32.mrb[0].mxu0
  %v697 = vadd.f32 %v116, %v696
  %v698 = vpop.f32.mrb[0].mxu0
  %699 = vdwg.mxu0
  %v700 = vmax.f32 %v382, 0.0
  %v701 = vmax.f32 %v387, 0.0
  %v702 = vmax.f32 %v392, 0.0
  %v703 = vmax.f32 %v397, 0.0
  %v704 = vmax.f32 %v402, 0.0
  %v705 = vmax.f32 %v407, 0.0
  %v706 = vmax.f32 %v412, 0.0
  %v707 = vmax.f32 %v417, 0.0
  %v708 = vmax.f32 %v422, 0.0
  %v709 = vmax.f32 %v427, 0.0
  %v710 = vmax.f32 %v432, 0.0
  %v711 = vmax.f32 %v437, 0.0
  %v712 = vmax.f32 %v442, 0.0
  %v713 = vmax.f32 %v447, 0.0
  %v714 = vmax.f32 %v452, 0.0
  %v715 = vmax.f32 %v457, 0.0
  %v716 = vmax.f32 %v462, 0.0
  %v717 = vmax.f32 %v467, 0.0
  %v718 = vmax.f32 %v472, 0.0
  %v719 = vmax.f32 %v477, 0.0
  %v720 = vmax.f32 %v482, 0.0
  %v721 = vmax.f32 %v487, 0.0
  %v722 = vmax.f32 %v492, 0.0
  %v723 = vmax.f32 %v497, 0.0
  %v724 = vmax.f32 %v502, 0.0
  %v725 = vmax.f32 %v507, 0.0
  %v726 = vmax.f32 %v512, 0.0
  %v727 = vmax.f32 %v517, 0.0
  %v728 = vmax.f32 %v522, 0.0
  %v729 = vmax.f32 %v527, 0.0
  %v730 = vmax.f32 %v532, 0.0
  %v731 = vmax.f32 %v537, 0.0
  %v732 = vmax.f32 %v542, 0.0
  %v733 = vmax.f32 %v547, 0.0
  %v734 = vmax.f32 %v552, 0.0
  %v735 = vmax.f32 %v557, 0.0
  %v736 = vmax.f32 %v562, 0.0
  %v737 = vmax.f32 %v567, 0.0
  %v738 = vmax.f32 %v572, 0.0
  %v739 = vmax.f32 %v577, 0.0
  %v740 = vmax.f32 %v582, 0.0
  %v741 = vmax.f32 %v587, 0.0
  %v742 = vmax.f32 %v592, 0.0
  %v743 = vmax.f32 %v597, 0.0
  %v744 = vmax.f32 %v602, 0.0
  %v745 = vmax.f32 %v607, 0.0
  %v746 = vmax.f32 %v612, 0.0
  %v747 = vmax.f32 %v617, 0.0
  %v748 = vmax.f32 %v622, 0.0
  %v749 = vmax.f32 %v627, 0.0
  %v750 = vmax.f32 %v632, 0.0
  %v751 = vmax.f32 %v637, 0.0
  %v752 = vmax.f32 %v642, 0.0
  %v753 = vmax.f32 %v647, 0.0
  %v754 = vmax.f32 %v652, 0.0
  %v755 = vmax.f32 %v657, 0.0
  %v756 = vmax.f32 %v662, 0.0
  %v757 = vmax.f32 %v667, 0.0
  %v758 = vmax.f32 %v672, 0.0
  %v759 = vmax.f32 %v677, 0.0
  %v760 = vmax.f32 %v682, 0.0
  %v761 = vmax.f32 %v687, 0.0
  %v762 = vmax.f32 %v692, 0.0
  %v763 = vmax.f32 %v697, 0.0
  %v764 = vld [vmem:[%s3] sm:$0xff]
  %v766 = vcombine.high %v764, %v764
  %v768 = vunpack.c.l.s4 1983009808
  %v769 = vunpack.c.0.s8 %v768
  %v770 = vlaneseq
  %v771 = vshrl.u32 %v770, 7
  %v772 = vsub.s32 %v769, %v771
  %v773 = vrot.slane %v764, %v772
  %v775 = vunpack.c.l.s4 1983009808
  %v776 = vunpack.c.0.s8 %v775
  %v777 = vlaneseq
  %v778 = vshrl.u32 %v777, 7
  %v779 = vsub.s32 %v776, %v778
  %v780 = vrot.slane %v766, %v779
  %v781 = vcombine.high %v773, %v773
  %v782 = vcombine.high %v780, %v780
  %787 = vmatprep.subr.mxu0 0.0
  %788 = vmatpush1.msra.mxu0 %v700
  %789 = vmatprep.subr.mxu0 0.0
  %790 = vmatpush1.msra.mxu0 %v701
  %791 = vmatprep.subr.mxu0 0.0
  %792 = vmatpush1.msra.mxu0 %v702
  %793 = vmatprep.subr.mxu0 0.0
  %794 = vmatpush1.msra.mxu0 %v703
  %795 = vmatprep.subr.mxu0 0.0
  %796 = vmatpush1.msra.mxu0 %v704
  %797 = vmatprep.subr.mxu0 0.0
  %798 = vmatpush1.msra.mxu0 %v705
  %799 = vmatprep.subr.mxu0 0.0
  %800 = vmatpush1.msra.mxu0 %v706
  %801 = vmatprep.subr.mxu0 0.0
  %802 = vmatpush1.msra.mxu0 %v707
  %803 = vmatprep.subr.mxu0 0.0
  %804 = vmatpush1.msra.mxu0 %v708
  %805 = vmatprep.subr.mxu0 0.0
  %806 = vmatpush1.msra.mxu0 %v709
  %807 = vmatprep.subr.mxu0 0.0
  %808 = vmatpush1.msra.mxu0 %v710
  %809 = vmatprep.subr.mxu0 0.0
  %810 = vmatpush1.msra.mxu0 %v711
  %811 = vmatprep.subr.mxu0 0.0
  %812 = vmatpush1.msra.mxu0 %v712
  %813 = vmatprep.subr.mxu0 0.0
  %814 = vmatpush1.msra.mxu0 %v713
  %815 = vmatprep.subr.mxu0 0.0
  %816 = vmatpush1.msra.mxu0 %v714
  %817 = vmatprep.subr.mxu0 0.0
  %818 = vmatpush1.msra.mxu0 %v715
  %819 = vmatprep.subr.mxu0 0.0
  %820 = vmatpush1.msra.mxu0 %v716
  %821 = vmatprep.subr.mxu0 0.0
  %822 = vmatpush1.msra.mxu0 %v717
  %823 = vmatprep.subr.mxu0 0.0
  %824 = vmatpush1.msra.mxu0 %v718
  %825 = vmatprep.subr.mxu0 0.0
  %826 = vmatpush1.msra.mxu0 %v719
  %827 = vmatprep.subr.mxu0 0.0
  %828 = vmatpush1.msra.mxu0 %v720
  %829 = vmatprep.subr.mxu0 0.0
  %830 = vmatpush1.msra.mxu0 %v721
  %831 = vmatprep.subr.mxu0 0.0
  %832 = vmatpush1.msra.mxu0 %v722
  %833 = vmatprep.subr.mxu0 0.0
  %834 = vmatpush1.msra.mxu0 %v723
  %835 = vmatprep.subr.mxu0 0.0
  %836 = vmatpush1.msra.mxu0 %v724
  %837 = vmatprep.subr.mxu0 0.0
  %838 = vmatpush1.msra.mxu0 %v725
  %839 = vmatprep.subr.mxu0 0.0
  %840 = vmatpush1.msra.mxu0 %v726
  %841 = vmatprep.subr.mxu0 0.0
  %842 = vmatpush1.msra.mxu0 %v727
  %843 = vmatprep.subr.mxu0 0.0
  %844 = vmatpush1.msra.mxu0 %v728
  %845 = vmatprep.subr.mxu0 0.0
  %846 = vmatpush1.msra.mxu0 %v729
  %847 = vmatprep.subr.mxu0 0.0
  %848 = vmatpush1.msra.mxu0 %v730
  %849 = vmatprep.subr.mxu0 0.0
  %850 = vmatpush1.msra.mxu0 %v731
  %851 = vmatprep.mubr.f32.mxu0 %v781
  %852 = vmatmul.mubr.f32.gmra.mrb[0].mxu0 %v773
  %v853 = vpop.f32.mrb[0].mxu0
  %v854 = vadd.f32 0.0, %v853
  %v855 = vpop.f32.mrb[0].mxu0
  %856 = vdwg.mxu0
  %857 = vmatprep.subr.mxu0 0.0
  %858 = vmatpush1.msra.mxu0 %v732
  %859 = vmatprep.subr.mxu0 0.0
  %860 = vmatpush1.msra.mxu0 %v733
  %861 = vmatprep.subr.mxu0 0.0
  %862 = vmatpush1.msra.mxu0 %v734
  %863 = vmatprep.subr.mxu0 0.0
  %864 = vmatpush1.msra.mxu0 %v735
  %865 = vmatprep.subr.mxu0 0.0
  %866 = vmatpush1.msra.mxu0 %v736
  %867 = vmatprep.subr.mxu0 0.0
  %868 = vmatpush1.msra.mxu0 %v737
  %869 = vmatprep.subr.mxu0 0.0
  %870 = vmatpush1.msra.mxu0 %v738
  %871 = vmatprep.subr.mxu0 0.0
  %872 = vmatpush1.msra.mxu0 %v739
  %873 = vmatprep.subr.mxu0 0.0
  %874 = vmatpush1.msra.mxu0 %v740
  %875 = vmatprep.subr.mxu0 0.0
  %876 = vmatpush1.msra.mxu0 %v741
  %877 = vmatprep.subr.mxu0 0.0
  %878 = vmatpush1.msra.mxu0 %v742
  %879 = vmatprep.subr.mxu0 0.0
  %880 = vmatpush1.msra.mxu0 %v743
  %881 = vmatprep.subr.mxu0 0.0
  %882 = vmatpush1.msra.mxu0 %v744
  %883 = vmatprep.subr.mxu0 0.0
  %884 = vmatpush1.msra.mxu0 %v745
  %885 = vmatprep.subr.mxu0 0.0
  %886 = vmatpush1.msra.mxu0 %v746
  %887 = vmatprep.subr.mxu0 0.0
  %888 = vmatpush1.msra.mxu0 %v747
  %889 = vmatprep.subr.mxu0 0.0
  %890 = vmatpush1.msra.mxu0 %v748
  %891 = vmatprep.subr.mxu0 0.0
  %892 = vmatpush1.msra.mxu0 %v749
  %893 = vmatprep.subr.mxu0 0.0
  %894 = vmatpush1.msra.mxu0 %v750
  %895 = vmatprep.subr.mxu0 0.0
  %896 = vmatpush1.msra.mxu0 %v751
  %897 = vmatprep.subr.mxu0 0.0
  %898 = vmatpush1.msra.mxu0 %v752
  %899 = vmatprep.subr.mxu0 0.0
  %900 = vmatpush1.msra.mxu0 %v753
  %901 = vmatprep.subr.mxu0 0.0
  %902 = vmatpush1.msra.mxu0 %v754
  %903 = vmatprep.subr.mxu0 0.0
  %904 = vmatpush1.msra.mxu0 %v755
  %905 = vmatprep.subr.mxu0 0.0
  %906 = vmatpush1.msra.mxu0 %v756
  %907 = vmatprep.subr.mxu0 0.0
  %908 = vmatpush1.msra.mxu0 %v757
  %909 = vmatprep.subr.mxu0 0.0
  %910 = vmatpush1.msra.mxu0 %v758
  %911 = vmatprep.subr.mxu0 0.0
  %912 = vmatpush1.msra.mxu0 %v759
  %913 = vmatprep.subr.mxu0 0.0
  %914 = vmatpush1.msra.mxu0 %v760
  %915 = vmatprep.subr.mxu0 0.0
  %916 = vmatpush1.msra.mxu0 %v761
  %917 = vmatprep.subr.mxu0 0.0
  %918 = vmatpush1.msra.mxu0 %v762
  %919 = vmatprep.subr.mxu0 0.0
  %920 = vmatpush1.msra.mxu0 %v763
  %921 = vmatprep.mubr.f32.mxu0 %v782
  %922 = vmatmul.mubr.f32.gmra.mrb[0].mxu0 %v780
  %v923 = vpop.f32.mrb[0].mxu0
  %v924 = vadd.f32 %v854, %v923
  %v925 = vpop.f32.mrb[0].mxu0
  %926 = vdwg.mxu0
  %v927 = vld [vmem:[%s4] sm:$0xff]
  %v928 = vld [vmem:[%s4 + $0x8] sm:$0xff]
  %v929 = vld [vmem:[%s4 + $0x10] sm:$0xff]
  %v930 = vld [vmem:[%s4 + $0x18] sm:$0xff]
  %v931 = vld [vmem:[%s5] sm:$0x3]
  %v933 = vlaneseq
  %v934 = vshrl.u32 %v933, 7
  %v935 = vsub.s32 0, %v934
  %v936 = vrot.slane %v931, %v935
  %v937 = vlaneseq
  %v938 = vshrl.u32 %v937, 7
  %v939 = vsub.s32 1, %v938
  %v940 = vrot.slane %v931, %v939
  %vm943 = vcmask 130048
  %v945 = vsel %vm943, %v924, 0
  %947 = vmatprep.subr.mxu0 %v928
  %948 = vmatpush1.msra.mxu0 %v927
  %949 = vmatprep.subr.mxu0 %v930
  %950 = vmatpush1.msra.mxu0 %v929
  %951 = vmatprep.subr.mxu0 0.0
  %952 = vmatpush1.msra.mxu0 0.0
  %953 = vmatprep.subr.mxu0 0.0
  %954 = vmatpush1.msra.mxu0 0.0
  %955 = vmatprep.subr.mxu0 0.0
  %956 = vmatpush1.msra.mxu0 0.0
  %957 = vmatprep.subr.mxu0 0.0
  %958 = vmatpush1.msra.mxu0 0.0
  %959 = vmatprep.subr.mxu0 0.0
  %960 = vmatpush1.msra.mxu0 0.0
  %961 = vmatprep.subr.mxu0 0.0
  %962 = vmatpush1.msra.mxu0 0.0
  %963 = vmatprep.subr.mxu0 0.0
  %964 = vmatpush1.msra.mxu0 0.0
  %965 = vmatprep.subr.mxu0 0.0
  %966 = vmatpush1.msra.mxu0 0.0
  %967 = vmatprep.subr.mxu0 0.0
  %968 = vmatpush1.msra.mxu0 0.0
  %969 = vmatprep.subr.mxu0 0.0
  %970 = vmatpush1.msra.mxu0 0.0
  %971 = vmatprep.subr.mxu0 0.0
  %972 = vmatpush1.msra.mxu0 0.0
  %973 = vmatprep.subr.mxu0 0.0
  %974 = vmatpush1.msra.mxu0 0.0
  %975 = vmatprep.subr.mxu0 0.0
  %976 = vmatpush1.msra.mxu0 0.0
  %977 = vmatprep.subr.mxu0 0.0
  %978 = vmatpush1.msra.mxu0 0.0
  %979 = vmatprep.subr.mxu0 0.0
  %980 = vmatpush1.msra.mxu0 0.0
  %981 = vmatprep.subr.mxu0 0.0
  %982 = vmatpush1.msra.mxu0 0.0
  %983 = vmatprep.subr.mxu0 0.0
  %984 = vmatpush1.msra.mxu0 0.0
  %985 = vmatprep.subr.mxu0 0.0
  %986 = vmatpush1.msra.mxu0 0.0
  %987 = vmatprep.subr.mxu0 0.0
  %988 = vmatpush1.msra.mxu0 0.0
  %989 = vmatprep.subr.mxu0 0.0
  %990 = vmatpush1.msra.mxu0 0.0
  %991 = vmatprep.subr.mxu0 0.0
  %992 = vmatpush1.msra.mxu0 0.0
  %993 = vmatprep.subr.mxu0 0.0
  %994 = vmatpush1.msra.mxu0 0.0
  %995 = vmatprep.subr.mxu0 0.0
  %996 = vmatpush1.msra.mxu0 0.0
  %997 = vmatprep.subr.mxu0 0.0
  %998 = vmatpush1.msra.mxu0 0.0
  %999 = vmatprep.subr.mxu0 0.0
  %1000 = vmatpush1.msra.mxu0 0.0
  %1001 = vmatprep.subr.mxu0 0.0
  %1002 = vmatpush1.msra.mxu0 0.0
  %1003 = vmatprep.subr.mxu0 0.0
  %1004 = vmatpush1.msra.mxu0 0.0
  %1005 = vmatprep.subr.mxu0 0.0
  %1006 = vmatpush1.msra.mxu0 0.0
  %1007 = vmatprep.subr.mxu0 0.0
  %1008 = vmatpush1.msra.mxu0 0.0
  %1009 = vmatprep.subr.mxu0 0.0
  %1010 = vmatpush1.msra.mxu0 0.0
  %1011 = vmatprep.mubr.f32.mxu0 0.0
  %1012 = vmatmul.mubr.f32.gmra.mrb[0].mxu0 %v945
  %v1013 = vpop.f32.mrb[0].mxu0
  %v1014 = vadd.f32 %v936, %v1013
  %v1015 = vpop.f32.mrb[0].mxu0
  %v1016 = vadd.f32 %v940, %v1015
  %1017 = vdwg.mxu0
  %v1018 = vld [vmem:[%s6] sm:$0x3]
  %v1020 = vlaneseq
  %v1021 = vshrl.u32 %v1020, 7
  %v1022 = vsub.s32 0, %v1021
  %v1023 = vrot.slane %v1018, %v1022
  %v1024 = vlaneseq
  %v1025 = vshrl.u32 %v1024, 7
  %v1026 = vsub.s32 1, %v1025
  %v1027 = vrot.slane %v1018, %v1026
  %v1030 = vadd.f32 %v1014, %v1023
  %v1031 = vadd.f32 %v1016, %v1027
  %v1034 = vcombine.low %v1030, %v1031
  %v1036 = vunpack.c.l.s4 1983009808
  %v1037 = vunpack.c.0.s8 %v1036
  %v1038 = vlaneseq
  %v1039 = vshrl.u32 %v1038, 7
  %v1040 = vsub.s32 %v1037, %v1039
  %v1041 = vrot.slane %v1034, %v1040
  %vm1043 = vcmask 1041408
  %vm1044 = vcmask 519170
  %vm1045 = vmor %vm1044, %vm1043
  %1046 = vst.msk [vmem:[%s12] sm:$0xf] %vm1045, %v1041
  %v1047 = vld [vmem:[%s8] sm:$0xff]
  %v1048 = vld [vmem:[%s8 + $0x8] sm:$0xff]
  %v1049 = vld [vmem:[%s8 + $0x10] sm:$0xff]
  %v1050 = vld [vmem:[%s8 + $0x18] sm:$0xff]
  %v1051 = vld [vmem:[%s8 + $0x20] sm:$0xff]
  %v1052 = vld [vmem:[%s8 + $0x28] sm:$0xff]
  %v1053 = vld [vmem:[%s8 + $0x30] sm:$0xff]
  %v1054 = vld [vmem:[%s8 + $0x38] sm:$0xff]
  %v1055 = vld [vmem:[%s9] sm:$0x3]
  %v1057 = vlaneseq
  %v1058 = vshrl.u32 %v1057, 7
  %v1059 = vsub.s32 0, %v1058
  %v1060 = vrot.slane %v1055, %v1059
  %v1061 = vlaneseq
  %v1062 = vshrl.u32 %v1061, 7
  %v1063 = vsub.s32 1, %v1062
  %v1064 = vrot.slane %v1055, %v1063
  %vm1067 = vcmask 261120
  %v1068 = vsel %vm1067, %v1030, 0
  %1070 = vmatprep.subr.mxu0 %v1048
  %1071 = vmatpush1.msra.mxu0 %v1047
  %1072 = vmatprep.subr.mxu0 %v1050
  %1073 = vmatpush1.msra.mxu0 %v1049
  %1074 = vmatprep.subr.mxu0 %v1052
  %1075 = vmatpush1.msra.mxu0 %v1051
  %1076 = vmatprep.subr.mxu0 %v1054
  %1077 = vmatpush1.msra.mxu0 %v1053
  %1078 = vmatprep.subr.mxu0 0.0
  %1079 = vmatpush1.msra.mxu0 0.0
  %1080 = vmatprep.subr.mxu0 0.0
  %1081 = vmatpush1.msra.mxu0 0.0
  %1082 = vmatprep.subr.mxu0 0.0
  %1083 = vmatpush1.msra.mxu0 0.0
  %1084 = vmatprep.subr.mxu0 0.0
  %1085 = vmatpush1.msra.mxu0 0.0
  %1086 = vmatprep.subr.mxu0 0.0
  %1087 = vmatpush1.msra.mxu0 0.0
  %1088 = vmatprep.subr.mxu0 0.0
  %1089 = vmatpush1.msra.mxu0 0.0
  %1090 = vmatprep.subr.mxu0 0.0
  %1091 = vmatpush1.msra.mxu0 0.0
  %1092 = vmatprep.subr.mxu0 0.0
  %1093 = vmatpush1.msra.mxu0 0.0
  %1094 = vmatprep.subr.mxu0 0.0
  %1095 = vmatpush1.msra.mxu0 0.0
  %1096 = vmatprep.subr.mxu0 0.0
  %1097 = vmatpush1.msra.mxu0 0.0
  %1098 = vmatprep.subr.mxu0 0.0
  %1099 = vmatpush1.msra.mxu0 0.0
  %1100 = vmatprep.subr.mxu0 0.0
  %1101 = vmatpush1.msra.mxu0 0.0
  %1102 = vmatprep.subr.mxu0 0.0
  %1103 = vmatpush1.msra.mxu0 0.0
  %1104 = vmatprep.subr.mxu0 0.0
  %1105 = vmatpush1.msra.mxu0 0.0
  %1106 = vmatprep.subr.mxu0 0.0
  %1107 = vmatpush1.msra.mxu0 0.0
  %1108 = vmatprep.subr.mxu0 0.0
  %1109 = vmatpush1.msra.mxu0 0.0
  %1110 = vmatprep.subr.mxu0 0.0
  %1111 = vmatpush1.msra.mxu0 0.0
  %1112 = vmatprep.subr.mxu0 0.0
  %1113 = vmatpush1.msra.mxu0 0.0
  %1114 = vmatprep.subr.mxu0 0.0
  %1115 = vmatpush1.msra.mxu0 0.0
  %1116 = vmatprep.subr.mxu0 0.0
  %1117 = vmatpush1.msra.mxu0 0.0
  %1118 = vmatprep.subr.mxu0 0.0
  %1119 = vmatpush1.msra.mxu0 0.0
  %1120 = vmatprep.subr.mxu0 0.0
  %1121 = vmatpush1.msra.mxu0 0.0
  %1122 = vmatprep.subr.mxu0 0.0
  %1123 = vmatpush1.msra.mxu0 0.0
  %1124 = vmatprep.subr.mxu0 0.0
  %1125 = vmatpush1.msra.mxu0 0.0
  %1126 = vmatprep.subr.mxu0 0.0
  %1127 = vmatpush1.msra.mxu0 0.0
  %1128 = vmatprep.subr.mxu0 0.0
  %1129 = vmatpush1.msra.mxu0 0.0
  %1130 = vmatprep.subr.mxu0 0.0
  %1131 = vmatpush1.msra.mxu0 0.0
  %1132 = vmatprep.subr.mxu0 0.0
  %1133 = vmatpush1.msra.mxu0 0.0
  %1134 = vmatprep.mubr.f32.mxu0 0.0
  %1135 = vmatmul.mubr.f32.gmra.mrb[0].mxu0 %v1068
  %v1136 = vpop.f32.mrb[0].mxu0
  %v1137 = vadd.f32 %v1060, %v1136
  %v1138 = vpop.f32.mrb[0].mxu0
  %v1139 = vadd.f32 %v1064, %v1138
  %1140 = vdwg.mxu0
  %v1141 = vld [vmem:[%s10] sm:$0xff]
  %v1142 = vld [vmem:[%s10 + $0x8] sm:$0xff]
  %v1143 = vld [vmem:[%s10 + $0x10] sm:$0xff]
  %v1144 = vld [vmem:[%s10 + $0x18] sm:$0xff]
  %v1145 = vld [vmem:[%s11] sm:$0xff]
  %v1146 = vld [vmem:[%s11 + $0x8] sm:$0xff]
  %v1147 = vld [vmem:[%s7] sm:$0xff]
  %v1148 = vld [vmem:[%s7 + $0x8] sm:$0xff]
  %v1149 = vld [vmem:[%s7 + $0x10] sm:$0xff]
  %v1150 = vld [vmem:[%s7 + $0x18] sm:$0xff]
  %v1151 = vlaneseq
  %v1152 = vshrl.u32 %v1151, 7
  %v1153 = vsub.s32 0, %v1152
  %v1154 = vrot.slane %v1137, %v1153
  %v1155 = vlaneseq
  %v1156 = vshrl.u32 %v1155, 7
  %v1157 = vsub.s32 0, %v1156
  %v1158 = vrot.slane %v1139, %v1157
  %v1159 = vmul.f32 %v1141, %v1154
  %v1160 = vmul.f32 %v1142, %v1158
  %v1161 = vmul.f32 %v1143, %v1154
  %v1162 = vmul.f32 %v1144, %v1158
  %v1163 = vmul.f32 %v1159, %v1159
  %v1164 = vmul.f32 %v1160, %v1160
  %v1165 = vmul.f32 %v1161, %v1161
  %v1166 = vmul.f32 %v1162, %v1162
  %v1167 = vsel %vm943, %v1164, 0.0
  %v1168 = vadd.f32 %v1163, %v1167
  %1169 = vadd.xlane.f32.xlu0 %v1168
  %v1170 = vpop.xlane.xlu0 %1169
  %v1171 = vsel %vm943, %v1166, 0.0
  %v1172 = vadd.f32 %v1165, %v1171
  %1173 = vadd.xlane.f32.xlu0 %v1172
  %v1174 = vpop.xlane.xlu0 %1173
  %v1175 = vadd.f32 %v1170, 1e-08
  %v1176 = vadd.f32 %v1174, 1e-08
  %v1177 = vrsqrt.pop %v1175
  %v1178 = vrsqrt.pop %v1176
  %v1179 = vmul.f32 %v1159, %v1177
  %v1180 = vmul.f32 %v1160, %v1177
  %v1181 = vmul.f32 %v1161, %v1178
  %v1182 = vmul.f32 %v1162, %v1178
  %1184 = vset.pattern.permute.xlu0 0
  %1185 = vperm.xlu0 %1184, %v1145
  %v1186 = vpop.permute.xlu0 %1185
  %1189 = vset.pattern.permute.xlu0 0
  %1190 = vperm.xlu0 %1189, %v1146
  %v1191 = vpop.permute.xlu0 %1190
  %v1194 = vsel %vm943, %v1180, 0
  %v1197 = vsel %vm943, %v1182, 0
  %v1200 = vsel %vm943, %v1148, 0
  %v1203 = vsel %vm943, %v1150, 0
  %1205 = vmatprep.subr.mxu0 %v1200
  %1206 = vmatpush1.xpose.msra.mxu0 %v1147
  %1207 = vmatprep.subr.mxu0 %v1203
  %1208 = vmatpush1.xpose.msra.mxu0 %v1149
  %1209 = vmatprep.subr.mxu0 0.0
  %1210 = vmatpush1.xpose.msra.mxu0 0.0
  %1211 = vmatprep.subr.mxu0 0.0
  %1212 = vmatpush1.xpose.msra.mxu0 0.0
  %1213 = vmatprep.subr.mxu0 0.0
  %1214 = vmatpush1.xpose.msra.mxu0 0.0
  %1215 = vmatprep.subr.mxu0 0.0
  %1216 = vmatpush1.xpose.msra.mxu0 0.0
  %1217 = vmatprep.subr.mxu0 0.0
  %1218 = vmatpush1.xpose.msra.mxu0 0.0
  %1219 = vmatprep.subr.mxu0 0.0
  %1220 = vmatpush1.xpose.msra.mxu0 0.0
  %1221 = vmatprep.subr.mxu0 0.0
  %1222 = vmatpush1.xpose.msra.mxu0 0.0
  %1223 = vmatprep.subr.mxu0 0.0
  %1224 = vmatpush1.xpose.msra.mxu0 0.0
  %1225 = vmatprep.subr.mxu0 0.0
  %1226 = vmatpush1.xpose.msra.mxu0 0.0
  %1227 = vmatprep.subr.mxu0 0.0
  %1228 = vmatpush1.xpose.msra.mxu0 0.0
  %1229 = vmatprep.subr.mxu0 0.0
  %1230 = vmatpush1.xpose.msra.mxu0 0.0
  %1231 = vmatprep.subr.mxu0 0.0
  %1232 = vmatpush1.xpose.msra.mxu0 0.0
  %1233 = vmatprep.subr.mxu0 0.0
  %1234 = vmatpush1.xpose.msra.mxu0 0.0
  %1235 = vmatprep.subr.mxu0 0.0
  %1236 = vmatpush1.xpose.msra.mxu0 0.0
  %1237 = vmatprep.subr.mxu0 0.0
  %1238 = vmatpush1.xpose.msra.mxu0 0.0
  %1239 = vmatprep.subr.mxu0 0.0
  %1240 = vmatpush1.xpose.msra.mxu0 0.0
  %1241 = vmatprep.subr.mxu0 0.0
  %1242 = vmatpush1.xpose.msra.mxu0 0.0
  %1243 = vmatprep.subr.mxu0 0.0
  %1244 = vmatpush1.xpose.msra.mxu0 0.0
  %1245 = vmatprep.subr.mxu0 0.0
  %1246 = vmatpush1.xpose.msra.mxu0 0.0
  %1247 = vmatprep.subr.mxu0 0.0
  %1248 = vmatpush1.xpose.msra.mxu0 0.0
  %1249 = vmatprep.subr.mxu0 0.0
  %1250 = vmatpush1.xpose.msra.mxu0 0.0
  %1251 = vmatprep.subr.mxu0 0.0
  %1252 = vmatpush1.xpose.msra.mxu0 0.0
  %1253 = vmatprep.subr.mxu0 0.0
  %1254 = vmatpush1.xpose.msra.mxu0 0.0
  %1255 = vmatprep.subr.mxu0 0.0
  %1256 = vmatpush1.xpose.msra.mxu0 0.0
  %1257 = vmatprep.subr.mxu0 0.0
  %1258 = vmatpush1.xpose.msra.mxu0 0.0
  %1259 = vmatprep.subr.mxu0 0.0
  %1260 = vmatpush1.xpose.msra.mxu0 0.0
  %1261 = vmatprep.subr.mxu0 0.0
  %1262 = vmatpush1.xpose.msra.mxu0 0.0
  %1263 = vmatprep.subr.mxu0 0.0
  %1264 = vmatpush1.xpose.msra.mxu0 0.0
  %1265 = vmatprep.subr.mxu0 0.0
  %1266 = vmatpush1.xpose.msra.mxu0 0.0
  %1267 = vmatprep.subr.mxu0 0.0
  %1268 = vmatpush1.xpose.msra.mxu0 0.0
  %1269 = vmatprep.mubr.f32.mxu0 %v1194
  %1270 = vmatmul.mubr.f32.gmra.mrb[0].mxu0 %v1179
  %v1271 = vpop.f32.mrb[0].mxu0
  %v1272 = vadd.f32 %v1186, %v1271
  %v1273 = vpop.f32.mrb[0].mxu0
  %1274 = vmatprep.mubr.f32.mxu0 %v1197
  %1275 = vmatmul.mubr.f32.gmra.mrb[0].mxu0 %v1181
  %v1276 = vpop.f32.mrb[0].mxu0
  %v1277 = vadd.f32 %v1191, %v1276
  %v1278 = vpop.f32.mrb[0].mxu0
  %1279 = vdwg.mxu0
  %vm1280 = vcmp.ge.f32.partialorder %v1272, 0.0
  %vm1281 = vcmp.ge.f32.partialorder %v1277, 0.0
  %v1282 = vmul.f32 %v1272, 0.2
  %v1283 = vmul.f32 %v1277, 0.2
  %v1284 = vsel %vm1280, %v1272, %v1282
  %v1285 = vsel %vm1281, %v1277, %v1283
  %v1286 = vmul.f32 %v1284, 1.4142135
  %v1287 = vmul.f32 %v1285, 1.4142135
  %1288 = vst.msk [vmem:[%s13] sm:$0xff] %vm943, %v1286
  %1289 = vst.msk [vmem:[%s13 + $0x8] sm:$0xff] %vm943, %v1287
  %v1290 = vlaneseq
  %v1291 = vshrl.u32 %v1290, 7
  %v1292 = vsub.s32 1, %v1291
  %v1293 = vrot.slane %v1137, %v1292
  %v1294 = vlaneseq
  %v1295 = vshrl.u32 %v1294, 7
  %v1296 = vsub.s32 1, %v1295
  %v1297 = vrot.slane %v1139, %v1296
  %v1298 = vmul.f32 %v1141, %v1293
  %v1299 = vmul.f32 %v1142, %v1297
  %v1300 = vmul.f32 %v1143, %v1293
  %v1301 = vmul.f32 %v1144, %v1297
  %v1302 = vmul.f32 %v1298, %v1298
  %v1303 = vmul.f32 %v1299, %v1299
  %v1304 = vmul.f32 %v1300, %v1300
  %v1305 = vmul.f32 %v1301, %v1301
  %v1306 = vsel %vm943, %v1303, 0.0
  %v1307 = vadd.f32 %v1302, %v1306
  %1308 = vadd.xlane.f32.xlu0 %v1307
  %v1309 = vpop.xlane.xlu0 %1308
  %v1310 = vsel %vm943, %v1305, 0.0
  %v1311 = vadd.f32 %v1304, %v1310
  %1312 = vadd.xlane.f32.xlu0 %v1311
  %v1313 = vpop.xlane.xlu0 %1312
  %v1314 = vadd.f32 %v1309, 1e-08
  %v1315 = vadd.f32 %v1313, 1e-08
  %v1316 = vrsqrt.pop %v1314
  %v1317 = vrsqrt.pop %v1315
  %v1318 = vmul.f32 %v1298, %v1316
  %v1319 = vmul.f32 %v1299, %v1316
  %v1320 = vmul.f32 %v1300, %v1317
  %v1321 = vmul.f32 %v1301, %v1317
  %v1323 = vsel %vm943, %v1319, 0
  %v1326 = vsel %vm943, %v1321, 0
  %1328 = vmatprep.subr.mxu0 %v1200
  %1329 = vmatpush1.xpose.msra.mxu0 %v1147
  %1330 = vmatprep.subr.mxu0 %v1203
  %1331 = vmatpush1.xpose.msra.mxu0 %v1149
  %1332 = vmatprep.subr.mxu0 0.0
  %1333 = vmatpush1.xpose.msra.mxu0 0.0
  %1334 = vmatprep.subr.mxu0 0.0
  %1335 = vmatpush1.xpose.msra.mxu0 0.0
  %1336 = vmatprep.subr.mxu0 0.0
  %1337 = vmatpush1.xpose.msra.mxu0 0.0
  %1338 = vmatprep.subr.mxu0 0.0
  %1339 = vmatpush1.xpose.msra.mxu0 0.0
  %1340 = vmatprep.subr.mxu0 0.0
  %1341 = vmatpush1.xpose.msra.mxu0 0.0
  %1342 = vmatprep.subr.mxu0 0.0
  %1343 = vmatpush1.xpose.msra.mxu0 0.0
  %1344 = vmatprep.subr.mxu0 0.0
  %1345 = vmatpush1.xpose.msra.mxu0 0.0
  %1346 = vmatprep.subr.mxu0 0.0
  %1347 = vmatpush1.xpose.msra.mxu0 0.0
  %1348 = vmatprep.subr.mxu0 0.0
  %1349 = vmatpush1.xpose.msra.mxu0 0.0
  %1350 = vmatprep.subr.mxu0 0.0
  %1351 = vmatpush1.xpose.msra.mxu0 0.0
  %1352 = vmatprep.subr.mxu0 0.0
  %1353 = vmatpush1.xpose.msra.mxu0 0.0
  %1354 = vmatprep.subr.mxu0 0.0
  %1355 = vmatpush1.xpose.msra.mxu0 0.0
  %1356 = vmatprep.subr.mxu0 0.0
  %1357 = vmatpush1.xpose.msra.mxu0 0.0
  %1358 = vmatprep.subr.mxu0 0.0
  %1359 = vmatpush1.xpose.msra.mxu0 0.0
  %1360 = vmatprep.subr.mxu0 0.0
  %1361 = vmatpush1.xpose.msra.mxu0 0.0
  %1362 = vmatprep.subr.mxu0 0.0
  %1363 = vmatpush1.xpose.msra.mxu0 0.0
  %1364 = vmatprep.subr.mxu0 0.0
  %1365 = vmatpush1.xpose.msra.mxu0 0.0
  %1366 = vmatprep.subr.mxu0 0.0
  %1367 = vmatpush1.xpose.msra.mxu0 0.0
  %1368 = vmatprep.subr.mxu0 0.0
  %1369 = vmatpush1.xpose.msra.mxu0 0.0
  %1370 = vmatprep.subr.mxu0 0.0
  %1371 = vmatpush1.xpose.msra.mxu0 0.0
  %1372 = vmatprep.subr.mxu0 0.0
  %1373 = vmatpush1.xpose.msra.mxu0 0.0
  %1374 = vmatprep.subr.mxu0 0.0
  %1375 = vmatpush1.xpose.msra.mxu0 0.0
  %1376 = vmatprep.subr.mxu0 0.0
  %1377 = vmatpush1.xpose.msra.mxu0 0.0
  %1378 = vmatprep.subr.mxu0 0.0
  %1379 = vmatpush1.xpose.msra.mxu0 0.0
  %1380 = vmatprep.subr.mxu0 0.0
  %1381 = vmatpush1.xpose.msra.mxu0 0.0
  %1382 = vmatprep.subr.mxu0 0.0
  %1383 = vmatpush1.xpose.msra.mxu0 0.0
  %1384 = vmatprep.subr.mxu0 0.0
  %1385 = vmatpush1.xpose.msra.mxu0 0.0
  %1386 = vmatprep.subr.mxu0 0.0
  %1387 = vmatpush1.xpose.msra.mxu0 0.0
  %1388 = vmatprep.subr.mxu0 0.0
  %1389 = vmatpush1.xpose.msra.mxu0 0.0
  %1390 = vmatprep.subr.mxu0 0.0
  %1391 = vmatpush1.xpose.msra.mxu0 0.0
  %1392 = vmatprep.mubr.f32.mxu0 %v1323
  %1393 = vmatmul.mubr.f32.gmra.mrb[0].mxu0 %v1318
  %v1394 = vpop.f32.mrb[0].mxu0
  %v1395 = vadd.f32 %v1186, %v1394
  %v1396 = vpop.f32.mrb[0].mxu0
  %1397 = vmatprep.mubr.f32.mxu0 %v1326
  %1398 = vmatmul.mubr.f32.gmra.mrb[0].mxu0 %v1320
  %v1399 = vpop.f32.mrb[0].mxu0
  %v1400 = vadd.f32 %v1191, %v1399
  %v1401 = vpop.f32.mrb[0].mxu0
  %1402 = vdwg.mxu0
  %vm1403 = vcmp.ge.f32.partialorder %v1395, 0.0
  %vm1404 = vcmp.ge.f32.partialorder %v1400, 0.0
  %v1405 = vmul.f32 %v1395, 0.2
  %v1406 = vmul.f32 %v1400, 0.2
  %v1407 = vsel %vm1403, %v1395, %v1405
  %v1408 = vsel %vm1404, %v1400, %v1406
  %v1409 = vmul.f32 %v1407, 1.4142135
  %v1410 = vmul.f32 %v1408, 1.4142135
  %s1411 = scalar_lea.vmem %s13, 16
  %1412 = vst.msk [vmem:[%s1411] sm:$0xff] %vm943, %v1409
  %1413 = vst.msk [vmem:[%s1411 + $0x8] sm:$0xff] %vm943, %v1410
  // Predicated region
  $region50: #{psp_forward.5} parent=0 // pred_check
    _
  $region51: #{psp_forward.5} parent=0 // pred_check_branch
    %1415 = sbr.rel (0) target = $region53
  $region52: #{psp_forward.5} parent=0 // pred_region
    _
  $region53: #{psp_forward.5} parent=0 // pred_fallthru
    _
  // Predicated region
  $region54: #{psp_forward.5} parent=0 // pred_check
    _
  $region55: #{psp_forward.5} parent=0 // pred_check_branch
    %1417 = sbr.rel (0) target = $region57
  $region56: #{psp_forward.5} parent=0 // pred_region
    _
  $region57: #{psp_forward.5} parent=0 // pred_fallthru
    _
  // Predicated region
  $region58: #{psp_forward.5} parent=0 // pred_check
    _
  $region59: #{psp_forward.5} parent=0 // pred_check_branch
    %1419 = sbr.rel (0) target = $region61
  $region60: #{psp_forward.5} parent=0 // pred_region
    _
  $region61: #{psp_forward.5} parent=0 // pred_fallthru
    _
  // Predicated region
  $region62: #{psp_forward.5} parent=0 // pred_check
    _
  $region63: #{psp_forward.5} parent=0 // pred_check_branch
    %1421 = sbr.rel (0) target = $region65
  $region64: #{psp_forward.5} parent=0 // pred_region
    _
  $region65: #{psp_forward.5} parent=0 // pred_fallthru
    _

// kernel: psp_forward.6
$region0: #{psp_forward.6}
  #allocation0 [shape = 'u32[]', space=smem, size = 0x4, offset = 0x4, fixed_abs, tag = 'smem constant byte address 0x4 - core index']
  #allocation1 [shape = 'u32[144,128]{1,0:T(1,128)}', space=vmem, size = 0x12000, scoped, tag = 'internal scratch']
  %s0 = inlined_call_operand.vmem [shape: f32[2,32], index: 0, kind: input, shape index: {}]
  %s1 = inlined_call_operand.vmem [shape: f32[2,64,144], index: 1, kind: input, shape index: {}]
  %s2 = inlined_call_operand.vmem [shape: f32[32,144], index: 2, kind: input, shape index: {}]
  %s3 = inlined_call_operand.vmem [shape: f32[1,144], index: 3, kind: input, shape index: {}]
  %s4 = inlined_call_operand.vmem [shape: f32[16,144], index: 4, kind: input, shape index: {}]
  %s5 = inlined_call_operand.vmem [shape: f32[16,1], index: 5, kind: input, shape index: {}]
  %s6 = inlined_call_operand.vmem [shape: f32[2,16,64], index: 6, kind: output, shape index: {}]
  %s7 = sld [smem:[#allocation0]]
  $region34: #{psp_forward.6} parent=0
    _
  %s9 = ssub.s32 1, %s7
  %s10 = scalar_select 0, %s9, %s7
  // Predicated region
  $region2: #{psp_forward.6} parent=0 // pred_check
    _
  $region3: #{psp_forward.6} parent=0 // pred_check_branch
    %12 = sbr.rel (0) target = $region5
  $region4: #{psp_forward.6} parent=0 // pred_region
    _
  $region5: #{psp_forward.6} parent=0 // pred_fallthru
    _
  // Predicated region
  $region6: #{psp_forward.6} parent=0 // pred_check
    _
  $region7: #{psp_forward.6} parent=0 // pred_check_branch
    %14 = sbr.rel (0) target = $region9
  $region8: #{psp_forward.6} parent=0 // pred_region
    _
  $region9: #{psp_forward.6} parent=0 // pred_fallthru
    _
  // Predicated region
  $region10: #{psp_forward.6} parent=0 // pred_check
    _
  $region11: #{psp_forward.6} parent=0 // pred_check_branch
    %16 = sbr.rel (0) target = $region13
  $region12: #{psp_forward.6} parent=0 // pred_region
    _
  $region13: #{psp_forward.6} parent=0 // pred_fallthru
    _
  // Predicated region
  $region14: #{psp_forward.6} parent=0 // pred_check
    _
  $region15: #{psp_forward.6} parent=0 // pred_check_branch
    %18 = sbr.rel (0) target = $region17
  $region16: #{psp_forward.6} parent=0 // pred_region
    _
  $region17: #{psp_forward.6} parent=0 // pred_fallthru
    _
  // Predicated region
  $region18: #{psp_forward.6} parent=0 // pred_check
    _
  $region19: #{psp_forward.6} parent=0 // pred_check_branch
    %20 = sbr.rel (0) target = $region21
  $region20: #{psp_forward.6} parent=0 // pred_region
    _
  $region21: #{psp_forward.6} parent=0 // pred_fallthru
    _
  // Predicated region
  $region22: #{psp_forward.6} parent=0 // pred_check
    _
  $region23: #{psp_forward.6} parent=0 // pred_check_branch
    %22 = sbr.rel (0) target = $region25
  $region24: #{psp_forward.6} parent=0 // pred_region
    _
  $region25: #{psp_forward.6} parent=0 // pred_fallthru
    _
  %v23 = vld [vmem:[%s0] sm:$0x3]
  %v24 = vld [vmem:[%s2] sm:$0xff]
  %v25 = vld [vmem:[%s2 + $0x8] sm:$0xff]
  %v26 = vld [vmem:[%s2 + $0x10] sm:$0xff]
  %v27 = vld [vmem:[%s2 + $0x18] sm:$0xff]
  %v28 = vld [vmem:[%s2 + $0x20] sm:$0xff]
  %v29 = vld [vmem:[%s2 + $0x28] sm:$0xff]
  %v30 = vld [vmem:[%s2 + $0x30] sm:$0xff]
  %v31 = vld [vmem:[%s2 + $0x38] sm:$0xff]
  %v32 = vld [vmem:[%s3] sm:$0x3]
  %v34 = vlaneseq
  %v35 = vshrl.u32 %v34, 7
  %v36 = vsub.s32 0, %v35
  %v37 = vrot.slane %v32, %v36
  %v38 = vlaneseq
  %v39 = vshrl.u32 %v38, 7
  %v40 = vsub.s32 1, %v39
  %v41 = vrot.slane %v32, %v40
  %vm44 = vcmask 261120
  %v46 = vsel %vm44, %v23, 0
  %48 = vmatprep.subr.mxu0 %v25
  %49 = vmatpush1.msra.mxu0 %v24
  %50 = vmatprep.subr.mxu0 %v27
  %51 = vmatpush1.msra.mxu0 %v26
  %52 = vmatprep.subr.mxu0 %v29
  %53 = vmatpush1.msra.mxu0 %v28
  %54 = vmatprep.subr.mxu0 %v31
  %55 = vmatpush1.msra.mxu0 %v30
  %56 = vmatprep.subr.mxu0 0.0
  %57 = vmatpush1.msra.mxu0 0.0
  %58 = vmatprep.subr.mxu0 0.0
  %59 = vmatpush1.msra.mxu0 0.0
  %60 = vmatprep.subr.mxu0 0.0
  %61 = vmatpush1.msra.mxu0 0.0
  %62 = vmatprep.subr.mxu0 0.0
  %63 = vmatpush1.msra.mxu0 0.0
  %64 = vmatprep.subr.mxu0 0.0
  %65 = vmatpush1.msra.mxu0 0.0
  %66 = vmatprep.subr.mxu0 0.0
  %67 = vmatpush1.msra.mxu0 0.0
  %68 = vmatprep.subr.mxu0 0.0
  %69 = vmatpush1.msra.mxu0 0.0
  %70 = vmatprep.subr.mxu0 0.0
  %71 = vmatpush1.msra.mxu0 0.0
  %72 = vmatprep.subr.mxu0 0.0
  %73 = vmatpush1.msra.mxu0 0.0
  %74 = vmatprep.subr.mxu0 0.0
  %75 = vmatpush1.msra.mxu0 0.0
  %76 = vmatprep.subr.mxu0 0.0
  %77 = vmatpush1.msra.mxu0 0.0
  %78 = vmatprep.subr.mxu0 0.0
  %79 = vmatpush1.msra.mxu0 0.0
  %80 = vmatprep.subr.mxu0 0.0
  %81 = vmatpush1.msra.mxu0 0.0
  %82 = vmatprep.subr.mxu0 0.0
  %83 = vmatpush1.msra.mxu0 0.0
  %84 = vmatprep.subr.mxu0 0.0
  %85 = vmatpush1.msra.mxu0 0.0
  %86 = vmatprep.subr.mxu0 0.0
  %87 = vmatpush1.msra.mxu0 0.0
  %88 = vmatprep.subr.mxu0 0.0
  %89 = vmatpush1.msra.mxu0 0.0
  %90 = vmatprep.subr.mxu0 0.0
  %91 = vmatpush1.msra.mxu0 0.0
  %92 = vmatprep.subr.mxu0 0.0
  %93 = vmatpush1.msra.mxu0 0.0
  %94 = vmatprep.subr.mxu0 0.0
  %95 = vmatpush1.msra.mxu0 0.0
  %96 = vmatprep.subr.mxu0 0.0
  %97 = vmatpush1.msra.mxu0 0.0
  %98 = vmatprep.subr.mxu0 0.0
  %99 = vmatpush1.msra.mxu0 0.0
  %100 = vmatprep.subr.mxu0 0.0
  %101 = vmatpush1.msra.mxu0 0.0
  %102 = vmatprep.subr.mxu0 0.0
  %103 = vmatpush1.msra.mxu0 0.0
  %104 = vmatprep.subr.mxu0 0.0
  %105 = vmatpush1.msra.mxu0 0.0
  %106 = vmatprep.subr.mxu0 0.0
  %107 = vmatpush1.msra.mxu0 0.0
  %108 = vmatprep.subr.mxu0 0.0
  %109 = vmatpush1.msra.mxu0 0.0
  %110 = vmatprep.subr.mxu0 0.0
  %111 = vmatpush1.msra.mxu0 0.0
  %112 = vmatprep.mubr.f32.mxu0 0.0
  %113 = vmatmul.mubr.f32.gmra.mrb[0].mxu0 %v46
  %v114 = vpop.f32.mrb[0].mxu0
  %v115 = vadd.f32 %v37, %v114
  %v116 = vpop.f32.mrb[0].mxu0
  %v117 = vadd.f32 %v41, %v116
  %118 = vdwg.mxu0
  %v119 = vld [vmem:[%s4] sm:$0xff]
  %v120 = vld [vmem:[%s4 + $0x8] sm:$0xff]
  %v121 = vld [vmem:[%s4 + $0x10] sm:$0xff]
  %v122 = vld [vmem:[%s4 + $0x18] sm:$0xff]
  %v123 = vld [vmem:[%s5] sm:$0xff]
  %v124 = vld [vmem:[%s5 + $0x8] sm:$0xff]
  %v125 = vld [vmem:[%s1] sm:$0xff]
  %v126 = vld [vmem:[%s1 + $0x8] sm:$0xff]
  %v127 = vld [vmem:[%s1 + $0x10] sm:$0xff]
  %v128 = vld [vmem:[%s1 + $0x18] sm:$0xff]
  %v129 = vld [vmem:[%s1 + $0x20] sm:$0xff]
  %v130 = vld [vmem:[%s1 + $0x28] sm:$0xff]
  %v131 = vld [vmem:[%s1 + $0x30] sm:$0xff]
  %v132 = vld [vmem:[%s1 + $0x38] sm:$0xff]
  %v133 = vld [vmem:[%s1 + $0x40] sm:$0xff]
  %v134 = vld [vmem:[%s1 + $0x48] sm:$0xff]
  %v135 = vld [vmem:[%s1 + $0x50] sm:$0xff]
  %v136 = vld [vmem:[%s1 + $0x58] sm:$0xff]
  %v137 = vld [vmem:[%s1 + $0x60] sm:$0xff]
  %v138 = vld [vmem:[%s1 + $0x68] sm:$0xff]
  %v139 = vld [vmem:[%s1 + $0x70] sm:$0xff]
  %v140 = vld [vmem:[%s1 + $0x78] sm:$0xff]
  %v141 = vlaneseq
  %v142 = vshrl.u32 %v141, 7
  %v143 = vsub.s32 0, %v142
  %v144 = vrot.slane %v115, %v143
  %v145 = vlaneseq
  %v146 = vshrl.u32 %v145, 7
  %v147 = vsub.s32 0, %v146
  %v148 = vrot.slane %v117, %v147
  %v149 = vmul.f32 %v119, %v144
  %v150 = vmul.f32 %v120, %v148
  %v151 = vmul.f32 %v121, %v144
  %v152 = vmul.f32 %v122, %v148
  %v153 = vmul.f32 %v149, %v149
  %v154 = vmul.f32 %v150, %v150
  %v155 = vmul.f32 %v151, %v151
  %v156 = vmul.f32 %v152, %v152
  %vm157 = vcmask 130048
  %v158 = vsel %vm157, %v154, 0.0
  %v159 = vadd.f32 %v153, %v158
  %160 = vadd.xlane.f32.xlu0 %v159
  %v161 = vpop.xlane.xlu0 %160
  %v162 = vsel %vm157, %v156, 0.0
  %v163 = vadd.f32 %v155, %v162
  %164 = vadd.xlane.f32.xlu0 %v163
  %v165 = vpop.xlane.xlu0 %164
  %v166 = vadd.f32 %v161, 1e-08
  %v167 = vadd.f32 %v165, 1e-08
  %v168 = vrsqrt.pop %v166
  %v169 = vrsqrt.pop %v167
  %v170 = vmul.f32 %v149, %v168
  %v171 = vmul.f32 %v150, %v168
  %v172 = vmul.f32 %v151, %v169
  %v173 = vmul.f32 %v152, %v169
  %175 = vset.pattern.permute.xlu0 0
  %176 = vperm.xlu0 %175, %v123
  %v177 = vpop.permute.xlu0 %176
  %180 = vset.pattern.permute.xlu0 0
  %181 = vperm.xlu0 %180, %v124
  %v182 = vpop.permute.xlu0 %181
  %v185 = vsel %vm157, %v171, 0
  %v188 = vsel %vm157, %v173, 0
  %v191 = vsel %vm157, %v126, 0
  %v194 = vsel %vm157, %v128, 0
  %v197 = vsel %vm157, %v130, 0
  %v200 = vsel %vm157, %v132, 0
  %v203 = vsel %vm157, %v134, 0
  %v206 = vsel %vm157, %v136, 0
  %v209 = vsel %vm157, %v138, 0
  %v212 = vsel %vm157, %v140, 0
  %214 = vmatprep.subr.mxu0 %v191
  %215 = vmatpush1.xpose.msra.mxu0 %v125
  %216 = vmatprep.subr.mxu0 %v194
  %217 = vmatpush1.xpose.msra.mxu0 %v127
  %218 = vmatprep.subr.mxu0 %v197
  %219 = vmatpush1.xpose.msra.mxu0 %v129
  %220 = vmatprep.subr.mxu0 %v200
  %221 = vmatpush1.xpose.msra.mxu0 %v131
  %222 = vmatprep.subr.mxu0 %v203
  %223 = vmatpush1.xpose.msra.mxu0 %v133
  %224 = vmatprep.subr.mxu0 %v206
  %225 = vmatpush1.xpose.msra.mxu0 %v135
  %226 = vmatprep.subr.mxu0 %v209
  %227 = vmatpush1.xpose.msra.mxu0 %v137
  %228 = vmatprep.subr.mxu0 %v212
  %229 = vmatpush1.xpose.msra.mxu0 %v139
  %230 = vmatprep.subr.mxu0 0.0
  %231 = vmatpush1.xpose.msra.mxu0 0.0
  %232 = vmatprep.subr.mxu0 0.0
  %233 = vmatpush1.xpose.msra.mxu0 0.0
  %234 = vmatprep.subr.mxu0 0.0
  %235 = vmatpush1.xpose.msra.mxu0 0.0
  %236 = vmatprep.subr.mxu0 0.0
  %237 = vmatpush1.xpose.msra.mxu0 0.0
  %238 = vmatprep.subr.mxu0 0.0
  %239 = vmatpush1.xpose.msra.mxu0 0.0
  %240 = vmatprep.subr.mxu0 0.0
  %241 = vmatpush1.xpose.msra.mxu0 0.0
  %242 = vmatprep.subr.mxu0 0.0
  %243 = vmatpush1.xpose.msra.mxu0 0.0
  %244 = vmatprep.subr.mxu0 0.0
  %245 = vmatpush1.xpose.msra.mxu0 0.0
  %246 = vmatprep.subr.mxu0 0.0
  %247 = vmatpush1.xpose.msra.mxu0 0.0
  %248 = vmatprep.subr.mxu0 0.0
  %249 = vmatpush1.xpose.msra.mxu0 0.0
  %250 = vmatprep.subr.mxu0 0.0
  %251 = vmatpush1.xpose.msra.mxu0 0.0
  %252 = vmatprep.subr.mxu0 0.0
  %253 = vmatpush1.xpose.msra.mxu0 0.0
  %254 = vmatprep.subr.mxu0 0.0
  %255 = vmatpush1.xpose.msra.mxu0 0.0
  %256 = vmatprep.subr.mxu0 0.0
  %257 = vmatpush1.xpose.msra.mxu0 0.0
  %258 = vmatprep.subr.mxu0 0.0
  %259 = vmatpush1.xpose.msra.mxu0 0.0
  %260 = vmatprep.subr.mxu0 0.0
  %261 = vmatpush1.xpose.msra.mxu0 0.0
  %262 = vmatprep.subr.mxu0 0.0
  %263 = vmatpush1.xpose.msra.mxu0 0.0
  %264 = vmatprep.subr.mxu0 0.0
  %265 = vmatpush1.xpose.msra.mxu0 0.0
  %266 = vmatprep.subr.mxu0 0.0
  %267 = vmatpush1.xpose.msra.mxu0 0.0
  %268 = vmatprep.subr.mxu0 0.0
  %269 = vmatpush1.xpose.msra.mxu0 0.0
  %270 = vmatprep.subr.mxu0 0.0
  %271 = vmatpush1.xpose.msra.mxu0 0.0
  %272 = vmatprep.subr.mxu0 0.0
  %273 = vmatpush1.xpose.msra.mxu0 0.0
  %274 = vmatprep.subr.mxu0 0.0
  %275 = vmatpush1.xpose.msra.mxu0 0.0
  %276 = vmatprep.subr.mxu0 0.0
  %277 = vmatpush1.xpose.msra.mxu0 0.0
  %278 = vmatprep.mubr.f32.mxu0 %v185
  %279 = vmatmul.mubr.f32.gmra.mrb[0].mxu0 %v170
  %v280 = vpop.f32.mrb[0].mxu0
  %v281 = vadd.f32 %v177, %v280
  %v282 = vpop.f32.mrb[0].mxu0
  %283 = vmatprep.mubr.f32.mxu0 %v188
  %284 = vmatmul.mubr.f32.gmra.mrb[0].mxu0 %v172
  %v285 = vpop.f32.mrb[0].mxu0
  %v286 = vadd.f32 %v182, %v285
  %v287 = vpop.f32.mrb[0].mxu0
  %288 = vdwg.mxu0
  %vm289 = vcmp.ge.f32.partialorder %v281, 0.0
  %vm290 = vcmp.ge.f32.partialorder %v286, 0.0
  %v291 = vmul.f32 %v281, 0.2
  %v292 = vmul.f32 %v286, 0.2
  %v293 = vsel %vm289, %v281, %v291
  %v294 = vsel %vm290, %v286, %v292
  %v295 = vmul.f32 %v293, 1.4142135
  %v296 = vmul.f32 %v294, 1.4142135
  %vm297 = vcmask 523264
  %298 = vst.msk [vmem:[%s6] sm:$0xff] %vm297, %v295
  %299 = vst.msk [vmem:[%s6 + $0x8] sm:$0xff] %vm297, %v296
  %s300 = scalar_lea.vmem %s1, 128
  %v301 = vld [vmem:[%s300] sm:$0xff]
  %v302 = vld [vmem:[%s300 + $0x8] sm:$0xff]
  %v303 = vld [vmem:[%s300 + $0x10] sm:$0xff]
  %v304 = vld [vmem:[%s300 + $0x18] sm:$0xff]
  %v305 = vld [vmem:[%s300 + $0x20] sm:$0xff]
  %v306 = vld [vmem:[%s300 + $0x28] sm:$0xff]
  %v307 = vld [vmem:[%s300 + $0x30] sm:$0xff]
  %v308 = vld [vmem:[%s300 + $0x38] sm:$0xff]
  %v309 = vld [vmem:[%s300 + $0x40] sm:$0xff]
  %v310 = vld [vmem:[%s300 + $0x48] sm:$0xff]
  %v311 = vld [vmem:[%s300 + $0x50] sm:$0xff]
  %v312 = vld [vmem:[%s300 + $0x58] sm:$0xff]
  %v313 = vld [vmem:[%s300 + $0x60] sm:$0xff]
  %v314 = vld [vmem:[%s300 + $0x68] sm:$0xff]
  %v315 = vld [vmem:[%s300 + $0x70] sm:$0xff]
  %v316 = vld [vmem:[%s300 + $0x78] sm:$0xff]
  %v317 = vlaneseq
  %v318 = vshrl.u32 %v317, 7
  %v319 = vsub.s32 1, %v318
  %v320 = vrot.slane %v115, %v319
  %v321 = vlaneseq
  %v322 = vshrl.u32 %v321, 7
  %v323 = vsub.s32 1, %v322
  %v324 = vrot.slane %v117, %v323
  %v325 = vmul.f32 %v119, %v320
  %v326 = vmul.f32 %v120, %v324
  %v327 = vmul.f32 %v121, %v320
  %v328 = vmul.f32 %v122, %v324
  %v329 = vmul.f32 %v325, %v325
  %v330 = vmul.f32 %v326, %v326
  %v331 = vmul.f32 %v327, %v327
  %v332 = vmul.f32 %v328, %v328
  %v333 = vsel %vm157, %v330, 0.0
  %v334 = vadd.f32 %v329, %v333
  %335 = vadd.xlane.f32.xlu0 %v334
  %v336 = vpop.xlane.xlu0 %335
  %v337 = vsel %vm157, %v332, 0.0
  %v338 = vadd.f32 %v331, %v337
  %339 = vadd.xlane.f32.xlu0 %v338
  %v340 = vpop.xlane.xlu0 %339
  %v341 = vadd.f32 %v336, 1e-08
  %v342 = vadd.f32 %v340, 1e-08
  %v343 = vrsqrt.pop %v341
  %v344 = vrsqrt.pop %v342
  %v345 = vmul.f32 %v325, %v343
  %v346 = vmul.f32 %v326, %v343
  %v347 = vmul.f32 %v327, %v344
  %v348 = vmul.f32 %v328, %v344
  %v350 = vsel %vm157, %v346, 0
  %v353 = vsel %vm157, %v348, 0
  %v356 = vsel %vm157, %v302, 0
  %v359 = vsel %vm157, %v304, 0
  %v362 = vsel %vm157, %v306, 0
  %v365 = vsel %vm157, %v308, 0
  %v368 = vsel %vm157, %v310, 0
  %v371 = vsel %vm157, %v312, 0
  %v374 = vsel %vm157, %v314, 0
  %v377 = vsel %vm157, %v316, 0
  %379 = vmatprep.subr.mxu0 %v356
  %380 = vmatpush1.xpose.msra.mxu0 %v301
  %381 = vmatprep.subr.mxu0 %v359
  %382 = vmatpush1.xpose.msra.mxu0 %v303
  %383 = vmatprep.subr.mxu0 %v362
  %384 = vmatpush1.xpose.msra.mxu0 %v305
  %385 = vmatprep.subr.mxu0 %v365
  %386 = vmatpush1.xpose.msra.mxu0 %v307
  %387 = vmatprep.subr.mxu0 %v368
  %388 = vmatpush1.xpose.msra.mxu0 %v309
  %389 = vmatprep.subr.mxu0 %v371
  %390 = vmatpush1.xpose.msra.mxu0 %v311
  %391 = vmatprep.subr.mxu0 %v374
  %392 = vmatpush1.xpose.msra.mxu0 %v313
  %393 = vmatprep.subr.mxu0 %v377
  %394 = vmatpush1.xpose.msra.mxu0 %v315
  %395 = vmatprep.subr.mxu0 0.0
  %396 = vmatpush1.xpose.msra.mxu0 0.0
  %397 = vmatprep.subr.mxu0 0.0
  %398 = vmatpush1.xpose.msra.mxu0 0.0
  %399 = vmatprep.subr.mxu0 0.0
  %400 = vmatpush1.xpose.msra.mxu0 0.0
  %401 = vmatprep.subr.mxu0 0.0
  %402 = vmatpush1.xpose.msra.mxu0 0.0
  %403 = vmatprep.subr.mxu0 0.0
  %404 = vmatpush1.xpose.msra.mxu0 0.0
  %405 = vmatprep.subr.mxu0 0.0
  %406 = vmatpush1.xpose.msra.mxu0 0.0
  %407 = vmatprep.subr.mxu0 0.0
  %408 = vmatpush1.xpose.msra.mxu0 0.0
  %409 = vmatprep.subr.mxu0 0.0
  %410 = vmatpush1.xpose.msra.mxu0 0.0
  %411 = vmatprep.subr.mxu0 0.0
  %412 = vmatpush1.xpose.msra.mxu0 0.0
  %413 = vmatprep.subr.mxu0 0.0
  %414 = vmatpush1.xpose.msra.mxu0 0.0
  %415 = vmatprep.subr.mxu0 0.0
  %416 = vmatpush1.xpose.msra.mxu0 0.0
  %417 = vmatprep.subr.mxu0 0.0
  %418 = vmatpush1.xpose.msra.mxu0 0.0
  %419 = vmatprep.subr.mxu0 0.0
  %420 = vmatpush1.xpose.msra.mxu0 0.0
  %421 = vmatprep.subr.mxu0 0.0
  %422 = vmatpush1.xpose.msra.mxu0 0.0
  %423 = vmatprep.subr.mxu0 0.0
  %424 = vmatpush1.xpose.msra.mxu0 0.0
  %425 = vmatprep.subr.mxu0 0.0
  %426 = vmatpush1.xpose.msra.mxu0 0.0
  %427 = vmatprep.subr.mxu0 0.0
  %428 = vmatpush1.xpose.msra.mxu0 0.0
  %429 = vmatprep.subr.mxu0 0.0
  %430 = vmatpush1.xpose.msra.mxu0 0.0
  %431 = vmatprep.subr.mxu0 0.0
  %432 = vmatpush1.xpose.msra.mxu0 0.0
  %433 = vmatprep.subr.mxu0 0.0
  %434 = vmatpush1.xpose.msra.mxu0 0.0
  %435 = vmatprep.subr.mxu0 0.0
  %436 = vmatpush1.xpose.msra.mxu0 0.0
  %437 = vmatprep.subr.mxu0 0.0
  %438 = vmatpush1.xpose.msra.mxu0 0.0
  %439 = vmatprep.subr.mxu0 0.0
  %440 = vmatpush1.xpose.msra.mxu0 0.0
  %441 = vmatprep.subr.mxu0 0.0
  %442 = vmatpush1.xpose.msra.mxu0 0.0
  %443 = vmatprep.mubr.f32.mxu0 %v350
  %444 = vmatmul.mubr.f32.gmra.mrb[0].mxu0 %v345
  %v445 = vpop.f32.mrb[0].mxu0
  %v446 = vadd.f32 %v177, %v445
  %v447 = vpop.f32.mrb[0].mxu0
  %448 = vmatprep.mubr.f32.mxu0 %v353
  %449 = vmatmul.mubr.f32.gmra.mrb[0].mxu0 %v347
  %v450 = vpop.f32.mrb[0].mxu0
  %v451 = vadd.f32 %v182, %v450
  %v452 = vpop.f32.mrb[0].mxu0
  %453 = vdwg.mxu0
  %vm454 = vcmp.ge.f32.partialorder %v446, 0.0
  %vm455 = vcmp.ge.f32.partialorder %v451, 0.0
  %v456 = vmul.f32 %v446, 0.2
  %v457 = vmul.f32 %v451, 0.2
  %v458 = vsel %vm454, %v446, %v456
  %v459 = vsel %vm455, %v451, %v457
  %v460 = vmul.f32 %v458, 1.4142135
  %v461 = vmul.f32 %v459, 1.4142135
  %s462 = scalar_lea.vmem %s6, 16
  %463 = vst.msk [vmem:[%s462] sm:$0xff] %vm297, %v460
  %464 = vst.msk [vmem:[%s462 + $0x8] sm:$0xff] %vm297, %v461
  // Predicated region
  $region26: #{psp_forward.6} parent=0 // pred_check
    _
  $region27: #{psp_forward.6} parent=0 // pred_check_branch
    %466 = sbr.rel (0) target = $region29
  $region28: #{psp_forward.6} parent=0 // pred_region
    _
  $region29: #{psp_forward.6} parent=0 // pred_fallthru
    _
  // Predicated region
  $region30: #{psp_forward.6} parent=0 // pred_check
    _
  $region31: #{psp_forward.6} parent=0 // pred_check_branch
    %468 = sbr.rel (0) target = $region33
  $region32: #{psp_forward.6} parent=0 // pred_region
    _
  $region33: #{psp_forward.6} parent=0 // pred_fallthru
    _

// kernel: psp_forward.8
$region0: #{psp_forward.8}
  #allocation0 [shape = 'u32[]', space=smem, size = 0x4, offset = 0x4, fixed_abs, tag = 'smem constant byte address 0x4 - core index']
  #allocation1 [shape = 'u32[144,128]{1,0:T(1,128)}', space=vmem, size = 0x12000, scoped, tag = 'internal scratch']
  %s0 = inlined_call_operand.vmem [shape: f32[2,32], index: 0, kind: input, shape index: {}]
  %s1 = inlined_call_operand.vmem [shape: f32[2,256,144], index: 1, kind: input, shape index: {}]
  %s2 = inlined_call_operand.vmem [shape: f32[32,144], index: 2, kind: input, shape index: {}]
  %s3 = inlined_call_operand.vmem [shape: f32[1,144], index: 3, kind: input, shape index: {}]
  %s4 = inlined_call_operand.vmem [shape: f32[16,144], index: 4, kind: input, shape index: {}]
  %s5 = inlined_call_operand.vmem [shape: f32[16,1], index: 5, kind: input, shape index: {}]
  %s6 = inlined_call_operand.vmem [shape: f32[2,16,256], index: 6, kind: output, shape index: {}]
  %s7 = sld [smem:[#allocation0]]
  $region34: #{psp_forward.8} parent=0
    _
  %s9 = ssub.s32 1, %s7
  %s10 = scalar_select 0, %s9, %s7
  // Predicated region
  $region2: #{psp_forward.8} parent=0 // pred_check
    _
  $region3: #{psp_forward.8} parent=0 // pred_check_branch
    %12 = sbr.rel (0) target = $region5
  $region4: #{psp_forward.8} parent=0 // pred_region
    _
  $region5: #{psp_forward.8} parent=0 // pred_fallthru
    _
  // Predicated region
  $region6: #{psp_forward.8} parent=0 // pred_check
    _
  $region7: #{psp_forward.8} parent=0 // pred_check_branch
    %14 = sbr.rel (0) target = $region9
  $region8: #{psp_forward.8} parent=0 // pred_region
    _
  $region9: #{psp_forward.8} parent=0 // pred_fallthru
    _
  // Predicated region
  $region10: #{psp_forward.8} parent=0 // pred_check
    _
  $region11: #{psp_forward.8} parent=0 // pred_check_branch
    %16 = sbr.rel (0) target = $region13
  $region12: #{psp_forward.8} parent=0 // pred_region
    _
  $region13: #{psp_forward.8} parent=0 // pred_fallthru
    _
  // Predicated region
  $region14: #{psp_forward.8} parent=0 // pred_check
    _
  $region15: #{psp_forward.8} parent=0 // pred_check_branch
    %18 = sbr.rel (0) target = $region17
  $region16: #{psp_forward.8} parent=0 // pred_region
    _
  $region17: #{psp_forward.8} parent=0 // pred_fallthru
    _
  // Predicated region
  $region18: #{psp_forward.8} parent=0 // pred_check
    _
  $region19: #{psp_forward.8} parent=0 // pred_check_branch
    %20 = sbr.rel (0) target = $region21
  $region20: #{psp_forward.8} parent=0 // pred_region
    _
  $region21: #{psp_forward.8} parent=0 // pred_fallthru
    _
  // Predicated region
  $region22: #{psp_forward.8} parent=0 // pred_check
    _
  $region23: #{psp_forward.8} parent=0 // pred_check_branch
    %22 = sbr.rel (0) target = $region25
  $region24: #{psp_forward.8} parent=0 // pred_region
    _
  $region25: #{psp_forward.8} parent=0 // pred_fallthru
    _
  %v23 = vld [vmem:[%s0] sm:$0x3]
  %v24 = vld [vmem:[%s2] sm:$0xff]
  %v25 = vld [vmem:[%s2 + $0x8] sm:$0xff]
  %v26 = vld [vmem:[%s2 + $0x10] sm:$0xff]
  %v27 = vld [vmem:[%s2 + $0x18] sm:$0xff]
  %v28 = vld [vmem:[%s2 + $0x20] sm:$0xff]
  %v29 = vld [vmem:[%s2 + $0x28] sm:$0xff]
  %v30 = vld [vmem:[%s2 + $0x30] sm:$0xff]
  %v31 = vld [vmem:[%s2 + $0x38] sm:$0xff]
  %v32 = vld [vmem:[%s3] sm:$0x3]
  %v34 = vlaneseq
  %v35 = vshrl.u32 %v34, 7
  %v36 = vsub.s32 0, %v35
  %v37 = vrot.slane %v32, %v36
  %v38 = vlaneseq
  %v39 = vshrl.u32 %v38, 7
  %v40 = vsub.s32 1, %v39
  %v41 = vrot.slane %v32, %v40
  %vm44 = vcmask 261120
  %v46 = vsel %vm44, %v23, 0
  %48 = vmatprep.subr.mxu0 %v25
  %49 = vmatpush1.msra.mxu0 %v24
  %50 = vmatprep.subr.mxu0 %v27
  %51 = vmatpush1.msra.mxu0 %v26
  %52 = vmatprep.subr.mxu0 %v29
  %53 = vmatpush1.msra.mxu0 %v28
  %54 = vmatprep.subr.mxu0 %v31
  %55 = vmatpush1.msra.mxu0 %v30
  %56 = vmatprep.subr.mxu0 0.0
  %57 = vmatpush1.msra.mxu0 0.0
  %58 = vmatprep.subr.mxu0 0.0
  %59 = vmatpush1.msra.mxu0 0.0
  %60 = vmatprep.subr.mxu0 0.0
  %61 = vmatpush1.msra.mxu0 0.0
  %62 = vmatprep.subr.mxu0 0.0
  %63 = vmatpush1.msra.mxu0 0.0
  %64 = vmatprep.subr.mxu0 0.0
  %65 = vmatpush1.msra.mxu0 0.0
  %66 = vmatprep.subr.mxu0 0.0
  %67 = vmatpush1.msra.mxu0 0.0
  %68 = vmatprep.subr.mxu0 0.0
  %69 = vmatpush1.msra.mxu0 0.0
  %70 = vmatprep.subr.mxu0 0.0
  %71 = vmatpush1.msra.mxu0 0.0
  %72 = vmatprep.subr.mxu0 0.0
  %73 = vmatpush1.msra.mxu0 0.0
  %74 = vmatprep.subr.mxu0 0.0
  %75 = vmatpush1.msra.mxu0 0.0
  %76 = vmatprep.subr.mxu0 0.0
  %77 = vmatpush1.msra.mxu0 0.0
  %78 = vmatprep.subr.mxu0 0.0
  %79 = vmatpush1.msra.mxu0 0.0
  %80 = vmatprep.subr.mxu0 0.0
  %81 = vmatpush1.msra.mxu0 0.0
  %82 = vmatprep.subr.mxu0 0.0
  %83 = vmatpush1.msra.mxu0 0.0
  %84 = vmatprep.subr.mxu0 0.0
  %85 = vmatpush1.msra.mxu0 0.0
  %86 = vmatprep.subr.mxu0 0.0
  %87 = vmatpush1.msra.mxu0 0.0
  %88 = vmatprep.subr.mxu0 0.0
  %89 = vmatpush1.msra.mxu0 0.0
  %90 = vmatprep.subr.mxu0 0.0
  %91 = vmatpush1.msra.mxu0 0.0
  %92 = vmatprep.subr.mxu0 0.0
  %93 = vmatpush1.msra.mxu0 0.0
  %94 = vmatprep.subr.mxu0 0.0
  %95 = vmatpush1.msra.mxu0 0.0
  %96 = vmatprep.subr.mxu0 0.0
  %97 = vmatpush1.msra.mxu0 0.0
  %98 = vmatprep.subr.mxu0 0.0
  %99 = vmatpush1.msra.mxu0 0.0
  %100 = vmatprep.subr.mxu0 0.0
  %101 = vmatpush1.msra.mxu0 0.0
  %102 = vmatprep.subr.mxu0 0.0
  %103 = vmatpush1.msra.mxu0 0.0
  %104 = vmatprep.subr.mxu0 0.0
  %105 = vmatpush1.msra.mxu0 0.0
  %106 = vmatprep.subr.mxu0 0.0
  %107 = vmatpush1.msra.mxu0 0.0
  %108 = vmatprep.subr.mxu0 0.0
  %109 = vmatpush1.msra.mxu0 0.0
  %110 = vmatprep.subr.mxu0 0.0
  %111 = vmatpush1.msra.mxu0 0.0
  %112 = vmatprep.mubr.f32.mxu0 0.0
  %113 = vmatmul.mubr.f32.gmra.mrb[0].mxu0 %v46
  %v114 = vpop.f32.mrb[0].mxu0
  %v115 = vadd.f32 %v37, %v114
  %v116 = vpop.f32.mrb[0].mxu0
  %v117 = vadd.f32 %v41, %v116
  %118 = vdwg.mxu0
  %v119 = vld [vmem:[%s4] sm:$0xff]
  %v120 = vld [vmem:[%s4 + $0x8] sm:$0xff]
  %v121 = vld [vmem:[%s4 + $0x10] sm:$0xff]
  %v122 = vld [vmem:[%s4 + $0x18] sm:$0xff]
  %v123 = vld [vmem:[%s5] sm:$0xff]
  %v124 = vld [vmem:[%s5 + $0x8] sm:$0xff]
  %v125 = vld [vmem:[%s1] sm:$0xff]
  %v126 = vld [vmem:[%s1 + $0x8] sm:$0xff]
  %v127 = vld [vmem:[%s1 + $0x10] sm:$0xff]
  %v128 = vld [vmem:[%s1 + $0x18] sm:$0xff]
  %v129 = vld [vmem:[%s1 + $0x20] sm:$0xff]
  %v130 = vld [vmem:[%s1 + $0x28] sm:$0xff]
  %v131 = vld [vmem:[%s1 + $0x30] sm:$0xff]
  %v132 = vld [vmem:[%s1 + $0x38] sm:$0xff]
  %v133 = vld [vmem:[%s1 + $0x40] sm:$0xff]
  %v134 = vld [vmem:[%s1 + $0x48] sm:$0xff]
  %v135 = vld [vmem:[%s1 + $0x50] sm:$0xff]
  %v136 = vld [vmem:[%s1 + $0x58] sm:$0xff]
  %v137 = vld [vmem:[%s1 + $0x60] sm:$0xff]
  %v138 = vld [vmem:[%s1 + $0x68] sm:$0xff]
  %v139 = vld [vmem:[%s1 + $0x70] sm:$0xff]
  %v140 = vld [vmem:[%s1 + $0x78] sm:$0xff]
  %v141 = vld [vmem:[%s1 + $0x80] sm:$0xff]
  %v142 = vld [vmem:[%s1 + $0x88] sm:$0xff]
  %v143 = vld [vmem:[%s1 + $0x90] sm:$0xff]
  %v144 = vld [vmem:[%s1 + $0x98] sm:$0xff]
  %v145 = vld [vmem:[%s1 + $0xa0] sm:$0xff]
  %v146 = vld [vmem:[%s1 + $0xa8] sm:$0xff]
  %v147 = vld [vmem:[%s1 + $0xb0] sm:$0xff]
  %v148 = vld [vmem:[%s1 + $0xb8] sm:$0xff]
  %v149 = vld [vmem:[%s1 + $0xc0] sm:$0xff]
  %v150 = vld [vmem:[%s1 + $0xc8] sm:$0xff]
  %v151 = vld [vmem:[%s1 + $0xd0] sm:$0xff]
  %v152 = vld [vmem:[%s1 + $0xd8] sm:$0xff]
  %v153 = vld [vmem:[%s1 + $0xe0] sm:$0xff]
  %v154 = vld [vmem:[%s1 + $0xe8] sm:$0xff]
  %v155 = vld [vmem:[%s1 + $0xf0] sm:$0xff]
  %v156 = vld [vmem:[%s1 + $0xf8] sm:$0xff]
  %v157 = vld [vmem:[%s1 + $0x100] sm:$0xff]
  %v158 = vld [vmem:[%s1 + $0x108] sm:$0xff]
  %v159 = vld [vmem:[%s1 + $0x110] sm:$0xff]
  %v160 = vld [vmem:[%s1 + $0x118] sm:$0xff]
  %v161 = vld [vmem:[%s1 + $0x120] sm:$0xff]
  %v162 = vld [vmem:[%s1 + $0x128] sm:$0xff]
  %v163 = vld [vmem:[%s1 + $0x130] sm:$0xff]
  %v164 = vld [vmem:[%s1 + $0x138] sm:$0xff]
  %v165 = vld [vmem:[%s1 + $0x140] sm:$0xff]
  %v166 = vld [vmem:[%s1 + $0x148] sm:$0xff]
  %v167 = vld [vmem:[%s1 + $0x150] sm:$0xff]
  %v168 = vld [vmem:[%s1 + $0x158] sm:$0xff]
  %v169 = vld [vmem:[%s1 + $0x160] sm:$0xff]
  %v170 = vld [vmem:[%s1 + $0x168] sm:$0xff]
  %v171 = vld [vmem:[%s1 + $0x170] sm:$0xff]
  %v172 = vld [vmem:[%s1 + $0x178] sm:$0xff]
  %v173 = vld [vmem:[%s1 + $0x180] sm:$0xff]
  %v174 = vld [vmem:[%s1 + $0x188] sm:$0xff]
  %v175 = vld [vmem:[%s1 + $0x190] sm:$0xff]
  %v176 = vld [vmem:[%s1 + $0x198] sm:$0xff]
  %v177 = vld [vmem:[%s1 + $0x1a0] sm:$0xff]
  %v178 = vld [vmem:[%s1 + $0x1a8] sm:$0xff]
  %v179 = vld [vmem:[%s1 + $0x1b0] sm:$0xff]
  %v180 = vld [vmem:[%s1 + $0x1b8] sm:$0xff]
  %v181 = vld [vmem:[%s1 + $0x1c0] sm:$0xff]
  %v182 = vld [vmem:[%s1 + $0x1c8] sm:$0xff]
  %v183 = vld [vmem:[%s1 + $0x1d0] sm:$0xff]
  %v184 = vld [vmem:[%s1 + $0x1d8] sm:$0xff]
  %v185 = vld [vmem:[%s1 + $0x1e0] sm:$0xff]
  %v186 = vld [vmem:[%s1 + $0x1e8] sm:$0xff]
  %v187 = vld [vmem:[%s1 + $0x1f0] sm:$0xff]
  %v188 = vld [vmem:[%s1 + $0x1f8] sm:$0xff]
  %v189 = vlaneseq
  %v190 = vshrl.u32 %v189, 7
  %v191 = vsub.s32 0, %v190
  %v192 = vrot.slane %v115, %v191
  %v193 = vlaneseq
  %v194 = vshrl.u32 %v193, 7
  %v195 = vsub.s32 0, %v194
  %v196 = vrot.slane %v117, %v195
  %v197 = vmul.f32 %v119, %v192
  %v198 = vmul.f32 %v120, %v196
  %v199 = vmul.f32 %v121, %v192
  %v200 = vmul.f32 %v122, %v196
  %v201 = vmul.f32 %v197, %v197
  %v202 = vmul.f32 %v198, %v198
  %v203 = vmul.f32 %v199, %v199
  %v204 = vmul.f32 %v200, %v200
  %vm205 = vcmask 130048
  %v206 = vsel %vm205, %v202, 0.0
  %v207 = vadd.f32 %v201, %v206
  %208 = vadd.xlane.f32.xlu0 %v207
  %v209 = vpop.xlane.xlu0 %208
  %v210 = vsel %vm205, %v204, 0.0
  %v211 = vadd.f32 %v203, %v210
  %212 = vadd.xlane.f32.xlu0 %v211
  %v213 = vpop.xlane.xlu0 %212
  %v214 = vadd.f32 %v209, 1e-08
  %v215 = vadd.f32 %v213, 1e-08
  %v216 = vrsqrt.pop %v214
  %v217 = vrsqrt.pop %v215
  %v218 = vmul.f32 %v197, %v216
  %v219 = vmul.f32 %v198, %v216
  %v220 = vmul.f32 %v199, %v217
  %v221 = vmul.f32 %v200, %v217
  %223 = vset.pattern.permute.xlu0 0
  %224 = vperm.xlu0 %223, %v123
  %v225 = vpop.permute.xlu0 %224
  %228 = vset.pattern.permute.xlu0 0
  %229 = vperm.xlu0 %228, %v124
  %v230 = vpop.permute.xlu0 %229
  %v233 = vsel %vm205, %v219, 0
  %v236 = vsel %vm205, %v221, 0
  %v239 = vsel %vm205, %v126, 0
  %v242 = vsel %vm205, %v128, 0
  %v245 = vsel %vm205, %v130, 0
  %v248 = vsel %vm205, %v132, 0
  %v251 = vsel %vm205, %v134, 0
  %v254 = vsel %vm205, %v136, 0
  %v257 = vsel %vm205, %v138, 0
  %v260 = vsel %vm205, %v140, 0
  %v263 = vsel %vm205, %v142, 0
  %v266 = vsel %vm205, %v144, 0
  %v269 = vsel %vm205, %v146, 0
  %v272 = vsel %vm205, %v148, 0
  %v275 = vsel %vm205, %v150, 0
  %v278 = vsel %vm205, %v152, 0
  %v281 = vsel %vm205, %v154, 0
  %v284 = vsel %vm205, %v156, 0
  %v287 = vsel %vm205, %v158, 0
  %v290 = vsel %vm205, %v160, 0
  %v293 = vsel %vm205, %v162, 0
  %v296 = vsel %vm205, %v164, 0
  %v299 = vsel %vm205, %v166, 0
  %v302 = vsel %vm205, %v168, 0
  %v305 = vsel %vm205, %v170, 0
  %v308 = vsel %vm205, %v172, 0
  %v311 = vsel %vm205, %v174, 0
  %v314 = vsel %vm205, %v176, 0
  %v317 = vsel %vm205, %v178, 0
  %v320 = vsel %vm205, %v180, 0
  %v323 = vsel %vm205, %v182, 0
  %v326 = vsel %vm205, %v184, 0
  %v329 = vsel %vm205, %v186, 0
  %v332 = vsel %vm205, %v188, 0
  %334 = vmatprep.subr.mxu0 %v239
  %335 = vmatpush1.xpose.msra.mxu0 %v125
  %336 = vmatprep.subr.mxu0 %v242
  %337 = vmatpush1.xpose.msra.mxu0 %v127
  %338 = vmatprep.subr.mxu0 %v245
  %339 = vmatpush1.xpose.msra.mxu0 %v129
  %340 = vmatprep.subr.mxu0 %v248
  %341 = vmatpush1.xpose.msra.mxu0 %v131
  %342 = vmatprep.subr.mxu0 %v251
  %343 = vmatpush1.xpose.msra.mxu0 %v133
  %344 = vmatprep.subr.mxu0 %v254
  %345 = vmatpush1.xpose.msra.mxu0 %v135
  %346 = vmatprep.subr.mxu0 %v257
  %347 = vmatpush1.xpose.msra.mxu0 %v137
  %348 = vmatprep.subr.mxu0 %v260
  %349 = vmatpush1.xpose.msra.mxu0 %v139
  %350 = vmatprep.subr.mxu0 %v263
  %351 = vmatpush1.xpose.msra.mxu0 %v141
  %352 = vmatprep.subr.mxu0 %v266
  %353 = vmatpush1.xpose.msra.mxu0 %v143
  %354 = vmatprep.subr.mxu0 %v269
  %355 = vmatpush1.xpose.msra.mxu0 %v145
  %356 = vmatprep.subr.mxu0 %v272
  %357 = vmatpush1.xpose.msra.mxu0 %v147
  %358 = vmatprep.subr.mxu0 %v275
  %359 = vmatpush1.xpose.msra.mxu0 %v149
  %360 = vmatprep.subr.mxu0 %v278
  %361 = vmatpush1.xpose.msra.mxu0 %v151
  %362 = vmatprep.subr.mxu0 %v281
  %363 = vmatpush1.xpose.msra.mxu0 %v153
  %364 = vmatprep.subr.mxu0 %v284
  %365 = vmatpush1.xpose.msra.mxu0 %v155
  %366 = vmatprep.subr.mxu0 %v287
  %367 = vmatpush1.xpose.msra.mxu0 %v157
  %368 = vmatprep.subr.mxu0 %v290
  %369 = vmatpush1.xpose.msra.mxu0 %v159
  %370 = vmatprep.subr.mxu0 %v293
  %371 = vmatpush1.xpose.msra.mxu0 %v161
  %372 = vmatprep.subr.mxu0 %v296
  %373 = vmatpush1.xpose.msra.mxu0 %v163
  %374 = vmatprep.subr.mxu0 %v299
  %375 = vmatpush1.xpose.msra.mxu0 %v165
  %376 = vmatprep.subr.mxu0 %v302
  %377 = vmatpush1.xpose.msra.mxu0 %v167
  %378 = vmatprep.subr.mxu0 %v305
  %379 = vmatpush1.xpose.msra.mxu0 %v169
  %380 = vmatprep.subr.mxu0 %v308
  %381 = vmatpush1.xpose.msra.mxu0 %v171
  %382 = vmatprep.subr.mxu0 %v311
  %383 = vmatpush1.xpose.msra.mxu0 %v173
  %384 = vmatprep.subr.mxu0 %v314
  %385 = vmatpush1.xpose.msra.mxu0 %v175
  %386 = vmatprep.subr.mxu0 %v317
  %387 = vmatpush1.xpose.msra.mxu0 %v177
  %388 = vmatprep.subr.mxu0 %v320
  %389 = vmatpush1.xpose.msra.mxu0 %v179
  %390 = vmatprep.subr.mxu0 %v323
  %391 = vmatpush1.xpose.msra.mxu0 %v181
  %392 = vmatprep.subr.mxu0 %v326
  %393 = vmatpush1.xpose.msra.mxu0 %v183
  %394 = vmatprep.subr.mxu0 %v329
  %395 = vmatpush1.xpose.msra.mxu0 %v185
  %396 = vmatprep.subr.mxu0 %v332
  %397 = vmatpush1.xpose.msra.mxu0 %v187
  %398 = vmatprep.mubr.f32.mxu0 %v233
  %399 = vmatmul.mubr.f32.gmra.mrb[0].mxu0 %v218
  %v400 = vpop.f32.mrb[0].mxu0
  %v401 = vadd.f32 %v225, %v400
  %v402 = vpop.f32.mrb[0].mxu0
  %v403 = vadd.f32 %v225, %v402
  %404 = vmatprep.mubr.f32.mxu0 %v236
  %405 = vmatmul.mubr.f32.gmra.mrb[0].mxu0 %v220
  %v406 = vpop.f32.mrb[0].mxu0
  %v407 = vadd.f32 %v230, %v406
  %v408 = vpop.f32.mrb[0].mxu0
  %v409 = vadd.f32 %v230, %v408
  %410 = vdwg.mxu0
  %vm411 = vcmp.ge.f32.partialorder %v401, 0.0
  %vm412 = vcmp.ge.f32.partialorder %v403, 0.0
  %vm413 = vcmp.ge.f32.partialorder %v407, 0.0
  %vm414 = vcmp.ge.f32.partialorder %v409, 0.0
  %v415 = vmul.f32 %v401, 0.2
  %v416 = vmul.f32 %v403, 0.2
  %v417 = vmul.f32 %v407, 0.2
  %v418 = vmul.f32 %v409, 0.2
  %v419 = vsel %vm411, %v401, %v415
  %v420 = vsel %vm412, %v403, %v416
  %v421 = vsel %vm413, %v407, %v417
  %v422 = vsel %vm414, %v409, %v418
  %v423 = vmul.f32 %v419, 1.4142135
  %v424 = vmul.f32 %v420, 1.4142135
  %v425 = vmul.f32 %v421, 1.4142135
  %v426 = vmul.f32 %v422, 1.4142135
  %427 = vst [vmem:[%s6] sm:$0xff] %v423
  %428 = vst [vmem:[%s6 + $0x8] sm:$0xff] %v424
  %429 = vst [vmem:[%s6 + $0x10] sm:$0xff] %v425
  %430 = vst [vmem:[%s6 + $0x18] sm:$0xff] %v426
  %s431 = scalar_lea.vmem %s1, 512
  %v432 = vld [vmem:[%s431] sm:$0xff]
  %v433 = vld [vmem:[%s431 + $0x8] sm:$0xff]
  %v434 = vld [vmem:[%s431 + $0x10] sm:$0xff]
  %v435 = vld [vmem:[%s431 + $0x18] sm:$0xff]
  %v436 = vld [vmem:[%s431 + $0x20] sm:$0xff]
  %v437 = vld [vmem:[%s431 + $0x28] sm:$0xff]
  %v438 = vld [vmem:[%s431 + $0x30] sm:$0xff]
  %v439 = vld [vmem:[%s431 + $0x38] sm:$0xff]
  %v440 = vld [vmem:[%s431 + $0x40] sm:$0xff]
  %v441 = vld [vmem:[%s431 + $0x48] sm:$0xff]
  %v442 = vld [vmem:[%s431 + $0x50] sm:$0xff]
  %v443 = vld [vmem:[%s431 + $0x58] sm:$0xff]
  %v444 = vld [vmem:[%s431 + $0x60] sm:$0xff]
  %v445 = vld [vmem:[%s431 + $0x68] sm:$0xff]
  %v446 = vld [vmem:[%s431 + $0x70] sm:$0xff]
  %v447 = vld [vmem:[%s431 + $0x78] sm:$0xff]
  %v448 = vld [vmem:[%s431 + $0x80] sm:$0xff]
  %v449 = vld [vmem:[%s431 + $0x88] sm:$0xff]
  %v450 = vld [vmem:[%s431 + $0x90] sm:$0xff]
  %v451 = vld [vmem:[%s431 + $0x98] sm:$0xff]
  %v452 = vld [vmem:[%s431 + $0xa0] sm:$0xff]
  %v453 = vld [vmem:[%s431 + $0xa8] sm:$0xff]
  %v454 = vld [vmem:[%s431 + $0xb0] sm:$0xff]
  %v455 = vld [vmem:[%s431 + $0xb8] sm:$0xff]
  %v456 = vld [vmem:[%s431 + $0xc0] sm:$0xff]
  %v457 = vld [vmem:[%s431 + $0xc8] sm:$0xff]
  %v458 = vld [vmem:[%s431 + $0xd0] sm:$0xff]
  %v459 = vld [vmem:[%s431 + $0xd8] sm:$0xff]
  %v460 = vld [vmem:[%s431 + $0xe0] sm:$0xff]
  %v461 = vld [vmem:[%s431 + $0xe8] sm:$0xff]
  %v462 = vld [vmem:[%s431 + $0xf0] sm:$0xff]
  %v463 = vld [vmem:[%s431 + $0xf8] sm:$0xff]
  %v464 = vld [vmem:[%s431 + $0x100] sm:$0xff]
  %v465 = vld [vmem:[%s431 + $0x108] sm:$0xff]
  %v466 = vld [vmem:[%s431 + $0x110] sm:$0xff]
  %v467 = vld [vmem:[%s431 + $0x118] sm:$0xff]
  %v468 = vld [vmem:[%s431 + $0x120] sm:$0xff]
  %v469 = vld [vmem:[%s431 + $0x128] sm:$0xff]
  %v470 = vld [vmem:[%s431 + $0x130] sm:$0xff]
  %v471 = vld [vmem:[%s431 + $0x138] sm:$0xff]
  %v472 = vld [vmem:[%s431 + $0x140] sm:$0xff]
  %v473 = vld [vmem:[%s431 + $0x148] sm:$0xff]
  %v474 = vld [vmem:[%s431 + $0x150] sm:$0xff]
  %v475 = vld [vmem:[%s431 + $0x158] sm:$0xff]
  %v476 = vld [vmem:[%s431 + $0x160] sm:$0xff]
  %v477 = vld [vmem:[%s431 + $0x168] sm:$0xff]
  %v478 = vld [vmem:[%s431 + $0x170] sm:$0xff]
  %v479 = vld [vmem:[%s431 + $0x178] sm:$0xff]
  %v480 = vld [vmem:[%s431 + $0x180] sm:$0xff]
  %v481 = vld [vmem:[%s431 + $0x188] sm:$0xff]
  %v482 = vld [vmem:[%s431 + $0x190] sm:$0xff]
  %v483 = vld [vmem:[%s431 + $0x198] sm:$0xff]
  %v484 = vld [vmem:[%s431 + $0x1a0] sm:$0xff]
  %v485 = vld [vmem:[%s431 + $0x1a8] sm:$0xff]
  %v486 = vld [vmem:[%s431 + $0x1b0] sm:$0xff]
  %v487 = vld [vmem:[%s431 + $0x1b8] sm:$0xff]
  %v488 = vld [vmem:[%s431 + $0x1c0] sm:$0xff]
  %v489 = vld [vmem:[%s431 + $0x1c8] sm:$0xff]
  %v490 = vld [vmem:[%s431 + $0x1d0] sm:$0xff]
  %v491 = vld [vmem:[%s431 + $0x1d8] sm:$0xff]
  %v492 = vld [vmem:[%s431 + $0x1e0] sm:$0xff]
  %v493 = vld [vmem:[%s431 + $0x1e8] sm:$0xff]
  %v494 = vld [vmem:[%s431 + $0x1f0] sm:$0xff]
  %v495 = vld [vmem:[%s431 + $0x1f8] sm:$0xff]
  %v496 = vlaneseq
  %v497 = vshrl.u32 %v496, 7
  %v498 = vsub.s32 1, %v497
  %v499 = vrot.slane %v115, %v498
  %v500 = vlaneseq
  %v501 = vshrl.u32 %v500, 7
  %v502 = vsub.s32 1, %v501
  %v503 = vrot.slane %v117, %v502
  %v504 = vmul.f32 %v119, %v499
  %v505 = vmul.f32 %v120, %v503
  %v506 = vmul.f32 %v121, %v499
  %v507 = vmul.f32 %v122, %v503
  %v508 = vmul.f32 %v504, %v504
  %v509 = vmul.f32 %v505, %v505
  %v510 = vmul.f32 %v506, %v506
  %v511 = vmul.f32 %v507, %v507
  %v512 = vsel %vm205, %v509, 0.0
  %v513 = vadd.f32 %v508, %v512
  %514 = vadd.xlane.f32.xlu0 %v513
  %v515 = vpop.xlane.xlu0 %514
  %v516 = vsel %vm205, %v511, 0.0
  %v517 = vadd.f32 %v510, %v516
  %518 = vadd.xlane.f32.xlu0 %v517
  %v519 = vpop.xlane.xlu0 %518
  %v520 = vadd.f32 %v515, 1e-08
  %v521 = vadd.f32 %v519, 1e-08
  %v522 = vrsqrt.pop %v520
  %v523 = vrsqrt.pop %v521
  %v524 = vmul.f32 %v504, %v522
  %v525 = vmul.f32 %v505, %v522
  %v526 = vmul.f32 %v506, %v523
  %v527 = vmul.f32 %v507, %v523
  %v529 = vsel %vm205, %v525, 0
  %v532 = vsel %vm205, %v527, 0
  %v535 = vsel %vm205, %v433, 0
  %v538 = vsel %vm205, %v435, 0
  %v541 = vsel %vm205, %v437, 0
  %v544 = vsel %vm205, %v439, 0
  %v547 = vsel %vm205, %v441, 0
  %v550 = vsel %vm205, %v443, 0
  %v553 = vsel %vm205, %v445, 0
  %v556 = vsel %vm205, %v447, 0
  %v559 = vsel %vm205, %v449, 0
  %v562 = vsel %vm205, %v451, 0
  %v565 = vsel %vm205, %v453, 0
  %v568 = vsel %vm205, %v455, 0
  %v571 = vsel %vm205, %v457, 0
  %v574 = vsel %vm205, %v459, 0
  %v577 = vsel %vm205, %v461, 0
  %v580 = vsel %vm205, %v463, 0
  %v583 = vsel %vm205, %v465, 0
  %v586 = vsel %vm205, %v467, 0
  %v589 = vsel %vm205, %v469, 0
  %v592 = vsel %vm205, %v471, 0
  %v595 = vsel %vm205, %v473, 0
  %v598 = vsel %vm205, %v475, 0
  %v601 = vsel %vm205, %v477, 0
  %v604 = vsel %vm205, %v479, 0
  %v607 = vsel %vm205, %v481, 0
  %v610 = vsel %vm205, %v483, 0
  %v613 = vsel %vm205, %v485, 0
  %v616 = vsel %vm205, %v487, 0
  %v619 = vsel %vm205, %v489, 0
  %v622 = vsel %vm205, %v491, 0
  %v625 = vsel %vm205, %v493, 0
  %v628 = vsel %vm205, %v495, 0
  %630 = vmatprep.subr.mxu0 %v535
  %631 = vmatpush1.xpose.msra.mxu0 %v432
  %632 = vmatprep.subr.mxu0 %v538
  %633 = vmatpush1.xpose.msra.mxu0 %v434
  %634 = vmatprep.subr.mxu0 %v541
  %635 = vmatpush1.xpose.msra.mxu0 %v436
  %636 = vmatprep.subr.mxu0 %v544
  %637 = vmatpush1.xpose.msra.mxu0 %v438
  %638 = vmatprep.subr.mxu0 %v547
  %639 = vmatpush1.xpose.msra.mxu0 %v440
  %640 = vmatprep.subr.mxu0 %v550
  %641 = vmatpush1.xpose.msra.mxu0 %v442
  %642 = vmatprep.subr.mxu0 %v553
  %643 = vmatpush1.xpose.msra.mxu0 %v444
  %644 = vmatprep.subr.mxu0 %v556
  %645 = vmatpush1.xpose.msra.mxu0 %v446
  %646 = vmatprep.subr.mxu0 %v559
  %647 = vmatpush1.xpose.msra.mxu0 %v448
  %648 = vmatprep.subr.mxu0 %v562
  %649 = vmatpush1.xpose.msra.mxu0 %v450
  %650 = vmatprep.subr.mxu0 %v565
  %651 = vmatpush1.xpose.msra.mxu0 %v452
  %652 = vmatprep.subr.mxu0 %v568
  %653 = vmatpush1.xpose.msra.mxu0 %v454
  %654 = vmatprep.subr.mxu0 %v571
  %655 = vmatpush1.xpose.msra.mxu0 %v456
  %656 = vmatprep.subr.mxu0 %v574
  %657 = vmatpush1.xpose.msra.mxu0 %v458
  %658 = vmatprep.subr.mxu0 %v577
  %659 = vmatpush1.xpose.msra.mxu0 %v460
  %660 = vmatprep.subr.mxu0 %v580
  %661 = vmatpush1.xpose.msra.mxu0 %v462
  %662 = vmatprep.subr.mxu0 %v583
  %663 = vmatpush1.xpose.msra.mxu0 %v464
  %664 = vmatprep.subr.mxu0 %v586
  %665 = vmatpush1.xpose.msra.mxu0 %v466
  %666 = vmatprep.subr.mxu0 %v589
  %667 = vmatpush1.xpose.msra.mxu0 %v468
  %668 = vmatprep.subr.mxu0 %v592
  %669 = vmatpush1.xpose.msra.mxu0 %v470
  %670 = vmatprep.subr.mxu0 %v595
  %671 = vmatpush1.xpose.msra.mxu0 %v472
  %672 = vmatprep.subr.mxu0 %v598
  %673 = vmatpush1.xpose.msra.mxu0 %v474
  %674 = vmatprep.subr.mxu0 %v601
  %675 = vmatpush1.xpose.msra.mxu0 %v476
  %676 = vmatprep.subr.mxu0 %v604
  %677 = vmatpush1.xpose.msra.mxu0 %v478
  %678 = vmatprep.subr.mxu0 %v607
  %679 = vmatpush1.xpose.msra.mxu0 %v480
  %680 = vmatprep.subr.mxu0 %v610
  %681 = vmatpush1.xpose.msra.mxu0 %v482
  %682 = vmatprep.subr.mxu0 %v613
  %683 = vmatpush1.xpose.msra.mxu0 %v484
  %684 = vmatprep.subr.mxu0 %v616
  %685 = vmatpush1.xpose.msra.mxu0 %v486
  %686 = vmatprep.subr.mxu0 %v619
  %687 = vmatpush1.xpose.msra.mxu0 %v488
  %688 = vmatprep.subr.mxu0 %v622
  %689 = vmatpush1.xpose.msra.mxu0 %v490
  %690 = vmatprep.subr.mxu0 %v625
  %691 = vmatpush1.xpose.msra.mxu0 %v492
  %692 = vmatprep.subr.mxu0 %v628
  %693 = vmatpush1.xpose.msra.mxu0 %v494
  %694 = vmatprep.mubr.f32.mxu0 %v529
  %695 = vmatmul.mubr.f32.gmra.mrb[0].mxu0 %v524
  %v696 = vpop.f32.mrb[0].mxu0
  %v697 = vadd.f32 %v225, %v696
  %v698 = vpop.f32.mrb[0].mxu0
  %v699 = vadd.f32 %v225, %v698
  %700 = vmatprep.mubr.f32.mxu0 %v532
  %701 = vmatmul.mubr.f32.gmra.mrb[0].mxu0 %v526
  %v702 = vpop.f32.mrb[0].mxu0
  %v703 = vadd.f32 %v230, %v702
  %v704 = vpop.f32.mrb[0].mxu0
  %v705 = vadd.f32 %v230, %v704
  %706 = vdwg.mxu0
  %vm707 = vcmp.ge.f32.partialorder %v697, 0.0
  %vm708 = vcmp.ge.f32.partialorder %v699, 0.0
  %vm709 = vcmp.ge.f32.partialorder %v703, 0.0
  %vm710 = vcmp.ge.f32.partialorder %v705, 0.0
  %v711 = vmul.f32 %v697, 0.2
  %v712 = vmul.f32 %v699, 0.2
  %v713 = vmul.f32 %v703, 0.2
  %v714 = vmul.f32 %v705, 0.2
  %v715 = vsel %vm707, %v697, %v711
  %v716 = vsel %vm708, %v699, %v712
  %v717 = vsel %vm709, %v703, %v713
  %v718 = vsel %vm710, %v705, %v714
  %v719 = vmul.f32 %v715, 1.4142135
  %v720 = vmul.f32 %v716, 1.4142135
  %v721 = vmul.f32 %v717, 1.4142135
  %v722 = vmul.f32 %v718, 1.4142135
  %s723 = scalar_lea.vmem %s6, 32
  %724 = vst [vmem:[%s723] sm:$0xff] %v719
  %725 = vst [vmem:[%s723 + $0x8] sm:$0xff] %v720
  %726 = vst [vmem:[%s723 + $0x10] sm:$0xff] %v721
  %727 = vst [vmem:[%s723 + $0x18] sm:$0xff] %v722
  // Predicated region
  $region26: #{psp_forward.8} parent=0 // pred_check
    _
  $region27: #{psp_forward.8} parent=0 // pred_check_branch
    %729 = sbr.rel (0) target = $region29
  $region28: #{psp_forward.8} parent=0 // pred_region
    _
  $region29: #{psp_forward.8} parent=0 // pred_fallthru
    _
  // Predicated region
  $region30: #{psp_forward.8} parent=0 // pred_check
    _
  $region31: #{psp_forward.8} parent=0 // pred_check_branch
    %731 = sbr.rel (0) target = $region33
  $region32: #{psp_forward.8} parent=0 // pred_region
    _
  $region33: #{psp_forward.8} parent=0 // pred_fallthru
    _

// kernel: psp_forward.9
$region0: #{psp_forward.9}
  #allocation0 [shape = 'u32[]', space=smem, size = 0x4, offset = 0x4, fixed_abs, tag = 'smem constant byte address 0x4 - core index']
  #allocation1 [shape = 'u32[144,128]{1,0:T(1,128)}', space=vmem, size = 0x12000, scoped, tag = 'internal scratch']
  %s0 = inlined_call_operand.vmem [shape: f32[2,32], index: 0, kind: input, shape index: {}]
  %s1 = inlined_call_operand.vmem [shape: f32[2,32], index: 1, kind: input, shape index: {}]
  %s2 = inlined_call_operand.vmem [shape: f32[2,256,144], index: 2, kind: input, shape index: {}]
  %s3 = inlined_call_operand.vmem [shape: f32[32,144], index: 3, kind: input, shape index: {}]
  %s4 = inlined_call_operand.vmem [shape: f32[1,144], index: 4, kind: input, shape index: {}]
  %s5 = inlined_call_operand.vmem [shape: f32[16,144], index: 5, kind: input, shape index: {}]
  %s6 = inlined_call_operand.vmem [shape: f32[16,1], index: 6, kind: input, shape index: {}]
  %s7 = inlined_call_operand.vmem [shape: f32[32,16], index: 7, kind: input, shape index: {}]
  %s8 = inlined_call_operand.vmem [shape: f32[1,16], index: 8, kind: input, shape index: {}]
  %s9 = inlined_call_operand.vmem [shape: f32[3,16], index: 9, kind: input, shape index: {}]
  %s10 = inlined_call_operand.vmem [shape: f32[3,1], index: 10, kind: input, shape index: {}]
  %s11 = inlined_call_operand.vmem [shape: f32[256,64], index: 11, kind: input, shape index: {}]
  %s12 = inlined_call_operand.vmem [shape: f32[2,3,64], index: 12, kind: output, shape index: {}]
  %s13 = sld [smem:[#allocation0]]
  $region58: #{psp_forward.9} parent=0
    _
  %s15 = ssub.s32 1, %s13
  %s16 = scalar_select 0, %s15, %s13
  // Predicated region
  $region2: #{psp_forward.9} parent=0 // pred_check
    _
  $region3: #{psp_forward.9} parent=0 // pred_check_branch
    %18 = sbr.rel (0) target = $region5
  $region4: #{psp_forward.9} parent=0 // pred_region
    _
  $region5: #{psp_forward.9} parent=0 // pred_fallthru
    _
  // Predicated region
  $region6: #{psp_forward.9} parent=0 // pred_check
    _
  $region7: #{psp_forward.9} parent=0 // pred_check_branch
    %20 = sbr.rel (0) target = $region9
  $region8: #{psp_forward.9} parent=0 // pred_region
    _
  $region9: #{psp_forward.9} parent=0 // pred_fallthru
    _
  // Predicated region
  $region10: #{psp_forward.9} parent=0 // pred_check
    _
  $region11: #{psp_forward.9} parent=0 // pred_check_branch
    %22 = sbr.rel (0) target = $region13
  $region12: #{psp_forward.9} parent=0 // pred_region
    _
  $region13: #{psp_forward.9} parent=0 // pred_fallthru
    _
  // Predicated region
  $region14: #{psp_forward.9} parent=0 // pred_check
    _
  $region15: #{psp_forward.9} parent=0 // pred_check_branch
    %24 = sbr.rel (0) target = $region17
  $region16: #{psp_forward.9} parent=0 // pred_region
    _
  $region17: #{psp_forward.9} parent=0 // pred_fallthru
    _
  // Predicated region
  $region18: #{psp_forward.9} parent=0 // pred_check
    _
  $region19: #{psp_forward.9} parent=0 // pred_check_branch
    %26 = sbr.rel (0) target = $region21
  $region20: #{psp_forward.9} parent=0 // pred_region
    _
  $region21: #{psp_forward.9} parent=0 // pred_fallthru
    _
  // Predicated region
  $region22: #{psp_forward.9} parent=0 // pred_check
    _
  $region23: #{psp_forward.9} parent=0 // pred_check_branch
    %28 = sbr.rel (0) target = $region25
  $region24: #{psp_forward.9} parent=0 // pred_region
    _
  $region25: #{psp_forward.9} parent=0 // pred_fallthru
    _
  // Predicated region
  $region26: #{psp_forward.9} parent=0 // pred_check
    _
  $region27: #{psp_forward.9} parent=0 // pred_check_branch
    %30 = sbr.rel (0) target = $region29
  $region28: #{psp_forward.9} parent=0 // pred_region
    _
  $region29: #{psp_forward.9} parent=0 // pred_fallthru
    _
  // Predicated region
  $region30: #{psp_forward.9} parent=0 // pred_check
    _
  $region31: #{psp_forward.9} parent=0 // pred_check_branch
    %32 = sbr.rel (0) target = $region33
  $region32: #{psp_forward.9} parent=0 // pred_region
    _
  $region33: #{psp_forward.9} parent=0 // pred_fallthru
    _
  // Predicated region
  $region34: #{psp_forward.9} parent=0 // pred_check
    _
  $region35: #{psp_forward.9} parent=0 // pred_check_branch
    %34 = sbr.rel (0) target = $region37
  $region36: #{psp_forward.9} parent=0 // pred_region
    _
  $region37: #{psp_forward.9} parent=0 // pred_fallthru
    _
  // Predicated region
  $region38: #{psp_forward.9} parent=0 // pred_check
    _
  $region39: #{psp_forward.9} parent=0 // pred_check_branch
    %36 = sbr.rel (0) target = $region41
  $region40: #{psp_forward.9} parent=0 // pred_region
    _
  $region41: #{psp_forward.9} parent=0 // pred_fallthru
    _
  // Predicated region
  $region42: #{psp_forward.9} parent=0 // pred_check
    _
  $region43: #{psp_forward.9} parent=0 // pred_check_branch
    %38 = sbr.rel (0) target = $region45
  $region44: #{psp_forward.9} parent=0 // pred_region
    _
  $region45: #{psp_forward.9} parent=0 // pred_fallthru
    _
  // Predicated region
  $region46: #{psp_forward.9} parent=0 // pred_check
    _
  $region47: #{psp_forward.9} parent=0 // pred_check_branch
    %40 = sbr.rel (0) target = $region49
  $region48: #{psp_forward.9} parent=0 // pred_region
    _
  $region49: #{psp_forward.9} parent=0 // pred_fallthru
    _
  %v41 = vld [vmem:[%s0] sm:$0x3]
  %v42 = vld [vmem:[%s3] sm:$0xff]
  %v43 = vld [vmem:[%s3 + $0x8] sm:$0xff]
  %v44 = vld [vmem:[%s3 + $0x10] sm:$0xff]
  %v45 = vld [vmem:[%s3 + $0x18] sm:$0xff]
  %v46 = vld [vmem:[%s3 + $0x20] sm:$0xff]
  %v47 = vld [vmem:[%s3 + $0x28] sm:$0xff]
  %v48 = vld [vmem:[%s3 + $0x30] sm:$0xff]
  %v49 = vld [vmem:[%s3 + $0x38] sm:$0xff]
  %v50 = vld [vmem:[%s4] sm:$0x3]
  %v52 = vlaneseq
  %v53 = vshrl.u32 %v52, 7
  %v54 = vsub.s32 0, %v53
  %v55 = vrot.slane %v50, %v54
  %v56 = vlaneseq
  %v57 = vshrl.u32 %v56, 7
  %v58 = vsub.s32 1, %v57
  %v59 = vrot.slane %v50, %v58
  %vm62 = vcmask 261120
  %v64 = vsel %vm62, %v41, 0
  %66 = vmatprep.subr.mxu0 %v43
  %67 = vmatpush1.msra.mxu0 %v42
  %68 = vmatprep.subr.mxu0 %v45
  %69 = vmatpush1.msra.mxu0 %v44
  %70 = vmatprep.subr.mxu0 %v47
  %71 = vmatpush1.msra.mxu0 %v46
  %72 = vmatprep.subr.mxu0 %v49
  %73 = vmatpush1.msra.mxu0 %v48
  %74 = vmatprep.subr.mxu0 0.0
  %75 = vmatpush1.msra.mxu0 0.0
  %76 = vmatprep.subr.mxu0 0.0
  %77 = vmatpush1.msra.mxu0 0.0
  %78 = vmatprep.subr.mxu0 0.0
  %79 = vmatpush1.msra.mxu0 0.0
  %80 = vmatprep.subr.mxu0 0.0
  %81 = vmatpush1.msra.mxu0 0.0
  %82 = vmatprep.subr.mxu0 0.0
  %83 = vmatpush1.msra.mxu0 0.0
  %84 = vmatprep.subr.mxu0 0.0
  %85 = vmatpush1.msra.mxu0 0.0
  %86 = vmatprep.subr.mxu0 0.0
  %87 = vmatpush1.msra.mxu0 0.0
  %88 = vmatprep.subr.mxu0 0.0
  %89 = vmatpush1.msra.mxu0 0.0
  %90 = vmatprep.subr.mxu0 0.0
  %91 = vmatpush1.msra.mxu0 0.0
  %92 = vmatprep.subr.mxu0 0.0
  %93 = vmatpush1.msra.mxu0 0.0
  %94 = vmatprep.subr.mxu0 0.0
  %95 = vmatpush1.msra.mxu0 0.0
  %96 = vmatprep.subr.mxu0 0.0
  %97 = vmatpush1.msra.mxu0 0.0
  %98 = vmatprep.subr.mxu0 0.0
  %99 = vmatpush1.msra.mxu0 0.0
  %100 = vmatprep.subr.mxu0 0.0
  %101 = vmatpush1.msra.mxu0 0.0
  %102 = vmatprep.subr.mxu0 0.0
  %103 = vmatpush1.msra.mxu0 0.0
  %104 = vmatprep.subr.mxu0 0.0
  %105 = vmatpush1.msra.mxu0 0.0
  %106 = vmatprep.subr.mxu0 0.0
  %107 = vmatpush1.msra.mxu0 0.0
  %108 = vmatprep.subr.mxu0 0.0
  %109 = vmatpush1.msra.mxu0 0.0
  %110 = vmatprep.subr.mxu0 0.0
  %111 = vmatpush1.msra.mxu0 0.0
  %112 = vmatprep.subr.mxu0 0.0
  %113 = vmatpush1.msra.mxu0 0.0
  %114 = vmatprep.subr.mxu0 0.0
  %115 = vmatpush1.msra.mxu0 0.0
  %116 = vmatprep.subr.mxu0 0.0
  %117 = vmatpush1.msra.mxu0 0.0
  %118 = vmatprep.subr.mxu0 0.0
  %119 = vmatpush1.msra.mxu0 0.0
  %120 = vmatprep.subr.mxu0 0.0
  %121 = vmatpush1.msra.mxu0 0.0
  %122 = vmatprep.subr.mxu0 0.0
  %123 = vmatpush1.msra.mxu0 0.0
  %124 = vmatprep.subr.mxu0 0.0
  %125 = vmatpush1.msra.mxu0 0.0
  %126 = vmatprep.subr.mxu0 0.0
  %127 = vmatpush1.msra.mxu0 0.0
  %128 = vmatprep.subr.mxu0 0.0
  %129 = vmatpush1.msra.mxu0 0.0
  %130 = vmatprep.mubr.f32.mxu0 0.0
  %131 = vmatmul.mubr.f32.gmra.mrb[0].mxu0 %v64
  %v132 = vpop.f32.mrb[0].mxu0
  %v133 = vadd.f32 %v55, %v132
  %v134 = vpop.f32.mrb[0].mxu0
  %v135 = vadd.f32 %v59, %v134
  %136 = vdwg.mxu0
  %v137 = vld [vmem:[%s1] sm:$0x3]
  %v138 = vld [vmem:[%s7] sm:$0xff]
  %v139 = vld [vmem:[%s7 + $0x8] sm:$0xff]
  %v140 = vld [vmem:[%s7 + $0x10] sm:$0xff]
  %v141 = vld [vmem:[%s7 + $0x18] sm:$0xff]
  %v142 = vld [vmem:[%s8] sm:$0x1]
  %v144 = vlaneseq
  %v145 = vshrl.u32 %v144, 7
  %v146 = vsub.s32 0, %v145
  %v147 = vrot.slane %v142, %v146
  %v150 = vsel %vm62, %v137, 0
  %152 = vmatprep.subr.mxu0 0.0
  %153 = vmatpush1.msra.mxu0 %v138
  %154 = vmatprep.subr.mxu0 0.0
  %155 = vmatpush1.msra.mxu0 %v139
  %156 = vmatprep.subr.mxu0 0.0
  %157 = vmatpush1.msra.mxu0 %v140
  %158 = vmatprep.subr.mxu0 0.0
  %159 = vmatpush1.msra.mxu0 %v141
  %160 = vmatprep.subr.mxu0 0.0
  %161 = vmatpush1.msra.mxu0 0.0
  %162 = vmatprep.subr.mxu0 0.0
  %163 = vmatpush1.msra.mxu0 0.0
  %164 = vmatprep.subr.mxu0 0.0
  %165 = vmatpush1.msra.mxu0 0.0
  %166 = vmatprep.subr.mxu0 0.0
  %167 = vmatpush1.msra.mxu0 0.0
  %168 = vmatprep.subr.mxu0 0.0
  %169 = vmatpush1.msra.mxu0 0.0
  %170 = vmatprep.subr.mxu0 0.0
  %171 = vmatpush1.msra.mxu0 0.0
  %172 = vmatprep.subr.mxu0 0.0
  %173 = vmatpush1.msra.mxu0 0.0
  %174 = vmatprep.subr.mxu0 0.0
  %175 = vmatpush1.msra.mxu0 0.0
  %176 = vmatprep.subr.mxu0 0.0
  %177 = vmatpush1.msra.mxu0 0.0
  %178 = vmatprep.subr.mxu0 0.0
  %179 = vmatpush1.msra.mxu0 0.0
  %180 = vmatprep.subr.mxu0 0.0
  %181 = vmatpush1.msra.mxu0 0.0
  %182 = vmatprep.subr.mxu0 0.0
  %183 = vmatpush1.msra.mxu0 0.0
  %184 = vmatprep.subr.mxu0 0.0
  %185 = vmatpush1.msra.mxu0 0.0
  %186 = vmatprep.subr.mxu0 0.0
  %187 = vmatpush1.msra.mxu0 0.0
  %188 = vmatprep.subr.mxu0 0.0
  %189 = vmatpush1.msra.mxu0 0.0
  %190 = vmatprep.subr.mxu0 0.0
  %191 = vmatpush1.msra.mxu0 0.0
  %192 = vmatprep.subr.mxu0 0.0
  %193 = vmatpush1.msra.mxu0 0.0
  %194 = vmatprep.subr.mxu0 0.0
  %195 = vmatpush1.msra.mxu0 0.0
  %196 = vmatprep.subr.mxu0 0.0
  %197 = vmatpush1.msra.mxu0 0.0
  %198 = vmatprep.subr.mxu0 0.0
  %199 = vmatpush1.msra.mxu0 0.0
  %200 = vmatprep.subr.mxu0 0.0
  %201 = vmatpush1.msra.mxu0 0.0
  %202 = vmatprep.subr.mxu0 0.0
  %203 = vmatpush1.msra.mxu0 0.0
  %204 = vmatprep.subr.mxu0 0.0
  %205 = vmatpush1.msra.mxu0 0.0
  %206 = vmatprep.subr.mxu0 0.0
  %207 = vmatpush1.msra.mxu0 0.0
  %208 = vmatprep.subr.mxu0 0.0
  %209 = vmatpush1.msra.mxu0 0.0
  %210 = vmatprep.subr.mxu0 0.0
  %211 = vmatpush1.msra.mxu0 0.0
  %212 = vmatprep.subr.mxu0 0.0
  %213 = vmatpush1.msra.mxu0 0.0
  %214 = vmatprep.subr.mxu0 0.0
  %215 = vmatpush1.msra.mxu0 0.0
  %216 = vmatprep.mubr.f32.mxu0 0.0
  %217 = vmatmul.mubr.f32.gmra.mrb[0].mxu0 %v150
  %v218 = vpop.f32.mrb[0].mxu0
  %v219 = vadd.f32 %v147, %v218
  %v220 = vpop.f32.mrb[0].mxu0
  %221 = vdwg.mxu0
  %v222 = vld [vmem:[%s5] sm:$0xff]
  %v223 = vld [vmem:[%s5 + $0x8] sm:$0xff]
  %v224 = vld [vmem:[%s5 + $0x10] sm:$0xff]
  %v225 = vld [vmem:[%s5 + $0x18] sm:$0xff]
  %v226 = vld [vmem:[%s6] sm:$0xff]
  %v227 = vld [vmem:[%s6 + $0x8] sm:$0xff]
  %v228 = vld [vmem:[%s9] sm:$0x7]
  %v229 = vld [vmem:[%s10] sm:$0x7]
  %v230 = vld [vmem:[%s2] sm:$0xff]
  %v231 = vld [vmem:[%s2 + $0x8] sm:$0xff]
  %v232 = vld [vmem:[%s2 + $0x10] sm:$0xff]
  %v233 = vld [vmem:[%s2 + $0x18] sm:$0xff]
  %v234 = vld [vmem:[%s2 + $0x20] sm:$0xff]
  %v235 = vld [vmem:[%s2 + $0x28] sm:$0xff]
  %v236 = vld [vmem:[%s2 + $0x30] sm:$0xff]
  %v237 = vld [vmem:[%s2 + $0x38] sm:$0xff]
  %v238 = vld [vmem:[%s2 + $0x40] sm:$0xff]
  %v239 = vld [vmem:[%s2 + $0x48] sm:$0xff]
  %v240 = vld [vmem:[%s2 + $0x50] sm:$0xff]
  %v241 = vld [vmem:[%s2 + $0x58] sm:$0xff]
  %v242 = vld [vmem:[%s2 + $0x60] sm:$0xff]
  %v243 = vld [vmem:[%s2 + $0x68] sm:$0xff]
  %v244 = vld [vmem:[%s2 + $0x70] sm:$0xff]
  %v245 = vld [vmem:[%s2 + $0x78] sm:$0xff]
  %v246 = vld [vmem:[%s2 + $0x80] sm:$0xff]
  %v247 = vld [vmem:[%s2 + $0x88] sm:$0xff]
  %v248 = vld [vmem:[%s2 + $0x90] sm:$0xff]
  %v249 = vld [vmem:[%s2 + $0x98] sm:$0xff]
  %v250 = vld [vmem:[%s2 + $0xa0] sm:$0xff]
  %v251 = vld [vmem:[%s2 + $0xa8] sm:$0xff]
  %v252 = vld [vmem:[%s2 + $0xb0] sm:$0xff]
  %v253 = vld [vmem:[%s2 + $0xb8] sm:$0xff]
  %v254 = vld [vmem:[%s2 + $0xc0] sm:$0xff]
  %v255 = vld [vmem:[%s2 + $0xc8] sm:$0xff]
  %v256 = vld [vmem:[%s2 + $0xd0] sm:$0xff]
  %v257 = vld [vmem:[%s2 + $0xd8] sm:$0xff]
  %v258 = vld [vmem:[%s2 + $0xe0] sm:$0xff]
  %v259 = vld [vmem:[%s2 + $0xe8] sm:$0xff]
  %v260 = vld [vmem:[%s2 + $0xf0] sm:$0xff]
  %v261 = vld [vmem:[%s2 + $0xf8] sm:$0xff]
  %v262 = vld [vmem:[%s2 + $0x100] sm:$0xff]
  %v263 = vld [vmem:[%s2 + $0x108] sm:$0xff]
  %v264 = vld [vmem:[%s2 + $0x110] sm:$0xff]
  %v265 = vld [vmem:[%s2 + $0x118] sm:$0xff]
  %v266 = vld [vmem:[%s2 + $0x120] sm:$0xff]
  %v267 = vld [vmem:[%s2 + $0x128] sm:$0xff]
  %v268 = vld [vmem:[%s2 + $0x130] sm:$0xff]
  %v269 = vld [vmem:[%s2 + $0x138] sm:$0xff]
  %v270 = vld [vmem:[%s2 + $0x140] sm:$0xff]
  %v271 = vld [vmem:[%s2 + $0x148] sm:$0xff]
  %v272 = vld [vmem:[%s2 + $0x150] sm:$0xff]
  %v273 = vld [vmem:[%s2 + $0x158] sm:$0xff]
  %v274 = vld [vmem:[%s2 + $0x160] sm:$0xff]
  %v275 = vld [vmem:[%s2 + $0x168] sm:$0xff]
  %v276 = vld [vmem:[%s2 + $0x170] sm:$0xff]
  %v277 = vld [vmem:[%s2 + $0x178] sm:$0xff]
  %v278 = vld [vmem:[%s2 + $0x180] sm:$0xff]
  %v279 = vld [vmem:[%s2 + $0x188] sm:$0xff]
  %v280 = vld [vmem:[%s2 + $0x190] sm:$0xff]
  %v281 = vld [vmem:[%s2 + $0x198] sm:$0xff]
  %v282 = vld [vmem:[%s2 + $0x1a0] sm:$0xff]
  %v283 = vld [vmem:[%s2 + $0x1a8] sm:$0xff]
  %v284 = vld [vmem:[%s2 + $0x1b0] sm:$0xff]
  %v285 = vld [vmem:[%s2 + $0x1b8] sm:$0xff]
  %v286 = vld [vmem:[%s2 + $0x1c0] sm:$0xff]
  %v287 = vld [vmem:[%s2 + $0x1c8] sm:$0xff]
  %v288 = vld [vmem:[%s2 + $0x1d0] sm:$0xff]
  %v289 = vld [vmem:[%s2 + $0x1d8] sm:$0xff]
  %v290 = vld [vmem:[%s2 + $0x1e0] sm:$0xff]
  %v291 = vld [vmem:[%s2 + $0x1e8] sm:$0xff]
  %v292 = vld [vmem:[%s2 + $0x1f0] sm:$0xff]
  %v293 = vld [vmem:[%s2 + $0x1f8] sm:$0xff]
  %v294 = vlaneseq
  %v295 = vshrl.u32 %v294, 7
  %v296 = vsub.s32 0, %v295
  %v297 = vrot.slane %v133, %v296
  %v298 = vlaneseq
  %v299 = vshrl.u32 %v298, 7
  %v300 = vsub.s32 0, %v299
  %v301 = vrot.slane %v135, %v300
  %v302 = vmul.f32 %v222, %v297
  %v303 = vmul.f32 %v223, %v301
  %v304 = vmul.f32 %v224, %v297
  %v305 = vmul.f32 %v225, %v301
  %v306 = vmul.f32 %v302, %v302
  %v307 = vmul.f32 %v303, %v303
  %v308 = vmul.f32 %v304, %v304
  %v309 = vmul.f32 %v305, %v305
  %vm310 = vcmask 130048
  %v311 = vsel %vm310, %v307, 0.0
  %v312 = vadd.f32 %v306, %v311
  %313 = vadd.xlane.f32.xlu0 %v312
  %v314 = vpop.xlane.xlu0 %313
  %v315 = vsel %vm310, %v309, 0.0
  %v316 = vadd.f32 %v308, %v315
  %317 = vadd.xlane.f32.xlu0 %v316
  %v318 = vpop.xlane.xlu0 %317
  %v319 = vadd.f32 %v314, 1e-08
  %v320 = vadd.f32 %v318, 1e-08
  %v321 = vrsqrt.pop %v319
  %v322 = vrsqrt.pop %v320
  %v323 = vmul.f32 %v302, %v321
  %v324 = vmul.f32 %v303, %v321
  %v325 = vmul.f32 %v304, %v322
  %v326 = vmul.f32 %v305, %v322
  %328 = vset.pattern.permute.xlu0 0
  %329 = vperm.xlu0 %328, %v226
  %v330 = vpop.permute.xlu0 %329
  %333 = vset.pattern.permute.xlu0 0
  %334 = vperm.xlu0 %333, %v227
  %v335 = vpop.permute.xlu0 %334
  %v338 = vsel %vm310, %v324, 0
  %v341 = vsel %vm310, %v326, 0
  %v344 = vsel %vm310, %v231, 0
  %v347 = vsel %vm310, %v233, 0
  %v350 = vsel %vm310, %v235, 0
  %v353 = vsel %vm310, %v237, 0
  %v356 = vsel %vm310, %v239, 0
  %v359 = vsel %vm310, %v241, 0
  %v362 = vsel %vm310, %v243, 0
  %v365 = vsel %vm310, %v245, 0
  %v368 = vsel %vm310, %v247, 0
  %v371 = vsel %vm310, %v249, 0
  %v374 = vsel %vm310, %v251, 0
  %v377 = vsel %vm310, %v253, 0
  %v380 = vsel %vm310, %v255, 0
  %v383 = vsel %vm310, %v257, 0
  %v386 = vsel %vm310, %v259, 0
  %v389 = vsel %vm310, %v261, 0
  %v392 = vsel %vm310, %v263, 0
  %v395 = vsel %vm310, %v265, 0
  %v398 = vsel %vm310, %v267, 0
  %v401 = vsel %vm310, %v269, 0
  %v404 = vsel %vm310, %v271, 0
  %v407 = vsel %vm310, %v273, 0
  %v410 = vsel %vm310, %v275, 0
  %v413 = vsel %vm310, %v277, 0
  %v416 = vsel %vm310, %v279, 0
  %v419 = vsel %vm310, %v281, 0
  %v422 = vsel %vm310, %v283, 0
  %v425 = vsel %vm310, %v285, 0
  %v428 = vsel %vm310, %v287, 0
  %v431 = vsel %vm310, %v289, 0
  %v434 = vsel %vm310, %v291, 0
  %v437 = vsel %vm310, %v293, 0
  %439 = vmatprep.subr.mxu0 %v344
  %440 = vmatpush1.xpose.msra.mxu0 %v230
  %441 = vmatprep.subr.mxu0 %v347
  %442 = vmatpush1.xpose.msra.mxu0 %v232
  %443 = vmatprep.subr.mxu0 %v350
  %444 = vmatpush1.xpose.msra.mxu0 %v234
  %445 = vmatprep.subr.mxu0 %v353
  %446 = vmatpush1.xpose.msra.mxu0 %v236
  %447 = vmatprep.subr.mxu0 %v356
  %448 = vmatpush1.xpose.msra.mxu0 %v238
  %449 = vmatprep.subr.mxu0 %v359
  %450 = vmatpush1.xpose.msra.mxu0 %v240
  %451 = vmatprep.subr.mxu0 %v362
  %452 = vmatpush1.xpose.msra.mxu0 %v242
  %453 = vmatprep.subr.mxu0 %v365
  %454 = vmatpush1.xpose.msra.mxu0 %v244
  %455 = vmatprep.subr.mxu0 %v368
  %456 = vmatpush1.xpose.msra.mxu0 %v246
  %457 = vmatprep.subr.mxu0 %v371
  %458 = vmatpush1.xpose.msra.mxu0 %v248
  %459 = vmatprep.subr.mxu0 %v374
  %460 = vmatpush1.xpose.msra.mxu0 %v250
  %461 = vmatprep.subr.mxu0 %v377
  %462 = vmatpush1.xpose.msra.mxu0 %v252
  %463 = vmatprep.subr.mxu0 %v380
  %464 = vmatpush1.xpose.msra.mxu0 %v254
  %465 = vmatprep.subr.mxu0 %v383
  %466 = vmatpush1.xpose.msra.mxu0 %v256
  %467 = vmatprep.subr.mxu0 %v386
  %468 = vmatpush1.xpose.msra.mxu0 %v258
  %469 = vmatprep.subr.mxu0 %v389
  %470 = vmatpush1.xpose.msra.mxu0 %v260
  %471 = vmatprep.subr.mxu0 %v392
  %472 = vmatpush1.xpose.msra.mxu0 %v262
  %473 = vmatprep.subr.mxu0 %v395
  %474 = vmatpush1.xpose.msra.mxu0 %v264
  %475 = vmatprep.subr.mxu0 %v398
  %476 = vmatpush1.xpose.msra.mxu0 %v266
  %477 = vmatprep.subr.mxu0 %v401
  %478 = vmatpush1.xpose.msra.mxu0 %v268
  %479 = vmatprep.subr.mxu0 %v404
  %480 = vmatpush1.xpose.msra.mxu0 %v270
  %481 = vmatprep.subr.mxu0 %v407
  %482 = vmatpush1.xpose.msra.mxu0 %v272
  %483 = vmatprep.subr.mxu0 %v410
  %484 = vmatpush1.xpose.msra.mxu0 %v274
  %485 = vmatprep.subr.mxu0 %v413
  %486 = vmatpush1.xpose.msra.mxu0 %v276
  %487 = vmatprep.subr.mxu0 %v416
  %488 = vmatpush1.xpose.msra.mxu0 %v278
  %489 = vmatprep.subr.mxu0 %v419
  %490 = vmatpush1.xpose.msra.mxu0 %v280
  %491 = vmatprep.subr.mxu0 %v422
  %492 = vmatpush1.xpose.msra.mxu0 %v282
  %493 = vmatprep.subr.mxu0 %v425
  %494 = vmatpush1.xpose.msra.mxu0 %v284
  %495 = vmatprep.subr.mxu0 %v428
  %496 = vmatpush1.xpose.msra.mxu0 %v286
  %497 = vmatprep.subr.mxu0 %v431
  %498 = vmatpush1.xpose.msra.mxu0 %v288
  %499 = vmatprep.subr.mxu0 %v434
  %500 = vmatpush1.xpose.msra.mxu0 %v290
  %501 = vmatprep.subr.mxu0 %v437
  %502 = vmatpush1.xpose.msra.mxu0 %v292
  %503 = vmatprep.mubr.f32.mxu0 %v338
  %504 = vmatmul.mubr.f32.gmra.mrb[0].mxu0 %v323
  %v505 = vpop.f32.mrb[0].mxu0
  %v506 = vadd.f32 %v330, %v505
  %v507 = vpop.f32.mrb[0].mxu0
  %v508 = vadd.f32 %v330, %v507
  %509 = vmatprep.mubr.f32.mxu0 %v341
  %510 = vmatmul.mubr.f32.gmra.mrb[0].mxu0 %v325
  %v511 = vpop.f32.mrb[0].mxu0
  %v512 = vadd.f32 %v335, %v511
  %v513 = vpop.f32.mrb[0].mxu0
  %v514 = vadd.f32 %v335, %v513
  %515 = vdwg.mxu0
  %vm516 = vcmp.ge.f32.partialorder %v506, 0.0
  %vm517 = vcmp.ge.f32.partialorder %v508, 0.0
  %vm518 = vcmp.ge.f32.partialorder %v512, 0.0
  %vm519 = vcmp.ge.f32.partialorder %v514, 0.0
  %v520 = vmul.f32 %v506, 0.2
  %v521 = vmul.f32 %v508, 0.2
  %v522 = vmul.f32 %v512, 0.2
  %v523 = vmul.f32 %v514, 0.2
  %v524 = vsel %vm516, %v506, %v520
  %v525 = vsel %vm517, %v508, %v521
  %v526 = vsel %vm518, %v512, %v522
  %v527 = vsel %vm519, %v514, %v523
  %v528 = vmul.f32 %v524, 1.4142135
  %v529 = vmul.f32 %v525, 1.4142135
  %v530 = vmul.f32 %v526, 1.4142135
  %v531 = vmul.f32 %v527, 1.4142135
  %v532 = vlaneseq
  %v533 = vshrl.u32 %v532, 7
  %v534 = vsub.s32 0, %v533
  %v535 = vrot.slane %v219, %v534
  %v536 = vmul.f32 %v228, %v535
  %538 = vset.pattern.permute.xlu0 0
  %539 = vperm.xlu0 %538, %v229
  %v540 = vpop.permute.xlu0 %539
  %v543 = vsel %vm310, %v536, 0
  %545 = vmatprep.subr.mxu0 %v529
  %546 = vmatpush1.msra.mxu0 %v528
  %547 = vmatprep.subr.mxu0 %v531
  %548 = vmatpush1.msra.mxu0 %v530
  %549 = vmatprep.subr.mxu0 0.0
  %550 = vmatpush1.msra.mxu0 0.0
  %551 = vmatprep.subr.mxu0 0.0
  %552 = vmatpush1.msra.mxu0 0.0
  %553 = vmatprep.subr.mxu0 0.0
  %554 = vmatpush1.msra.mxu0 0.0
  %555 = vmatprep.subr.mxu0 0.0
  %556 = vmatpush1.msra.mxu0 0.0
  %557 = vmatprep.subr.mxu0 0.0
  %558 = vmatpush1.msra.mxu0 0.0
  %559 = vmatprep.subr.mxu0 0.0
  %560 = vmatpush1.msra.mxu0 0.0
  %561 = vmatprep.subr.mxu0 0.0
  %562 = vmatpush1.msra.mxu0 0.0
  %563 = vmatprep.subr.mxu0 0.0
  %564 = vmatpush1.msra.mxu0 0.0
  %565 = vmatprep.subr.mxu0 0.0
  %566 = vmatpush1.msra.mxu0 0.0
  %567 = vmatprep.subr.mxu0 0.0
  %568 = vmatpush1.msra.mxu0 0.0
  %569 = vmatprep.subr.mxu0 0.0
  %570 = vmatpush1.msra.mxu0 0.0
  %571 = vmatprep.subr.mxu0 0.0
  %572 = vmatpush1.msra.mxu0 0.0
  %573 = vmatprep.subr.mxu0 0.0
  %574 = vmatpush1.msra.mxu0 0.0
  %575 = vmatprep.subr.mxu0 0.0
  %576 = vmatpush1.msra.mxu0 0.0
  %577 = vmatprep.subr.mxu0 0.0
  %578 = vmatpush1.msra.mxu0 0.0
  %579 = vmatprep.subr.mxu0 0.0
  %580 = vmatpush1.msra.mxu0 0.0
  %581 = vmatprep.subr.mxu0 0.0
  %582 = vmatpush1.msra.mxu0 0.0
  %583 = vmatprep.subr.mxu0 0.0
  %584 = vmatpush1.msra.mxu0 0.0
  %585 = vmatprep.subr.mxu0 0.0
  %586 = vmatpush1.msra.mxu0 0.0
  %587 = vmatprep.subr.mxu0 0.0
  %588 = vmatpush1.msra.mxu0 0.0
  %589 = vmatprep.subr.mxu0 0.0
  %590 = vmatpush1.msra.mxu0 0.0
  %591 = vmatprep.subr.mxu0 0.0
  %592 = vmatpush1.msra.mxu0 0.0
  %593 = vmatprep.subr.mxu0 0.0
  %594 = vmatpush1.msra.mxu0 0.0
  %595 = vmatprep.subr.mxu0 0.0
  %596 = vmatpush1.msra.mxu0 0.0
  %597 = vmatprep.subr.mxu0 0.0
  %598 = vmatpush1.msra.mxu0 0.0
  %599 = vmatprep.subr.mxu0 0.0
  %600 = vmatpush1.msra.mxu0 0.0
  %601 = vmatprep.subr.mxu0 0.0
  %602 = vmatpush1.msra.mxu0 0.0
  %603 = vmatprep.subr.mxu0 0.0
  %604 = vmatpush1.msra.mxu0 0.0
  %605 = vmatprep.subr.mxu0 0.0
  %606 = vmatpush1.msra.mxu0 0.0
  %607 = vmatprep.subr.mxu0 0.0
  %608 = vmatpush1.msra.mxu0 0.0
  %609 = vmatprep.mubr.f32.mxu0 0.0
  %610 = vmatmul.mubr.f32.gmra.mrb[0].mxu0 %v543
  %v611 = vpop.f32.mrb[0].mxu0
  %v612 = vadd.f32 %v540, %v611
  %v613 = vpop.f32.mrb[0].mxu0
  %v614 = vadd.f32 %v540, %v613
  %615 = vdwg.mxu0
  %v616 = vld [vmem:[%s11] sm:$0xff]
  %v617 = vld [vmem:[%s11 + $0x8] sm:$0xff]
  %v618 = vld [vmem:[%s11 + $0x10] sm:$0xff]
  %v619 = vld [vmem:[%s11 + $0x18] sm:$0xff]
  %v620 = vld [vmem:[%s11 + $0x20] sm:$0xff]
  %v621 = vld [vmem:[%s11 + $0x28] sm:$0xff]
  %v622 = vld [vmem:[%s11 + $0x30] sm:$0xff]
  %v623 = vld [vmem:[%s11 + $0x38] sm:$0xff]
  %v624 = vld [vmem:[%s11 + $0x40] sm:$0xff]
  %v625 = vld [vmem:[%s11 + $0x48] sm:$0xff]
  %v626 = vld [vmem:[%s11 + $0x50] sm:$0xff]
  %v627 = vld [vmem:[%s11 + $0x58] sm:$0xff]
  %v628 = vld [vmem:[%s11 + $0x60] sm:$0xff]
  %v629 = vld [vmem:[%s11 + $0x68] sm:$0xff]
  %v630 = vld [vmem:[%s11 + $0x70] sm:$0xff]
  %v631 = vld [vmem:[%s11 + $0x78] sm:$0xff]
  %v632 = vld [vmem:[%s11 + $0x80] sm:$0xff]
  %v633 = vld [vmem:[%s11 + $0x88] sm:$0xff]
  %v634 = vld [vmem:[%s11 + $0x90] sm:$0xff]
  %v635 = vld [vmem:[%s11 + $0x98] sm:$0xff]
  %v636 = vld [vmem:[%s11 + $0xa0] sm:$0xff]
  %v637 = vld [vmem:[%s11 + $0xa8] sm:$0xff]
  %v638 = vld [vmem:[%s11 + $0xb0] sm:$0xff]
  %v639 = vld [vmem:[%s11 + $0xb8] sm:$0xff]
  %v640 = vld [vmem:[%s11 + $0xc0] sm:$0xff]
  %v641 = vld [vmem:[%s11 + $0xc8] sm:$0xff]
  %v642 = vld [vmem:[%s11 + $0xd0] sm:$0xff]
  %v643 = vld [vmem:[%s11 + $0xd8] sm:$0xff]
  %v644 = vld [vmem:[%s11 + $0xe0] sm:$0xff]
  %v645 = vld [vmem:[%s11 + $0xe8] sm:$0xff]
  %v646 = vld [vmem:[%s11 + $0xf0] sm:$0xff]
  %v647 = vld [vmem:[%s11 + $0xf8] sm:$0xff]
  %648 = vmatprep.subr.mxu0 0.0
  %649 = vmatpush1.msra.mxu0 %v616
  %650 = vmatprep.subr.mxu0 0.0
  %651 = vmatpush1.msra.mxu0 %v617
  %652 = vmatprep.subr.mxu0 0.0
  %653 = vmatpush1.msra.mxu0 %v618
  %654 = vmatprep.subr.mxu0 0.0
  %655 = vmatpush1.msra.mxu0 %v619
  %656 = vmatprep.subr.mxu0 0.0
  %657 = vmatpush1.msra.mxu0 %v620
  %658 = vmatprep.subr.mxu0 0.0
  %659 = vmatpush1.msra.mxu0 %v621
  %660 = vmatprep.subr.mxu0 0.0
  %661 = vmatpush1.msra.mxu0 %v622
  %662 = vmatprep.subr.mxu0 0.0
  %663 = vmatpush1.msra.mxu0 %v623
  %664 = vmatprep.subr.mxu0 0.0
  %665 = vmatpush1.msra.mxu0 %v624
  %666 = vmatprep.subr.mxu0 0.0
  %667 = vmatpush1.msra.mxu0 %v625
  %668 = vmatprep.subr.mxu0 0.0
  %669 = vmatpush1.msra.mxu0 %v626
  %670 = vmatprep.subr.mxu0 0.0
  %671 = vmatpush1.msra.mxu0 %v627
  %672 = vmatprep.subr.mxu0 0.0
  %673 = vmatpush1.msra.mxu0 %v628
  %674 = vmatprep.subr.mxu0 0.0
  %675 = vmatpush1.msra.mxu0 %v629
  %676 = vmatprep.subr.mxu0 0.0
  %677 = vmatpush1.msra.mxu0 %v630
  %678 = vmatprep.subr.mxu0 0.0
  %679 = vmatpush1.msra.mxu0 %v631
  %680 = vmatprep.subr.mxu0 0.0
  %681 = vmatpush1.msra.mxu0 %v632
  %682 = vmatprep.subr.mxu0 0.0
  %683 = vmatpush1.msra.mxu0 %v633
  %684 = vmatprep.subr.mxu0 0.0
  %685 = vmatpush1.msra.mxu0 %v634
  %686 = vmatprep.subr.mxu0 0.0
  %687 = vmatpush1.msra.mxu0 %v635
  %688 = vmatprep.subr.mxu0 0.0
  %689 = vmatpush1.msra.mxu0 %v636
  %690 = vmatprep.subr.mxu0 0.0
  %691 = vmatpush1.msra.mxu0 %v637
  %692 = vmatprep.subr.mxu0 0.0
  %693 = vmatpush1.msra.mxu0 %v638
  %694 = vmatprep.subr.mxu0 0.0
  %695 = vmatpush1.msra.mxu0 %v639
  %696 = vmatprep.subr.mxu0 0.0
  %697 = vmatpush1.msra.mxu0 %v640
  %698 = vmatprep.subr.mxu0 0.0
  %699 = vmatpush1.msra.mxu0 %v641
  %700 = vmatprep.subr.mxu0 0.0
  %701 = vmatpush1.msra.mxu0 %v642
  %702 = vmatprep.subr.mxu0 0.0
  %703 = vmatpush1.msra.mxu0 %v643
  %704 = vmatprep.subr.mxu0 0.0
  %705 = vmatpush1.msra.mxu0 %v644
  %706 = vmatprep.subr.mxu0 0.0
  %707 = vmatpush1.msra.mxu0 %v645
  %708 = vmatprep.subr.mxu0 0.0
  %709 = vmatpush1.msra.mxu0 %v646
  %710 = vmatprep.subr.mxu0 0.0
  %711 = vmatpush1.msra.mxu0 %v647
  %712 = vmatprep.mubr.f32.mxu0 %v614
  %713 = vmatmul.mubr.f32.gmra.mrb[0].mxu0 %v612
  %v714 = vpop.f32.mrb[0].mxu0
  %v715 = vadd.f32 0.0, %v714
  %v716 = vpop.f32.mrb[0].mxu0
  %717 = vdwg.mxu0
  %vm718 = vcmask 518144
  %719 = vst.msk [vmem:[%s12] sm:$0x7] %vm718, %v715
  %s720 = scalar_lea.vmem %s2, 512
  %v721 = vld [vmem:[%s720] sm:$0xff]
  %v722 = vld [vmem:[%s720 + $0x8] sm:$0xff]
  %v723 = vld [vmem:[%s720 + $0x10] sm:$0xff]
  %v724 = vld [vmem:[%s720 + $0x18] sm:$0xff]
  %v725 = vld [vmem:[%s720 + $0x20] sm:$0xff]
  %v726 = vld [vmem:[%s720 + $0x28] sm:$0xff]
  %v727 = vld [vmem:[%s720 + $0x30] sm:$0xff]
  %v728 = vld [vmem:[%s720 + $0x38] sm:$0xff]
  %v729 = vld [vmem:[%s720 + $0x40] sm:$0xff]
  %v730 = vld [vmem:[%s720 + $0x48] sm:$0xff]
  %v731 = vld [vmem:[%s720 + $0x50] sm:$0xff]
  %v732 = vld [vmem:[%s720 + $0x58] sm:$0xff]
  %v733 = vld [vmem:[%s720 + $0x60] sm:$0xff]
  %v734 = vld [vmem:[%s720 + $0x68] sm:$0xff]
  %v735 = vld [vmem:[%s720 + $0x70] sm:$0xff]
  %v736 = vld [vmem:[%s720 + $0x78] sm:$0xff]
  %v737 = vld [vmem:[%s720 + $0x80] sm:$0xff]
  %v738 = vld [vmem:[%s720 + $0x88] sm:$0xff]
  %v739 = vld [vmem:[%s720 + $0x90] sm:$0xff]
  %v740 = vld [vmem:[%s720 + $0x98] sm:$0xff]
  %v741 = vld [vmem:[%s720 + $0xa0] sm:$0xff]
  %v742 = vld [vmem:[%s720 + $0xa8] sm:$0xff]
  %v743 = vld [vmem:[%s720 + $0xb0] sm:$0xff]
  %v744 = vld [vmem:[%s720 + $0xb8] sm:$0xff]
  %v745 = vld [vmem:[%s720 + $0xc0] sm:$0xff]
  %v746 = vld [vmem:[%s720 + $0xc8] sm:$0xff]
  %v747 = vld [vmem:[%s720 + $0xd0] sm:$0xff]
  %v748 = vld [vmem:[%s720 + $0xd8] sm:$0xff]
  %v749 = vld [vmem:[%s720 + $0xe0] sm:$0xff]
  %v750 = vld [vmem:[%s720 + $0xe8] sm:$0xff]
  %v751 = vld [vmem:[%s720 + $0xf0] sm:$0xff]
  %v752 = vld [vmem:[%s720 + $0xf8] sm:$0xff]
  %v753 = vld [vmem:[%s720 + $0x100] sm:$0xff]
  %v754 = vld [vmem:[%s720 + $0x108] sm:$0xff]
  %v755 = vld [vmem:[%s720 + $0x110] sm:$0xff]
  %v756 = vld [vmem:[%s720 + $0x118] sm:$0xff]
  %v757 = vld [vmem:[%s720 + $0x120] sm:$0xff]
  %v758 = vld [vmem:[%s720 + $0x128] sm:$0xff]
  %v759 = vld [vmem:[%s720 + $0x130] sm:$0xff]
  %v760 = vld [vmem:[%s720 + $0x138] sm:$0xff]
  %v761 = vld [vmem:[%s720 + $0x140] sm:$0xff]
  %v762 = vld [vmem:[%s720 + $0x148] sm:$0xff]
  %v763 = vld [vmem:[%s720 + $0x150] sm:$0xff]
  %v764 = vld [vmem:[%s720 + $0x158] sm:$0xff]
  %v765 = vld [vmem:[%s720 + $0x160] sm:$0xff]
  %v766 = vld [vmem:[%s720 + $0x168] sm:$0xff]
  %v767 = vld [vmem:[%s720 + $0x170] sm:$0xff]
  %v768 = vld [vmem:[%s720 + $0x178] sm:$0xff]
  %v769 = vld [vmem:[%s720 + $0x180] sm:$0xff]
  %v770 = vld [vmem:[%s720 + $0x188] sm:$0xff]
  %v771 = vld [vmem:[%s720 + $0x190] sm:$0xff]
  %v772 = vld [vmem:[%s720 + $0x198] sm:$0xff]
  %v773 = vld [vmem:[%s720 + $0x1a0] sm:$0xff]
  %v774 = vld [vmem:[%s720 + $0x1a8] sm:$0xff]
  %v775 = vld [vmem:[%s720 + $0x1b0] sm:$0xff]
  %v776 = vld [vmem:[%s720 + $0x1b8] sm:$0xff]
  %v777 = vld [vmem:[%s720 + $0x1c0] sm:$0xff]
  %v778 = vld [vmem:[%s720 + $0x1c8] sm:$0xff]
  %v779 = vld [vmem:[%s720 + $0x1d0] sm:$0xff]
  %v780 = vld [vmem:[%s720 + $0x1d8] sm:$0xff]
  %v781 = vld [vmem:[%s720 + $0x1e0] sm:$0xff]
  %v782 = vld [vmem:[%s720 + $0x1e8] sm:$0xff]
  %v783 = vld [vmem:[%s720 + $0x1f0] sm:$0xff]
  %v784 = vld [vmem:[%s720 + $0x1f8] sm:$0xff]
  %v785 = vlaneseq
  %v786 = vshrl.u32 %v785, 7
  %v787 = vsub.s32 1, %v786
  %v788 = vrot.slane %v133, %v787
  %v789 = vlaneseq
  %v790 = vshrl.u32 %v789, 7
  %v791 = vsub.s32 1, %v790
  %v792 = vrot.slane %v135, %v791
  %v793 = vmul.f32 %v222, %v788
  %v794 = vmul.f32 %v223, %v792
  %v795 = vmul.f32 %v224, %v788
  %v796 = vmul.f32 %v225, %v792
  %v797 = vmul.f32 %v793, %v793
  %v798 = vmul.f32 %v794, %v794
  %v799 = vmul.f32 %v795, %v795
  %v800 = vmul.f32 %v796, %v796
  %v801 = vsel %vm310, %v798, 0.0
  %v802 = vadd.f32 %v797, %v801
  %803 = vadd.xlane.f32.xlu0 %v802
  %v804 = vpop.xlane.xlu0 %803
  %v805 = vsel %vm310, %v800, 0.0
  %v806 = vadd.f32 %v799, %v805
  %807 = vadd.xlane.f32.xlu0 %v806
  %v808 = vpop.xlane.xlu0 %807
  %v809 = vadd.f32 %v804, 1e-08
  %v810 = vadd.f32 %v808, 1e-08
  %v811 = vrsqrt.pop %v809
  %v812 = vrsqrt.pop %v810
  %v813 = vmul.f32 %v793, %v811
  %v814 = vmul.f32 %v794, %v811
  %v815 = vmul.f32 %v795, %v812
  %v816 = vmul.f32 %v796, %v812
  %v818 = vsel %vm310, %v814, 0
  %v821 = vsel %vm310, %v816, 0
  %v824 = vsel %vm310, %v722, 0
  %v827 = vsel %vm310, %v724, 0
  %v830 = vsel %vm310, %v726, 0
  %v833 = vsel %vm310, %v728, 0
  %v836 = vsel %vm310, %v730, 0
  %v839 = vsel %vm310, %v732, 0
  %v842 = vsel %vm310, %v734, 0
  %v845 = vsel %vm310, %v736, 0
  %v848 = vsel %vm310, %v738, 0
  %v851 = vsel %vm310, %v740, 0
  %v854 = vsel %vm310, %v742, 0
  %v857 = vsel %vm310, %v744, 0
  %v860 = vsel %vm310, %v746, 0
  %v863 = vsel %vm310, %v748, 0
  %v866 = vsel %vm310, %v750, 0
  %v869 = vsel %vm310, %v752, 0
  %v872 = vsel %vm310, %v754, 0
  %v875 = vsel %vm310, %v756, 0
  %v878 = vsel %vm310, %v758, 0
  %v881 = vsel %vm310, %v760, 0
  %v884 = vsel %vm310, %v762, 0
  %v887 = vsel %vm310, %v764, 0
  %v890 = vsel %vm310, %v766, 0
  %v893 = vsel %vm310, %v768, 0
  %v896 = vsel %vm310, %v770, 0
  %v899 = vsel %vm310, %v772, 0
  %v902 = vsel %vm310, %v774, 0
  %v905 = vsel %vm310, %v776, 0
  %v908 = vsel %vm310, %v778, 0
  %v911 = vsel %vm310, %v780, 0
  %v914 = vsel %vm310, %v782, 0
  %v917 = vsel %vm310, %v784, 0
  %919 = vmatprep.subr.mxu0 %v824
  %920 = vmatpush1.xpose.msra.mxu0 %v721
  %921 = vmatprep.subr.mxu0 %v827
  %922 = vmatpush1.xpose.msra.mxu0 %v723
  %923 = vmatprep.subr.mxu0 %v830
  %924 = vmatpush1.xpose.msra.mxu0 %v725
  %925 = vmatprep.subr.mxu0 %v833
  %926 = vmatpush1.xpose.msra.mxu0 %v727
  %927 = vmatprep.subr.mxu0 %v836
  %928 = vmatpush1.xpose.msra.mxu0 %v729
  %929 = vmatprep.subr.mxu0 %v839
  %930 = vmatpush1.xpose.msra.mxu0 %v731
  %931 = vmatprep.subr.mxu0 %v842
  %932 = vmatpush1.xpose.msra.mxu0 %v733
  %933 = vmatprep.subr.mxu0 %v845
  %934 = vmatpush1.xpose.msra.mxu0 %v735
  %935 = vmatprep.subr.mxu0 %v848
  %936 = vmatpush1.xpose.msra.mxu0 %v737
  %937 = vmatprep.subr.mxu0 %v851
  %938 = vmatpush1.xpose.msra.mxu0 %v739
  %939 = vmatprep.subr.mxu0 %v854
  %940 = vmatpush1.xpose.msra.mxu0 %v741
  %941 = vmatprep.subr.mxu0 %v857
  %942 = vmatpush1.xpose.msra.mxu0 %v743
  %943 = vmatprep.subr.mxu0 %v860
  %944 = vmatpush1.xpose.msra.mxu0 %v745
  %945 = vmatprep.subr.mxu0 %v863
  %946 = vmatpush1.xpose.msra.mxu0 %v747
  %947 = vmatprep.subr.mxu0 %v866
  %948 = vmatpush1.xpose.msra.mxu0 %v749
  %949 = vmatprep.subr.mxu0 %v869
  %950 = vmatpush1.xpose.msra.mxu0 %v751
  %951 = vmatprep.subr.mxu0 %v872
  %952 = vmatpush1.xpose.msra.mxu0 %v753
  %953 = vmatprep.subr.mxu0 %v875
  %954 = vmatpush1.xpose.msra.mxu0 %v755
  %955 = vmatprep.subr.mxu0 %v878
  %956 = vmatpush1.xpose.msra.mxu0 %v757
  %957 = vmatprep.subr.mxu0 %v881
  %958 = vmatpush1.xpose.msra.mxu0 %v759
  %959 = vmatprep.subr.mxu0 %v884
  %960 = vmatpush1.xpose.msra.mxu0 %v761
  %961 = vmatprep.subr.mxu0 %v887
  %962 = vmatpush1.xpose.msra.mxu0 %v763
  %963 = vmatprep.subr.mxu0 %v890
  %964 = vmatpush1.xpose.msra.mxu0 %v765
  %965 = vmatprep.subr.mxu0 %v893
  %966 = vmatpush1.xpose.msra.mxu0 %v767
  %967 = vmatprep.subr.mxu0 %v896
  %968 = vmatpush1.xpose.msra.mxu0 %v769
  %969 = vmatprep.subr.mxu0 %v899
  %970 = vmatpush1.xpose.msra.mxu0 %v771
  %971 = vmatprep.subr.mxu0 %v902
  %972 = vmatpush1.xpose.msra.mxu0 %v773
  %973 = vmatprep.subr.mxu0 %v905
  %974 = vmatpush1.xpose.msra.mxu0 %v775
  %975 = vmatprep.subr.mxu0 %v908
  %976 = vmatpush1.xpose.msra.mxu0 %v777
  %977 = vmatprep.subr.mxu0 %v911
  %978 = vmatpush1.xpose.msra.mxu0 %v779
  %979 = vmatprep.subr.mxu0 %v914
  %980 = vmatpush1.xpose.msra.mxu0 %v781
  %981 = vmatprep.subr.mxu0 %v917
  %982 = vmatpush1.xpose.msra.mxu0 %v783
  %983 = vmatprep.mubr.f32.mxu0 %v818
  %984 = vmatmul.mubr.f32.gmra.mrb[0].mxu0 %v813
  %v985 = vpop.f32.mrb[0].mxu0
  %v986 = vadd.f32 %v330, %v985
  %v987 = vpop.f32.mrb[0].mxu0
  %v988 = vadd.f32 %v330, %v987
  %989 = vmatprep.mubr.f32.mxu0 %v821
  %990 = vmatmul.mubr.f32.gmra.mrb[0].mxu0 %v815
  %v991 = vpop.f32.mrb[0].mxu0
  %v992 = vadd.f32 %v335, %v991
  %v993 = vpop.f32.mrb[0].mxu0
  %v994 = vadd.f32 %v335, %v993
  %995 = vdwg.mxu0
  %vm996 = vcmp.ge.f32.partialorder %v986, 0.0
  %vm997 = vcmp.ge.f32.partialorder %v988, 0.0
  %vm998 = vcmp.ge.f32.partialorder %v992, 0.0
  %vm999 = vcmp.ge.f32.partialorder %v994, 0.0
  %v1000 = vmul.f32 %v986, 0.2
  %v1001 = vmul.f32 %v988, 0.2
  %v1002 = vmul.f32 %v992, 0.2
  %v1003 = vmul.f32 %v994, 0.2
  %v1004 = vsel %vm996, %v986, %v1000
  %v1005 = vsel %vm997, %v988, %v1001
  %v1006 = vsel %vm998, %v992, %v1002
  %v1007 = vsel %vm999, %v994, %v1003
  %v1008 = vmul.f32 %v1004, 1.4142135
  %v1009 = vmul.f32 %v1005, 1.4142135
  %v1010 = vmul.f32 %v1006, 1.4142135
  %v1011 = vmul.f32 %v1007, 1.4142135
  %v1012 = vlaneseq
  %v1013 = vshrl.u32 %v1012, 7
  %v1014 = vsub.s32 1, %v1013
  %v1015 = vrot.slane %v219, %v1014
  %v1016 = vmul.f32 %v228, %v1015
  %v1018 = vsel %vm310, %v1016, 0
  %1020 = vmatprep.subr.mxu0 %v1009
  %1021 = vmatpush1.msra.mxu0 %v1008
  %1022 = vmatprep.subr.mxu0 %v1011
  %1023 = vmatpush1.msra.mxu0 %v1010
  %1024 = vmatprep.subr.mxu0 0.0
  %1025 = vmatpush1.msra.mxu0 0.0
  %1026 = vmatprep.subr.mxu0 0.0
  %1027 = vmatpush1.msra.mxu0 0.0
  %1028 = vmatprep.subr.mxu0 0.0
  %1029 = vmatpush1.msra.mxu0 0.0
  %1030 = vmatprep.subr.mxu0 0.0
  %1031 = vmatpush1.msra.mxu0 0.0
  %1032 = vmatprep.subr.mxu0 0.0
  %1033 = vmatpush1.msra.mxu0 0.0
  %1034 = vmatprep.subr.mxu0 0.0
  %1035 = vmatpush1.msra.mxu0 0.0
  %1036 = vmatprep.subr.mxu0 0.0
  %1037 = vmatpush1.msra.mxu0 0.0
  %1038 = vmatprep.subr.mxu0 0.0
  %1039 = vmatpush1.msra.mxu0 0.0
  %1040 = vmatprep.subr.mxu0 0.0
  %1041 = vmatpush1.msra.mxu0 0.0
  %1042 = vmatprep.subr.mxu0 0.0
  %1043 = vmatpush1.msra.mxu0 0.0
  %1044 = vmatprep.subr.mxu0 0.0
  %1045 = vmatpush1.msra.mxu0 0.0
  %1046 = vmatprep.subr.mxu0 0.0
  %1047 = vmatpush1.msra.mxu0 0.0
  %1048 = vmatprep.subr.mxu0 0.0
  %1049 = vmatpush1.msra.mxu0 0.0
  %1050 = vmatprep.subr.mxu0 0.0
  %1051 = vmatpush1.msra.mxu0 0.0
  %1052 = vmatprep.subr.mxu0 0.0
  %1053 = vmatpush1.msra.mxu0 0.0
  %1054 = vmatprep.subr.mxu0 0.0
  %1055 = vmatpush1.msra.mxu0 0.0
  %1056 = vmatprep.subr.mxu0 0.0
  %1057 = vmatpush1.msra.mxu0 0.0
  %1058 = vmatprep.subr.mxu0 0.0
  %1059 = vmatpush1.msra.mxu0 0.0
  %1060 = vmatprep.subr.mxu0 0.0
  %1061 = vmatpush1.msra.mxu0 0.0
  %1062 = vmatprep.subr.mxu0 0.0
  %1063 = vmatpush1.msra.mxu0 0.0
  %1064 = vmatprep.subr.mxu0 0.0
  %1065 = vmatpush1.msra.mxu0 0.0
  %1066 = vmatprep.subr.mxu0 0.0
  %1067 = vmatpush1.msra.mxu0 0.0
  %1068 = vmatprep.subr.mxu0 0.0
  %1069 = vmatpush1.msra.mxu0 0.0
  %1070 = vmatprep.subr.mxu0 0.0
  %1071 = vmatpush1.msra.mxu0 0.0
  %1072 = vmatprep.subr.mxu0 0.0
  %1073 = vmatpush1.msra.mxu0 0.0
  %1074 = vmatprep.subr.mxu0 0.0
  %1075 = vmatpush1.msra.mxu0 0.0
  %1076 = vmatprep.subr.mxu0 0.0
  %1077 = vmatpush1.msra.mxu0 0.0
  %1078 = vmatprep.subr.mxu0 0.0
  %1079 = vmatpush1.msra.mxu0 0.0
  %1080 = vmatprep.subr.mxu0 0.0
  %1081 = vmatpush1.msra.mxu0 0.0
  %1082 = vmatprep.subr.mxu0 0.0
  %1083 = vmatpush1.msra.mxu0 0.0
  %1084 = vmatprep.mubr.f32.mxu0 0.0
  %1085 = vmatmul.mubr.f32.gmra.mrb[0].mxu0 %v1018
  %v1086 = vpop.f32.mrb[0].mxu0
  %v1087 = vadd.f32 %v540, %v1086
  %v1088 = vpop.f32.mrb[0].mxu0
  %v1089 = vadd.f32 %v540, %v1088
  %1090 = vdwg.mxu0
  %v1091 = vld [vmem:[%s11] sm:$0xff]
  %v1092 = vld [vmem:[%s11 + $0x8] sm:$0xff]
  %v1093 = vld [vmem:[%s11 + $0x10] sm:$0xff]
  %v1094 = vld [vmem:[%s11 + $0x18] sm:$0xff]
  %v1095 = vld [vmem:[%s11 + $0x20] sm:$0xff]
  %v1096 = vld [vmem:[%s11 + $0x28] sm:$0xff]
  %v1097 = vld [vmem:[%s11 + $0x30] sm:$0xff]
  %v1098 = vld [vmem:[%s11 + $0x38] sm:$0xff]
  %v1099 = vld [vmem:[%s11 + $0x40] sm:$0xff]
  %v1100 = vld [vmem:[%s11 + $0x48] sm:$0xff]
  %v1101 = vld [vmem:[%s11 + $0x50] sm:$0xff]
  %v1102 = vld [vmem:[%s11 + $0x58] sm:$0xff]
  %v1103 = vld [vmem:[%s11 + $0x60] sm:$0xff]
  %v1104 = vld [vmem:[%s11 + $0x68] sm:$0xff]
  %v1105 = vld [vmem:[%s11 + $0x70] sm:$0xff]
  %v1106 = vld [vmem:[%s11 + $0x78] sm:$0xff]
  %v1107 = vld [vmem:[%s11 + $0x80] sm:$0xff]
  %v1108 = vld [vmem:[%s11 + $0x88] sm:$0xff]
  %v1109 = vld [vmem:[%s11 + $0x90] sm:$0xff]
  %v1110 = vld [vmem:[%s11 + $0x98] sm:$0xff]
  %v1111 = vld [vmem:[%s11 + $0xa0] sm:$0xff]
  %v1112 = vld [vmem:[%s11 + $0xa8] sm:$0xff]
  %v1113 = vld [vmem:[%s11 + $0xb0] sm:$0xff]
  %v1114 = vld [vmem:[%s11 + $0xb8] sm:$0xff]
  %v1115 = vld [vmem:[%s11 + $0xc0] sm:$0xff]
  %v1116 = vld [vmem:[%s11 + $0xc8] sm:$0xff]
  %v1117 = vld [vmem:[%s11 + $0xd0] sm:$0xff]
  %v1118 = vld [vmem:[%s11 + $0xd8] sm:$0xff]
  %v1119 = vld [vmem:[%s11 + $0xe0] sm:$0xff]
  %v1120 = vld [vmem:[%s11 + $0xe8] sm:$0xff]
  %v1121 = vld [vmem:[%s11 + $0xf0] sm:$0xff]
  %v1122 = vld [vmem:[%s11 + $0xf8] sm:$0xff]
  %1123 = vmatprep.subr.mxu0 0.0
  %1124 = vmatpush1.msra.mxu0 %v1091
  %1125 = vmatprep.subr.mxu0 0.0
  %1126 = vmatpush1.msra.mxu0 %v1092
  %1127 = vmatprep.subr.mxu0 0.0
  %1128 = vmatpush1.msra.mxu0 %v1093
  %1129 = vmatprep.subr.mxu0 0.0
  %1130 = vmatpush1.msra.mxu0 %v1094
  %1131 = vmatprep.subr.mxu0 0.0
  %1132 = vmatpush1.msra.mxu0 %v1095
  %1133 = vmatprep.subr.mxu0 0.0
  %1134 = vmatpush1.msra.mxu0 %v1096
  %1135 = vmatprep.subr.mxu0 0.0
  %1136 = vmatpush1.msra.mxu0 %v1097
  %1137 = vmatprep.subr.mxu0 0.0
  %1138 = vmatpush1.msra.mxu0 %v1098
  %1139 = vmatprep.subr.mxu0 0.0
  %1140 = vmatpush1.msra.mxu0 %v1099
  %1141 = vmatprep.subr.mxu0 0.0
  %1142 = vmatpush1.msra.mxu0 %v1100
  %1143 = vmatprep.subr.mxu0 0.0
  %1144 = vmatpush1.msra.mxu0 %v1101
  %1145 = vmatprep.subr.mxu0 0.0
  %1146 = vmatpush1.msra.mxu0 %v1102
  %1147 = vmatprep.subr.mxu0 0.0
  %1148 = vmatpush1.msra.mxu0 %v1103
  %1149 = vmatprep.subr.mxu0 0.0
  %1150 = vmatpush1.msra.mxu0 %v1104
  %1151 = vmatprep.subr.mxu0 0.0
  %1152 = vmatpush1.msra.mxu0 %v1105
  %1153 = vmatprep.subr.mxu0 0.0
  %1154 = vmatpush1.msra.mxu0 %v1106
  %1155 = vmatprep.subr.mxu0 0.0
  %1156 = vmatpush1.msra.mxu0 %v1107
  %1157 = vmatprep.subr.mxu0 0.0
  %1158 = vmatpush1.msra.mxu0 %v1108
  %1159 = vmatprep.subr.mxu0 0.0
  %1160 = vmatpush1.msra.mxu0 %v1109
  %1161 = vmatprep.subr.mxu0 0.0
  %1162 = vmatpush1.msra.mxu0 %v1110
  %1163 = vmatprep.subr.mxu0 0.0
  %1164 = vmatpush1.msra.mxu0 %v1111
  %1165 = vmatprep.subr.mxu0 0.0
  %1166 = vmatpush1.msra.mxu0 %v1112
  %1167 = vmatprep.subr.mxu0 0.0
  %1168 = vmatpush1.msra.mxu0 %v1113
  %1169 = vmatprep.subr.mxu0 0.0
  %1170 = vmatpush1.msra.mxu0 %v1114
  %1171 = vmatprep.subr.mxu0 0.0
  %1172 = vmatpush1.msra.mxu0 %v1115
  %1173 = vmatprep.subr.mxu0 0.0
  %1174 = vmatpush1.msra.mxu0 %v1116
  %1175 = vmatprep.subr.mxu0 0.0
  %1176 = vmatpush1.msra.mxu0 %v1117
  %1177 = vmatprep.subr.mxu0 0.0
  %1178 = vmatpush1.msra.mxu0 %v1118
  %1179 = vmatprep.subr.mxu0 0.0
  %1180 = vmatpush1.msra.mxu0 %v1119
  %1181 = vmatprep.subr.mxu0 0.0
  %1182 = vmatpush1.msra.mxu0 %v1120
  %1183 = vmatprep.subr.mxu0 0.0
  %1184 = vmatpush1.msra.mxu0 %v1121
  %1185 = vmatprep.subr.mxu0 0.0
  %1186 = vmatpush1.msra.mxu0 %v1122
  %1187 = vmatprep.mubr.f32.mxu0 %v1089
  %1188 = vmatmul.mubr.f32.gmra.mrb[0].mxu0 %v1087
  %v1189 = vpop.f32.mrb[0].mxu0
  %v1190 = vadd.f32 0.0, %v1189
  %v1191 = vpop.f32.mrb[0].mxu0
  %1192 = vdwg.mxu0
  %s1193 = scalar_lea.vmem %s12, 4
  %1194 = vst.msk [vmem:[%s1193] sm:$0x7] %vm718, %v1190
  // Predicated region
  $region50: #{psp_forward.9} parent=0 // pred_check
    _
  $region51: #{psp_forward.9} parent=0 // pred_check_branch
    %1196 = sbr.rel (0) target = $region53
  $region52: #{psp_forward.9} parent=0 // pred_region
    _
  $region53: #{psp_forward.9} parent=0 // pred_fallthru
    _
  // Predicated region
  $region54: #{psp_forward.9} parent=0 // pred_check
    _
  $region55: #{psp_forward.9} parent=0 // pred_check_branch
    %1198 = sbr.rel (0) target = $region57
  $region56: #{psp_forward.9} parent=0 // pred_region
    _
  $region57: #{psp_forward.9} parent=0 // pred_fallthru
    _

</llo_original>
